<compile_context>
chip_gen: v5e
topology: v5e:2x2
jax: 0.10.0
libtpu: 0.0.40
codegen_flags: <defaults>
</compile_context>

<pallas_src>
import functools

import jax
import jax.numpy as jnp
from jax.experimental import pallas as pl
from jax.experimental.pallas import tpu as pltpu

D = 512              # hidden width fixed by the module (Linear(512, 512))
NUM_MODULES = 5      # len(modulation_module_list)
NEG_SLOPE = 0.01     # torch.nn.LeakyReLU default
LN_EPS = 1e-5        # torch.nn.LayerNorm default eps
PIX_EPS = 1e-8       # PixelNorm eps


def _leaky_relu(v):
    return jnp.where(v >= 0, v, NEG_SLOPE * v)


def _sample_layernorm(h, B, L):
    """LayerNorm([L, 512], elementwise_affine=False) on a flattened (B*L, 512) slab.

    Per-sample mean/var are computed with static sublane slices (no 3-D reshape); the
    per-row mean / inv-std vectors are rebuilt with an iota/where select (no sublane concat).
    """
    M = B * L
    row = jax.lax.broadcasted_iota(jnp.int32, (M, 1), 0)
    mu_rows = jnp.zeros((M, 1), jnp.float32)
    rs_rows = jnp.zeros((M, 1), jnp.float32)
    for b in range(B):                               # B is small & static
        hb = h[b * L:(b + 1) * L, :]
        mu = jnp.mean(hb, keepdims=True)             # (1, 1)
        var = jnp.mean((hb - mu) ** 2, keepdims=True)
        sel = (row >= b * L) & (row < (b + 1) * L)
        mu_rows = jnp.where(sel, mu, mu_rows)
        rs_rows = jnp.where(sel, jax.lax.rsqrt(var + LN_EPS), rs_rows)
    return (h - mu_rows) * rs_rows


def _half_branch(t, b1, lnw, lnb):
    """bias -> LayerNorm([512]) (affine) -> LeakyReLU on one 512-wide half; bf16 out for MXU."""
    t = t + b1
    mu = jnp.mean(t, axis=-1, keepdims=True)
    var = jnp.mean((t - mu) ** 2, axis=-1, keepdims=True)
    t = (t - mu) * jax.lax.rsqrt(var + LN_EPS) * lnw + lnb
    return _leaky_relu(t).astype(jnp.bfloat16)


# ----------------------------------------------------------------------------- kernels
# vecs rows: 0=fc_b, 1=g_b1, 2=b_b1, 3=g_lnw, 4=b_lnw, 5=g_lnb, 6=b_lnb, 7=g_b2, 8=b_b2


def _modulation_kernel(x_ref, emb_ref, wfc_ref, w1_ref, wgb2_ref, v_ref, out_ref, *, B, L):
    """Fused full path (cut_flag == 0). One grid step == one ModulationModule.

    x_ref/emb_ref/out_ref: (B*L, D).  out_ref doubles as the cross-step activation carry
    (constant output block index, "arbitrary" grid axis -> resident in VMEM).
    """
    m = pl.program_id(0)

    @pl.when(m == 0)
    def _():
        out_ref[...] = x_ref[...]          # x is already PixelNorm'd in the wrapper

    x = out_ref[...]                                                       # (M, D) f32 carry
    h = jnp.dot(x.astype(jnp.bfloat16), wfc_ref[...],
                preferred_element_type=jnp.float32) + v_ref[0:1, :]
    hn = _sample_layernorm(h, B, L)

    # gamma / beta first Linears fused into one (M,512)@(512,1024) matmul.
    t = jnp.dot(emb_ref[...], w1_ref[...], preferred_element_type=jnp.float32)   # (M, 2D)
    tg = _half_branch(t[:, 0:D], v_ref[1:2, :], v_ref[3:4, :], v_ref[5:6, :])
    tb = _half_branch(t[:, D:2 * D], v_ref[2:3, :], v_ref[4:5, :], v_ref[6:7, :])
    gamma = jnp.dot(tg, wgb2_ref[0:D, :], preferred_element_type=jnp.float32) + v_ref[7:8, :]
    beta = jnp.dot(tb, wgb2_ref[D:2 * D, :], preferred_element_type=jnp.float32) + v_ref[8:9, :]

    out_ref[...] = _leaky_relu(hn * (1.0 + gamma) + beta)


def _modulation_cut_kernel(x_ref, wfc_ref, v_ref, out_ref, *, B, L):
    """cut_flag == 1 path: only fc + LayerNorm per module; gamma/beta weights never streamed."""
    m = pl.program_id(0)

    @pl.when(m == 0)
    def _():
        out_ref[...] = x_ref[...]

    x = out_ref[...]
    h = jnp.dot(x.astype(jnp.bfloat16), wfc_ref[...],
                preferred_element_type=jnp.float32) + v_ref[0:1, :]
    out_ref[...] = _sample_layernorm(h, B, L)


def _gamma_beta_prepass_kernel(emb_ref, w1_ref, wgb2_ref, v_ref, gb_ref):
    """Embedding-only gamma/beta branch for one module; module axis is 'parallel' (no carry)."""
    t = jnp.dot(emb_ref[...], w1_ref[...], preferred_element_type=jnp.float32)    # (M, 2D)
    tg = _half_branch(t[:, 0:D], v_ref[1:2, :], v_ref[3:4, :], v_ref[5:6, :])
    tb = _half_branch(t[:, D:2 * D], v_ref[2:3, :], v_ref[4:5, :], v_ref[6:7, :])
    gb_ref[:, 0:D] = jnp.dot(tg, wgb2_ref[0:D, :],
                             preferred_element_type=jnp.float32) + v_ref[7:8, :]
    gb_ref[:, D:2 * D] = jnp.dot(tb, wgb2_ref[D:2 * D, :],
                                 preferred_element_type=jnp.float32) + v_ref[8:9, :]


def _modulation_chain_kernel(x_ref, gb_ref, wfc_ref, v_ref, out_ref, *, B, L):
    """Sequential fc + LN + modulate chain; consumes precomputed [gamma|beta] slabs."""
    m = pl.program_id(0)

    @pl.when(m == 0)
    def _():
        out_ref[...] = x_ref[...]

    x = out_ref[...]
    h = jnp.dot(x.astype(jnp.bfloat16), wfc_ref[...],
                preferred_element_type=jnp.float32) + v_ref[0:1, :]
    hn = _sample_layernorm(h, B, L)
    gb = gb_ref[...]                                                       # (M, 2D) f32
    out_ref[...] = _leaky_relu(hn * (1.0 + gb[:, 0:D]) + gb[:, D:2 * D])


# ----------------------------------------------------------------------------- params


def make_params(key, num_modules=NUM_MODULES):
    """Deterministic synthetic parameters packed into the slab layout the kernels expect.

    w_fc  : (nm, D, D)    bf16   fc weight
    w1cat : (nm, D, 2D)   bf16   [gamma_w1 | beta_w1]
    w_gb2 : (nm, 2D, D)   bf16   [gamma_w2 ; beta_w2]
    vecs  : (nm, 9, D)    f32    fc_b, g_b1, b_b1, g_lnw, b_lnw, g_lnb, b_lnb, g_b2, b_b2
    """
    bound = 1.0 / (D ** 0.5)
    keys = jax.random.split(key, num_modules * 10).reshape(num_modules, 10, 2)
    w_fc, w1cat, w_gb2, vecs = [], [], [], []
    ln_w = jnp.ones((D,), jnp.float32)    # torch LayerNorm([512]) default affine init
    ln_b = jnp.zeros((D,), jnp.float32)
    for m in range(num_modules):
        km = keys[m]

        def lin(i):
            w = jax.random.uniform(km[2 * i], (D, D), jnp.float32, -bound, bound)   # (out, in)
            b = jax.random.uniform(km[2 * i + 1], (D,), jnp.float32, -bound, bound)
            return w.T, b                                                            # (in, out)

        fc_w, fc_b = lin(0)
        g_w1, g_b1 = lin(1)
        g_w2, g_b2 = lin(2)
        b_w1, b_b1 = lin(3)
        b_w2, b_b2 = lin(4)

        w_fc.append(fc_w)
        w1cat.append(jnp.concatenate([g_w1, b_w1], axis=1))                 # (D, 2D)
        w_gb2.append(jnp.concatenate([g_w2, b_w2], axis=0))                 # (2D, D)
        vecs.append(jnp.stack([fc_b, g_b1, b_b1, ln_w, ln_w, ln_b, ln_b, g_b2, b_b2], axis=0))

    return {
        "w_fc": jnp.stack(w_fc).astype(jnp.bfloat16),
        "w1cat": jnp.stack(w1cat).astype(jnp.bfloat16),
        "w_gb2": jnp.stack(w_gb2).astype(jnp.bfloat16),
        "vecs": jnp.stack(vecs),                                            # f32
    }


# ----------------------------------------------------------------------------- wrapper


def _default_split_prepass():
    # The gamma/beta pre-pass split only pays off on chips with 2 TensorCores (v7x): the
    # "parallel" module axis lets megacore shard ~80% of the MXU weight staging.  On
    # single-TC chips it just adds a second kernel launch, so default it off there.
    try:
        kind = jax.devices()[0].device_kind.lower()
    except Exception:
        return False
    return "v7" in kind


def sub_hair_mapper(x, emb, params, cut_flag=0, split_prepass=None):
    # cut_flag / split_prepass select between compiled variants and MUST be static Python
    # values; bool() on a traced value raises a concretization error (intended guard).
    cut = bool(cut_flag)
    B, L, _ = x.shape
    M = B * L
    nm = params["w_fc"].shape[0]

    # PixelNorm over the style-layer axis once in the wrapper, then flatten to a lane/sublane
    # dense (B*L, 512) slab so every kernel load/store is unmasked and relayout-free.
    x2 = (x * jax.lax.rsqrt(jnp.mean(x * x, axis=1, keepdims=True) + PIX_EPS)).reshape(M, D)

    act_spec = pl.BlockSpec((M, D), lambda m: (0, 0))            # resident seed / carry
    wfc_spec = pl.BlockSpec((None, D, D), lambda m: (m, 0, 0))
    vec_spec = pl.BlockSpec((None, 9, D), lambda m: (m, 0, 0))   # full-extent, no 8-row pad
    out_shape = jax.ShapeDtypeStruct((M, D), jnp.float32)
    seq_params = pltpu.CompilerParams(
        dimension_semantics=("arbitrary",),       # carried activation across module steps
        vmem_limit_bytes=32 * 1024 * 1024,
    )

    if cut:
        out = pl.pallas_call(
            functools.partial(_modulation_cut_kernel, B=B, L=L),
            out_shape=out_shape,
            grid_spec=pltpu.PrefetchScalarGridSpec(
                num_scalar_prefetch=0, grid=(nm,),
                in_specs=[act_spec, wfc_spec, vec_spec],
                out_specs=act_spec),
            compiler_params=seq_params,
        )(x2, params["w_fc"], params["vecs"])
        return out.reshape(B, L, D)

    # embedding is flattened + cast to bf16 once here (constant across all module steps).
    emb2 = emb.reshape(M, D).astype(jnp.bfloat16)
    emb_spec = pl.BlockSpec((M, D), lambda m: (0, 0))
    w1_spec = pl.BlockSpec((None, D, 2 * D), lambda m: (m, 0, 0))
    wgb2_spec = pl.BlockSpec((None, 2 * D, D), lambda m: (m, 0, 0))

    if split_prepass is None:
        split_prepass = _default_split_prepass()

    if split_prepass:
        # Phase 1: carry-independent gamma/beta for all modules, "parallel" module axis.
        gb_spec = pl.BlockSpec((None, M, 2 * D), lambda m: (m, 0, 0))
        gb = pl.pallas_call(
            _gamma_beta_prepass_kernel,
            out_shape=jax.ShapeDtypeStruct((nm, M, 2 * D), jnp.float32),
            grid_spec=pltpu.PrefetchScalarGridSpec(
                num_scalar_prefetch=0, grid=(nm,),
                in_specs=[emb_spec, w1_spec, wgb2_spec, vec_spec],
                out_specs=gb_spec),
            compiler_params=pltpu.CompilerParams(
                dimension_semantics=("parallel",),
                vmem_limit_bytes=32 * 1024 * 1024),
        )(emb2, params["w1cat"], params["w_gb2"], params["vecs"])
        # Phase 2: light sequential chain streaming only fc weights + tiny gamma/beta slabs.
        out = pl.pallas_call(
            functools.partial(_modulation_chain_kernel, B=B, L=L),
            out_shape=out_shape,
            grid_spec=pltpu.PrefetchScalarGridSpec(
                num_scalar_prefetch=0, grid=(nm,),
                in_specs=[act_spec, gb_spec, wfc_spec, vec_spec],
                out_specs=act_spec),
            compiler_params=seq_params,
        )(x2, gb, params["w_fc"], params["vecs"])
        return out.reshape(B, L, D)

    out = pl.pallas_call(
        functools.partial(_modulation_kernel, B=B, L=L),
        out_shape=out_shape,
        grid_spec=pltpu.PrefetchScalarGridSpec(
            num_scalar_prefetch=0, grid=(nm,),
            in_specs=[act_spec, emb_spec, wfc_spec, w1_spec, wgb2_spec, vec_spec],
            out_specs=act_spec),
        compiler_params=seq_params,
    )(x2, emb2, params["w_fc"], params["w1cat"], params["w_gb2"], params["vecs"])
    return out.reshape(B, L, D)


# ----------------------------------------------------------------------------- reference


def reference(x, emb, params, cut_flag=0):
    """Pure-JAX reference of SubHairMapper.forward (same bf16 weight storage as the kernels)."""
    nm = params["w_fc"].shape[0]
    B, L, _ = x.shape
    x = x * jax.lax.rsqrt(jnp.mean(x * x, axis=1, keepdims=True) + PIX_EPS)
    e2 = emb.reshape(B * L, D).astype(jnp.bfloat16)
    for m in range(nm):
        wfc = params["w_fc"][m]
        w1 = params["w1cat"][m]
        wgb2 = params["w_gb2"][m]
        v = params["vecs"][m]

        x2 = x.reshape(B * L, D).astype(jnp.bfloat16)
        h = jnp.dot(x2, wfc, preferred_element_type=jnp.float32) + v[0]
        h = h.reshape(B, L, D)
        mu = jnp.mean(h, axis=(1, 2), keepdims=True)
        var = jnp.mean((h - mu) ** 2, axis=(1, 2), keepdims=True)
        hn = (h - mu) * jax.lax.rsqrt(var + LN_EPS)
        if cut_flag:
            x = hn
            continue

        t = jnp.dot(e2, w1, preferred_element_type=jnp.float32)

        def half(th, b1, lnw, lnb, w2, b2):
            th = th + b1
            tmu = jnp.mean(th, axis=-1, keepdims=True)
            tvar = jnp.mean((th - tmu) ** 2, axis=-1, keepdims=True)
            th = (th - tmu) * jax.lax.rsqrt(tvar + LN_EPS) * lnw + lnb
            th = _leaky_relu(th).astype(jnp.bfloat16)
            return jnp.dot(th, w2, preferred_element_type=jnp.float32) + b2

        gamma = half(t[:, 0:D], v[1], v[3], v[5], wgb2[0:D], v[7]).reshape(B, L, D)
        beta = half(t[:, D:2 * D], v[2], v[4], v[6], wgb2[D:2 * D], v[8]).reshape(B, L, D)
        x = _leaky_relu(hn * (1.0 + gamma) + beta)
    return x


if __name__ == "__main__":
    key = jax.random.PRNGKey(0)
    kx, ke, kp = jax.random.split(key, 3)

    B, L = 2, 4  # small batch, small layernum; channel width 512 is fixed by the module
    x = jax.random.normal(kx, (B, L, D), jnp.float32)
    emb = jax.random.normal(ke, (B, L, D), jnp.float32)
    params = make_params(kp)

    mapper = jax.jit(sub_hair_mapper, static_argnames=("cut_flag", "split_prepass"))

    # full path, fused single-kernel variant (default on v5e/v6e)
    ref = reference(x, emb, params, cut_flag=0)
    out = jax.block_until_ready(mapper(x, emb, params, cut_flag=0, split_prepass=False))
    assert out.shape == (B, L, D)
    assert bool(jnp.all(jnp.isfinite(out)))
    assert bool(jnp.allclose(out, ref, atol=2e-3, rtol=2e-3))

    # full path, split gamma/beta pre-pass variant (default on v7x; bit-compatible math)
    out_split = jax.block_until_ready(mapper(x, emb, params, cut_flag=0, split_prepass=True))
    assert bool(jnp.all(jnp.isfinite(out_split)))
    assert bool(jnp.allclose(out_split, ref, atol=2e-3, rtol=2e-3))

    # cut_flag path (fc + LayerNorm only; gamma/beta weights never streamed)
    out_cut = jax.block_until_ready(mapper(x, emb, params, cut_flag=1))
    ref_cut = reference(x, emb, params, cut_flag=1)
    assert bool(jnp.all(jnp.isfinite(out_cut)))
    assert bool(jnp.allclose(out_cut, ref_cut, atol=2e-3, rtol=2e-3))

    print("KERNEL_OK")
</pallas_src>

<mosaic_0001>
module attributes {stable_mosaic.version = 11 : i64} {
  func.func @_modulation_kernel(%arg0: i32, %arg1: memref<8x512xf32, #tpu.memory_space<vmem>>, %arg2: memref<8x512xbf16, #tpu.memory_space<vmem>>, %arg3: memref<1x512x512xbf16, #tpu.memory_space<vmem>>, %arg4: memref<1x512x1024xbf16, #tpu.memory_space<vmem>>, %arg5: memref<1x1024x512xbf16, #tpu.memory_space<vmem>>, %arg6: memref<1x9x512xf32, #tpu.memory_space<vmem>>, %arg7: memref<8x512xf32, #tpu.memory_space<vmem>>) attributes {dimension_semantics = [#tpu.dimension_semantics<arbitrary>], iteration_bounds = array<i64: 5>, scalar_prefetch = 0 : i64, scratch_operands = 0 : i64, tpu.core_type = #tpu.core_type<tc>, window_params = [{pipeline_mode = #tpu.pipeline_mode<synchronous>, transform_indices = @transform_0, window_bounds = array<i64: 8, 512>}, {pipeline_mode = #tpu.pipeline_mode<synchronous>, transform_indices = @transform_1, window_bounds = array<i64: 8, 512>}, {transform_indices = @transform_2, window_bounds = array<i64: 1, 512, 512>}, {transform_indices = @transform_3, window_bounds = array<i64: 1, 512, 1024>}, {transform_indices = @transform_4, window_bounds = array<i64: 1, 1024, 512>}, {transform_indices = @transform_5, window_bounds = array<i64: 1, 9, 512>}, {pipeline_mode = #tpu.pipeline_mode<synchronous>, transform_indices = @transform_6, window_bounds = array<i64: 8, 512>}]} {
    %c0_i32 = arith.constant 0 : i32
    %0 = arith.cmpi eq, %arg0, %c0_i32 : i32
    %1 = arith.extui %0 : i1 to i32
    %c0_i32_0 = arith.constant 0 : i32
    %2 = arith.cmpi ne, %1, %c0_i32_0 : i32
    scf.if %2 {
      %c0_70 = arith.constant 0 : index
      %c0_71 = arith.constant 0 : index
      %185 = vector.load %arg1[%c0_70, %c0_71] : memref<8x512xf32, #tpu.memory_space<vmem>>, vector<8x512xf32>
      %c0_72 = arith.constant 0 : index
      %c0_73 = arith.constant 0 : index
      %186 = vector.load %arg7[%c0_72, %c0_73] : memref<8x512xf32, #tpu.memory_space<vmem>>, vector<8x512xf32>
      tpu.vector_store %arg7[%c0_72, %c0_73], %185 {strides = array<i32>} : memref<8x512xf32, #tpu.memory_space<vmem>>, vector<8x512xf32>,
    } else {
    }
    %c0 = arith.constant 0 : index
    %c0_1 = arith.constant 0 : index
    %3 = vector.load %arg7[%c0, %c0_1] : memref<8x512xf32, #tpu.memory_space<vmem>>, vector<8x512xf32>
    %4 = arith.truncf %3 : vector<8x512xf32> to vector<8x512xbf16>
    %c0_2 = arith.constant 0 : index
    %c0_3 = arith.constant 0 : index
    %c0_4 = arith.constant 0 : index
    %5 = vector.load %arg3[%c0_2, %c0_3, %c0_4] : memref<1x512x512xbf16, #tpu.memory_space<vmem>>, vector<1x512x512xbf16>
    %6 = vector.shape_cast %5 : vector<1x512x512xbf16> to vector<512x512xbf16>
    %cst = arith.constant dense<0.000000e+00> : vector<8x512xf32>
    %7 = tpu.matmul %4, %6, %cst {dimension_numbers = #tpu.dot_dimension_numbers<[1], [0], [0], [1], [0, 0, 1, 1], [], []>} : vector<8x512xbf16>, vector<512x512xbf16>, vector<8x512xf32> -> vector<8x512xf32>
    %c0_5 = arith.constant 0 : index
    %c0_6 = arith.constant 0 : index
    %c0_7 = arith.constant 0 : index
    %8 = vector.load %arg6[%c0_5, %c0_6, %c0_7] : memref<1x9x512xf32, #tpu.memory_space<vmem>>, vector<1x1x512xf32>
    %9 = vector.shape_cast %8 : vector<1x1x512xf32> to vector<1x512xf32>
    %10 = vector.broadcast %9 : vector<1x512xf32> to vector<8x512xf32>
    %11 = arith.addf %7, %10 : vector<8x512xf32>
    %12 = tpu.iota {dimensions = array<i32: 0>} : vector<8x1xi32>
    %cst_8 = arith.constant 0.000000e+00 : f32
    %13 = vector.broadcast %cst_8 : f32 to vector<8x1xf32>
    %cst_9 = arith.constant 0.000000e+00 : f32
    %14 = vector.broadcast %cst_9 : f32 to vector<8x1xf32>
    %15 = vector.extract_strided_slice %11 {offsets = [0, 0], sizes = [4, 512], strides = [1, 1]} : vector<8x512xf32> to vector<4x512xf32>
    %16 = vector.shape_cast %15 : vector<4x512xf32> to vector<1x4x512xf32>
    %cst_10 = arith.constant dense<0.000000e+00> : vector<1xf32>
    %17 = vector.multi_reduction <add>, %16, %cst_10 [1, 2] : vector<1x4x512xf32> to vector<1xf32>
    %18 = vector.shape_cast %17 : vector<1xf32> to vector<1x1x1xf32>
    %19 = vector.extract %18[0, 0, 0] : f32 from vector<1x1x1xf32>
    %20 = vector.broadcast %19 : f32 to vector<1x1xf32>
    %cst_11 = arith.constant 2.048000e+03 : f32
    %21 = vector.broadcast %cst_11 : f32 to vector<1x1xf32>
    %22 = arith.divf %20, %21 : vector<1x1xf32>
    %23 = vector.broadcast %22 : vector<1x1xf32> to vector<4x512xf32>
    %24 = arith.subf %15, %23 : vector<4x512xf32>
    %25 = arith.mulf %24, %24 : vector<4x512xf32>
    %26 = vector.shape_cast %25 : vector<4x512xf32> to vector<1x4x512xf32>
    %cst_12 = arith.constant dense<0.000000e+00> : vector<1xf32>
    %27 = vector.multi_reduction <add>, %26, %cst_12 [1, 2] : vector<1x4x512xf32> to vector<1xf32>
    %28 = vector.shape_cast %27 : vector<1xf32> to vector<1x1x1xf32>
    %29 = vector.extract %28[0, 0, 0] : f32 from vector<1x1x1xf32>
    %30 = vector.broadcast %29 : f32 to vector<1x1xf32>
    %cst_13 = arith.constant 2.048000e+03 : f32
    %31 = vector.broadcast %cst_13 : f32 to vector<1x1xf32>
    %32 = arith.divf %30, %31 : vector<1x1xf32>
    %c0_i32_14 = arith.constant 0 : i32
    %33 = vector.broadcast %c0_i32_14 : i32 to vector<8x1xi32>
    %34 = arith.cmpi sge, %12, %33 : vector<8x1xi32>
    %c4_i32 = arith.constant 4 : i32
    %35 = vector.broadcast %c4_i32 : i32 to vector<8x1xi32>
    %36 = arith.cmpi slt, %12, %35 : vector<8x1xi32>
    %37 = arith.andi %34, %36 : vector<8x1xi1>
    %38 = vector.shape_cast %22 : vector<1x1xf32> to vector<1x1xf32>
    %39 = vector.broadcast %38 : vector<1x1xf32> to vector<8x1xf32>
    %40 = arith.select %37, %39, %13 : vector<8x1xi1>, vector<8x1xf32>
    %cst_15 = arith.constant 9.99999974E-6 : f32
    %41 = vector.broadcast %cst_15 : f32 to vector<1x1xf32>
    %42 = arith.addf %32, %41 : vector<1x1xf32>
    %43 = math.rsqrt %42 : vector<1x1xf32>
    %44 = vector.shape_cast %43 : vector<1x1xf32> to vector<1x1xf32>
    %45 = vector.broadcast %44 : vector<1x1xf32> to vector<8x1xf32>
    %46 = arith.select %37, %45, %14 : vector<8x1xi1>, vector<8x1xf32>
    %47 = vector.extract_strided_slice %11 {offsets = [4, 0], sizes = [4, 512], strides = [1, 1]} : vector<8x512xf32> to vector<4x512xf32>
    %48 = vector.shape_cast %47 : vector<4x512xf32> to vector<1x4x512xf32>
    %cst_16 = arith.constant dense<0.000000e+00> : vector<1xf32>
    %49 = vector.multi_reduction <add>, %48, %cst_16 [1, 2] : vector<1x4x512xf32> to vector<1xf32>
    %50 = vector.shape_cast %49 : vector<1xf32> to vector<1x1x1xf32>
    %51 = vector.extract %50[0, 0, 0] : f32 from vector<1x1x1xf32>
    %52 = vector.broadcast %51 : f32 to vector<1x1xf32>
    %cst_17 = arith.constant 2.048000e+03 : f32
    %53 = vector.broadcast %cst_17 : f32 to vector<1x1xf32>
    %54 = arith.divf %52, %53 : vector<1x1xf32>
    %55 = vector.broadcast %54 : vector<1x1xf32> to vector<4x512xf32>
    %56 = arith.subf %47, %55 : vector<4x512xf32>
    %57 = arith.mulf %56, %56 : vector<4x512xf32>
    %58 = vector.shape_cast %57 : vector<4x512xf32> to vector<1x4x512xf32>
    %cst_18 = arith.constant dense<0.000000e+00> : vector<1xf32>
    %59 = vector.multi_reduction <add>, %58, %cst_18 [1, 2] : vector<1x4x512xf32> to vector<1xf32>
    %60 = vector.shape_cast %59 : vector<1xf32> to vector<1x1x1xf32>
    %61 = vector.extract %60[0, 0, 0] : f32 from vector<1x1x1xf32>
    %62 = vector.broadcast %61 : f32 to vector<1x1xf32>
    %cst_19 = arith.constant 2.048000e+03 : f32
    %63 = vector.broadcast %cst_19 : f32 to vector<1x1xf32>
    %64 = arith.divf %62, %63 : vector<1x1xf32>
    %c4_i32_20 = arith.constant 4 : i32
    %65 = vector.broadcast %c4_i32_20 : i32 to vector<8x1xi32>
    %66 = arith.cmpi sge, %12, %65 : vector<8x1xi32>
    %c8_i32 = arith.constant 8 : i32
    %67 = vector.broadcast %c8_i32 : i32 to vector<8x1xi32>
    %68 = arith.cmpi slt, %12, %67 : vector<8x1xi32>
    %69 = arith.andi %66, %68 : vector<8x1xi1>
    %70 = vector.shape_cast %54 : vector<1x1xf32> to vector<1x1xf32>
    %71 = vector.broadcast %70 : vector<1x1xf32> to vector<8x1xf32>
    %72 = arith.select %69, %71, %40 : vector<8x1xi1>, vector<8x1xf32>
    %cst_21 = arith.constant 9.99999974E-6 : f32
    %73 = vector.broadcast %cst_21 : f32 to vector<1x1xf32>
    %74 = arith.addf %64, %73 : vector<1x1xf32>
    %75 = math.rsqrt %74 : vector<1x1xf32>
    %76 = vector.shape_cast %75 : vector<1x1xf32> to vector<1x1xf32>
    %77 = vector.broadcast %76 : vector<1x1xf32> to vector<8x1xf32>
    %78 = arith.select %69, %77, %46 : vector<8x1xi1>, vector<8x1xf32>
    %79 = vector.broadcast %72 : vector<8x1xf32> to vector<8x512xf32>
    %80 = arith.subf %11, %79 : vector<8x512xf32>
    %81 = vector.broadcast %78 : vector<8x1xf32> to vector<8x512xf32>
    %82 = arith.mulf %80, %81 : vector<8x512xf32>
    %c0_22 = arith.constant 0 : index
    %c0_23 = arith.constant 0 : index
    %83 = vector.load %arg2[%c0_22, %c0_23] : memref<8x512xbf16, #tpu.memory_space<vmem>>, vector<8x512xbf16>
    %c0_24 = arith.constant 0 : index
    %c0_25 = arith.constant 0 : index
    %c0_26 = arith.constant 0 : index
    %84 = vector.load %arg4[%c0_24, %c0_25, %c0_26] : memref<1x512x1024xbf16, #tpu.memory_space<vmem>>, vector<1x512x1024xbf16>
    %85 = vector.shape_cast %84 : vector<1x512x1024xbf16> to vector<512x1024xbf16>
    %cst_27 = arith.constant dense<0.000000e+00> : vector<8x1024xf32>
    %86 = tpu.matmul %83, %85, %cst_27 {dimension_numbers = #tpu.dot_dimension_numbers<[1], [0], [0], [1], [0, 0, 1, 1], [], []>} : vector<8x512xbf16>, vector<512x1024xbf16>, vector<8x1024xf32> -> vector<8x1024xf32>
    %87 = vector.extract_strided_slice %86 {offsets = [0, 0], sizes = [8, 512], strides = [1, 1]} : vector<8x1024xf32> to vector<8x512xf32>
    %c0_28 = arith.constant 0 : index
    %c1 = arith.constant 1 : index
    %c0_29 = arith.constant 0 : index
    %88 = vector.load %arg6[%c0_28, %c1, %c0_29] : memref<1x9x512xf32, #tpu.memory_space<vmem>>, vector<1x1x512xf32>
    %89 = vector.shape_cast %88 : vector<1x1x512xf32> to vector<1x512xf32>
    %c0_30 = arith.constant 0 : index
    %c3 = arith.constant 3 : index
    %c0_31 = arith.constant 0 : index
    %90 = vector.load %arg6[%c0_30, %c3, %c0_31] : memref<1x9x512xf32, #tpu.memory_space<vmem>>, vector<1x1x512xf32>
    %91 = vector.shape_cast %90 : vector<1x1x512xf32> to vector<1x512xf32>
    %c0_32 = arith.constant 0 : index
    %c5 = arith.constant 5 : index
    %c0_33 = arith.constant 0 : index
    %92 = vector.load %arg6[%c0_32, %c5, %c0_33] : memref<1x9x512xf32, #tpu.memory_space<vmem>>, vector<1x1x512xf32>
    %93 = vector.shape_cast %92 : vector<1x1x512xf32> to vector<1x512xf32>
    %94 = vector.broadcast %89 : vector<1x512xf32> to vector<8x512xf32>
    %95 = arith.addf %87, %94 : vector<8x512xf32>
    %cst_34 = arith.constant dense<0.000000e+00> : vector<8xf32>
    %96 = vector.multi_reduction <add>, %95, %cst_34 [1] : vector<8x512xf32> to vector<8xf32>
    %97 = vector.shape_cast %96 : vector<8xf32> to vector<8x1xf32>
    %cst_35 = arith.constant 5.120000e+02 : f32
    %98 = vector.broadcast %cst_35 : f32 to vector<8x1xf32>
    %99 = arith.divf %97, %98 : vector<8x1xf32>
    %100 = vector.broadcast %99 : vector<8x1xf32> to vector<8x512xf32>
    %101 = arith.subf %95, %100 : vector<8x512xf32>
    %102 = arith.mulf %101, %101 : vector<8x512xf32>
    %cst_36 = arith.constant dense<0.000000e+00> : vector<8xf32>
    %103 = vector.multi_reduction <add>, %102, %cst_36 [1] : vector<8x512xf32> to vector<8xf32>
    %104 = vector.shape_cast %103 : vector<8xf32> to vector<8x1xf32>
    %cst_37 = arith.constant 5.120000e+02 : f32
    %105 = vector.broadcast %cst_37 : f32 to vector<8x1xf32>
    %106 = arith.divf %104, %105 : vector<8x1xf32>
    %107 = vector.broadcast %99 : vector<8x1xf32> to vector<8x512xf32>
    %108 = arith.subf %95, %107 : vector<8x512xf32>
    %cst_38 = arith.constant 9.99999974E-6 : f32
    %109 = vector.broadcast %cst_38 : f32 to vector<8x1xf32>
    %110 = arith.addf %106, %109 : vector<8x1xf32>
    %111 = math.rsqrt %110 : vector<8x1xf32>
    %112 = vector.broadcast %111 : vector<8x1xf32> to vector<8x512xf32>
    %113 = arith.mulf %108, %112 : vector<8x512xf32>
    %114 = vector.broadcast %91 : vector<1x512xf32> to vector<8x512xf32>
    %115 = arith.mulf %113, %114 : vector<8x512xf32>
    %116 = vector.broadcast %93 : vector<1x512xf32> to vector<8x512xf32>
    %117 = arith.addf %115, %116 : vector<8x512xf32>
    %cst_39 = arith.constant 0.000000e+00 : f32
    %118 = vector.broadcast %cst_39 : f32 to vector<8x512xf32>
    %119 = arith.cmpf oge, %117, %118 : vector<8x512xf32>
    %cst_40 = arith.constant 0.00999999977 : f32
    %120 = vector.broadcast %cst_40 : f32 to vector<8x512xf32>
    %121 = arith.mulf %120, %117 : vector<8x512xf32>
    %122 = arith.select %119, %117, %121 : vector<8x512xi1>, vector<8x512xf32>
    %123 = arith.truncf %122 : vector<8x512xf32> to vector<8x512xbf16>
    %124 = vector.extract_strided_slice %86 {offsets = [0, 512], sizes = [8, 512], strides = [1, 1]} : vector<8x1024xf32> to vector<8x512xf32>
    %c0_41 = arith.constant 0 : index
    %c2 = arith.constant 2 : index
    %c0_42 = arith.constant 0 : index
    %125 = vector.load %arg6[%c0_41, %c2, %c0_42] : memref<1x9x512xf32, #tpu.memory_space<vmem>>, vector<1x1x512xf32>
    %126 = vector.shape_cast %125 : vector<1x1x512xf32> to vector<1x512xf32>
    %c0_43 = arith.constant 0 : index
    %c4 = arith.constant 4 : index
    %c0_44 = arith.constant 0 : index
    %127 = vector.load %arg6[%c0_43, %c4, %c0_44] : memref<1x9x512xf32, #tpu.memory_space<vmem>>, vector<1x1x512xf32>
    %128 = vector.shape_cast %127 : vector<1x1x512xf32> to vector<1x512xf32>
    %c0_45 = arith.constant 0 : index
    %c6 = arith.constant 6 : index
    %c0_46 = arith.constant 0 : index
    %129 = vector.load %arg6[%c0_45, %c6, %c0_46] : memref<1x9x512xf32, #tpu.memory_space<vmem>>, vector<1x1x512xf32>
    %130 = vector.shape_cast %129 : vector<1x1x512xf32> to vector<1x512xf32>
    %131 = vector.broadcast %126 : vector<1x512xf32> to vector<8x512xf32>
    %132 = arith.addf %124, %131 : vector<8x512xf32>
    %cst_47 = arith.constant dense<0.000000e+00> : vector<8xf32>
    %133 = vector.multi_reduction <add>, %132, %cst_47 [1] : vector<8x512xf32> to vector<8xf32>
    %134 = vector.shape_cast %133 : vector<8xf32> to vector<8x1xf32>
    %cst_48 = arith.constant 5.120000e+02 : f32
    %135 = vector.broadcast %cst_48 : f32 to vector<8x1xf32>
    %136 = arith.divf %134, %135 : vector<8x1xf32>
    %137 = vector.broadcast %136 : vector<8x1xf32> to vector<8x512xf32>
    %138 = arith.subf %132, %137 : vector<8x512xf32>
    %139 = arith.mulf %138, %138 : vector<8x512xf32>
    %cst_49 = arith.constant dense<0.000000e+00> : vector<8xf32>
    %140 = vector.multi_reduction <add>, %139, %cst_49 [1] : vector<8x512xf32> to vector<8xf32>
    %141 = vector.shape_cast %140 : vector<8xf32> to vector<8x1xf32>
    %cst_50 = arith.constant 5.120000e+02 : f32
    %142 = vector.broadcast %cst_50 : f32 to vector<8x1xf32>
    %143 = arith.divf %141, %142 : vector<8x1xf32>
    %144 = vector.broadcast %136 : vector<8x1xf32> to vector<8x512xf32>
    %145 = arith.subf %132, %144 : vector<8x512xf32>
    %cst_51 = arith.constant 9.99999974E-6 : f32
    %146 = vector.broadcast %cst_51 : f32 to vector<8x1xf32>
    %147 = arith.addf %143, %146 : vector<8x1xf32>
    %148 = math.rsqrt %147 : vector<8x1xf32>
    %149 = vector.broadcast %148 : vector<8x1xf32> to vector<8x512xf32>
    %150 = arith.mulf %145, %149 : vector<8x512xf32>
    %151 = vector.broadcast %128 : vector<1x512xf32> to vector<8x512xf32>
    %152 = arith.mulf %150, %151 : vector<8x512xf32>
    %153 = vector.broadcast %130 : vector<1x512xf32> to vector<8x512xf32>
    %154 = arith.addf %152, %153 : vector<8x512xf32>
    %cst_52 = arith.constant 0.000000e+00 : f32
    %155 = vector.broadcast %cst_52 : f32 to vector<8x512xf32>
    %156 = arith.cmpf oge, %154, %155 : vector<8x512xf32>
    %cst_53 = arith.constant 0.00999999977 : f32
    %157 = vector.broadcast %cst_53 : f32 to vector<8x512xf32>
    %158 = arith.mulf %157, %154 : vector<8x512xf32>
    %159 = arith.select %156, %154, %158 : vector<8x512xi1>, vector<8x512xf32>
    %160 = arith.truncf %159 : vector<8x512xf32> to vector<8x512xbf16>
    %c0_54 = arith.constant 0 : index
    %c0_55 = arith.constant 0 : index
    %c0_56 = arith.constant 0 : index
    %161 = vector.load %arg5[%c0_54, %c0_55, %c0_56] : memref<1x1024x512xbf16, #tpu.memory_space<vmem>>, vector<1x512x512xbf16>
    %162 = vector.shape_cast %161 : vector<1x512x512xbf16> to vector<512x512xbf16>
    %cst_57 = arith.constant dense<0.000000e+00> : vector<8x512xf32>
    %163 = tpu.matmul %123, %162, %cst_57 {dimension_numbers = #tpu.dot_dimension_numbers<[1], [0], [0], [1], [0, 0, 1, 1], [], []>} : vector<8x512xbf16>, vector<512x512xbf16>, vector<8x512xf32> -> vector<8x512xf32>
    %c0_58 = arith.constant 0 : index
    %c7 = arith.constant 7 : index
    %c0_59 = arith.constant 0 : index
    %164 = vector.load %arg6[%c0_58, %c7, %c0_59] : memref<1x9x512xf32, #tpu.memory_space<vmem>>, vector<1x1x512xf32>
    %165 = vector.shape_cast %164 : vector<1x1x512xf32> to vector<1x512xf32>
    %166 = vector.broadcast %165 : vector<1x512xf32> to vector<8x512xf32>
    %167 = arith.addf %163, %166 : vector<8x512xf32>
    %c0_60 = arith.constant 0 : index
    %c512 = arith.constant 512 : index
    %c0_61 = arith.constant 0 : index
    %168 = vector.load %arg5[%c0_60, %c512, %c0_61] : memref<1x1024x512xbf16, #tpu.memory_space<vmem>>, vector<1x512x512xbf16>
    %169 = vector.shape_cast %168 : vector<1x512x512xbf16> to vector<512x512xbf16>
    %cst_62 = arith.constant dense<0.000000e+00> : vector<8x512xf32>
    %170 = tpu.matmul %160, %169, %cst_62 {dimension_numbers = #tpu.dot_dimension_numbers<[1], [0], [0], [1], [0, 0, 1, 1], [], []>} : vector<8x512xbf16>, vector<512x512xbf16>, vector<8x512xf32> -> vector<8x512xf32>
    %c0_63 = arith.constant 0 : index
    %c8 = arith.constant 8 : index
    %c0_64 = arith.constant 0 : index
    %171 = vector.load %arg6[%c0_63, %c8, %c0_64] : memref<1x9x512xf32, #tpu.memory_space<vmem>>, vector<1x1x512xf32>
    %172 = vector.shape_cast %171 : vector<1x1x512xf32> to vector<1x512xf32>
    %173 = vector.broadcast %172 : vector<1x512xf32> to vector<8x512xf32>
    %174 = arith.addf %170, %173 : vector<8x512xf32>
    %cst_65 = arith.constant 1.000000e+00 : f32
    %175 = vector.broadcast %cst_65 : f32 to vector<8x512xf32>
    %176 = arith.addf %175, %167 : vector<8x512xf32>
    %177 = arith.mulf %82, %176 : vector<8x512xf32>
    %178 = arith.addf %177, %174 : vector<8x512xf32>
    %cst_66 = arith.constant 0.000000e+00 : f32
    %179 = vector.broadcast %cst_66 : f32 to vector<8x512xf32>
    %180 = arith.cmpf oge, %178, %179 : vector<8x512xf32>
    %cst_67 = arith.constant 0.00999999977 : f32
    %181 = vector.broadcast %cst_67 : f32 to vector<8x512xf32>
    %182 = arith.mulf %181, %178 : vector<8x512xf32>
    %183 = arith.select %180, %178, %182 : vector<8x512xi1>, vector<8x512xf32>
    %c0_68 = arith.constant 0 : index
    %c0_69 = arith.constant 0 : index
    %184 = vector.load %arg7[%c0_68, %c0_69] : memref<8x512xf32, #tpu.memory_space<vmem>>, vector<8x512xf32>
    tpu.vector_store %arg7[%c0_68, %c0_69], %183 {strides = array<i32>} : memref<8x512xf32, #tpu.memory_space<vmem>>, vector<8x512xf32>,
    return
  }
  func.func @transform_0(%arg0: i32) -> (i32, i32) {
    %c0_i32 = arith.constant 0 : i32
    %c0_i32_0 = arith.constant 0 : i32
    %c0_i32_1 = arith.constant 0 : i32
    return %c0_i32, %c0_i32_0 : i32, i32
  }
  func.func @transform_1(%arg0: i32) -> (i32, i32) {
    %c0_i32 = arith.constant 0 : i32
    %c0_i32_0 = arith.constant 0 : i32
    %c0_i32_1 = arith.constant 0 : i32
    return %c0_i32, %c0_i32_0 : i32, i32
  }
  func.func @transform_2(%arg0: i32) -> (i32, i32, i32) {
    %c0_i32 = arith.constant 0 : i32
    %c0_i32_0 = arith.constant 0 : i32
    %c0_i32_1 = arith.constant 0 : i32
    return %arg0, %c0_i32, %c0_i32_0 : i32, i32, i32
  }
  func.func @transform_3(%arg0: i32) -> (i32, i32, i32) {
    %c0_i32 = arith.constant 0 : i32
    %c0_i32_0 = arith.constant 0 : i32
    %c0_i32_1 = arith.constant 0 : i32
    return %arg0, %c0_i32, %c0_i32_0 : i32, i32, i32
  }
  func.func @transform_4(%arg0: i32) -> (i32, i32, i32) {
    %c0_i32 = arith.constant 0 : i32
    %c0_i32_0 = arith.constant 0 : i32
    %c0_i32_1 = arith.constant 0 : i32
    return %arg0, %c0_i32, %c0_i32_0 : i32, i32, i32
  }
  func.func @transform_5(%arg0: i32) -> (i32, i32, i32) {
    %c0_i32 = arith.constant 0 : i32
    %c0_i32_0 = arith.constant 0 : i32
    %c0_i32_1 = arith.constant 0 : i32
    return %arg0, %c0_i32, %c0_i32_0 : i32, i32, i32
  }
  func.func @transform_6(%arg0: i32) -> (i32, i32) {
    %c0_i32 = arith.constant 0 : i32
    %c0_i32_0 = arith.constant 0 : i32
    %c0_i32_1 = arith.constant 0 : i32
    return %c0_i32, %c0_i32_0 : i32, i32
  }
}

</mosaic_0001>

<llo_original>
// kernel: sub_hair_mapper.1
$region0: #{sub_hair_mapper.1}
  #allocation0 [shape = 'u32[]', space=smem, size = 0x4, offset = 0x4, fixed_abs, tag = 'smem constant byte address 0x4 - core index']
  #allocation1 [shape = 'u32[72,128]{1,0:T(1,128)}', space=vmem, size = 0x9000, scoped, tag = 'internal scratch']
  %s0 = inlined_call_operand.vmem [shape: f32[8,512], index: 0, kind: input, shape index: {}]
  %s1 = inlined_call_operand.vmem [shape: bf16[8,512], index: 1, kind: input, shape index: {}]
  %s2 = inlined_call_operand.hbm [shape: bf16[5,512,512], index: 2, kind: input, shape index: {}]
  %s3 = inlined_call_operand.hbm [shape: bf16[5,512,1024], index: 3, kind: input, shape index: {}]
  %s4 = inlined_call_operand.hbm [shape: bf16[5,1024,512], index: 4, kind: input, shape index: {}]
  %s5 = inlined_call_operand.vmem [shape: f32[5,9,512], index: 5, kind: input, shape index: {}]
  %s6 = inlined_call_operand.vmem [shape: f32[8,512], index: 6, kind: output, shape index: {}]
  %s7 = sld [smem:[#allocation0]]
  $region73: #{sub_hair_mapper.1} parent=0
    _
  %s9 = ssub.s32 1, %s7
  %s10 = scalar_select 0, %s9, %s7
  $region1: #{sub_hair_mapper.1} parent=0
    #allocation2 [shape = 'u8[1048576]{0}', space=vmem, size = 0x100000, scoped, tag = 'input window, operand 2']
    #allocation3 [shape = 's32[2]{0}', space=sflag, size = 0x8, scoped, tag = 'scoped memory for sub_hair_mapper.1']
    #allocation4 [shape = 'u8[2097152]{0}', space=vmem, size = 0x200000, scoped, tag = 'input window, operand 3']
    #allocation5 [shape = 's32[2]{0}', space=sflag, size = 0x8, scoped, tag = 'scoped memory for sub_hair_mapper.1']
    #allocation6 [shape = 'u8[2097152]{0}', space=vmem, size = 0x200000, scoped, tag = 'input window, operand 4']
    %11 = vsyncpa [#allocation3], 0
    %s12 = scalar_lea.sflag [#allocation3], 1
    %13 = vsyncpa %s12, 0
    %14 = vsyncpa [#allocation5], 0
    %s15 = scalar_lea.sflag [#allocation5], 1
    %16 = vsyncpa %s15, 0
    loop: start=0, step=1, limit=7
    $region2: #{sub_hair_mapper.1} parent=1 // loop_pre_header
      _
    $region3: #{sub_hair_mapper.1} parent=1 // loop_header
      %s18 = sphi 0, %s22
      %p19 = scmp.ge.s32.totalorder %s18, 7
      %s26 = sphi 0, %s26
      %s28 = sphi 0, %s26
      %s29 = sphi 0, %s28
      %s43 = sphi 0, %s29
      %s47 = sphi 0, %s47
      %s49 = sphi 0, %s47
      %s50 = sphi 0, %s49
      %s64 = sphi 0, %s50
      %s70 = sphi 0, %s72
      %s73 = sphi 0, %s70
      %s74 = sphi 0, %s73
      %s90 = sphi 0, %s74
      %s96 = sphi 0, %s98
      %s99 = sphi 0, %s96
      %s100 = sphi 0, %s99
      %s116 = sphi 0, %s100
      %s122 = sphi 0, %s124
      %s125 = sphi 0, %s122
      %s126 = sphi 0, %s125
      %s142 = sphi 0, %s126
      %s148 = sphi 0, %s150
      %s151 = sphi 0, %s148
      %s152 = sphi 0, %s151
      %s168 = sphi 0, %s152
      %s172 = sphi 0, %s172
      %s174 = sphi 0, %s172
      %s175 = sphi 0, %s174
      %s189 = sphi 0, %s175
    $region4: #{sub_hair_mapper.1} parent=1 // loop_header_branch
      %21 = sbr.rel (%p19) target = $region8
    $region5: #{sub_hair_mapper.1} parent=1 // loop_body
      %s23 = ssub.s32 %s18, 1
      %s24 = ssub.s32 %s18, 2
      %s25 = sadd.s32 %s18, 1
      %s27 = sadd.s32 %s26, 1
      %p30 = scmp.eq.s32.totalorder %s18, 4
      %p31 = scmp.ne.s32.totalorder %s26, %s28
      %p32 = scmp.eq.s32.totalorder %s18, 0
      %p33 = por %p31, %p32
      %p34 = scmp.ne.s32.totalorder %s26, %s28
      %p35 = scmp.eq.s32.totalorder %s23, 4
      %p36 = por %p34, %p35
      %p37 = scmp.ne.s32.totalorder %s28, %s29
      %p38 = scmp.eq.s32.totalorder %s23, 0
      %p39 = por %p37, %p38
      %p40 = scmp.ne.s32.totalorder %s28, %s29
      %p41 = scmp.eq.s32.totalorder %s24, 4
      %p42 = por %p40, %p41
      %p44 = scmp.ne.s32.totalorder %s29, %s43
      %p45 = scmp.eq.s32.totalorder %s24, 0
      %p46 = por %p44, %p45
      %s48 = sadd.s32 %s47, 1
      %p51 = scmp.eq.s32.totalorder %s18, 4
      %p52 = scmp.ne.s32.totalorder %s47, %s49
      %p53 = scmp.eq.s32.totalorder %s18, 0
      %p54 = por %p52, %p53
      %p55 = scmp.ne.s32.totalorder %s47, %s49
      %p56 = scmp.eq.s32.totalorder %s23, 4
      %p57 = por %p55, %p56
      %p58 = scmp.ne.s32.totalorder %s49, %s50
      %p59 = scmp.eq.s32.totalorder %s23, 0
      %p60 = por %p58, %p59
      %p61 = scmp.ne.s32.totalorder %s49, %s50
      %p62 = scmp.eq.s32.totalorder %s24, 4
      %p63 = por %p61, %p62
      %p65 = scmp.ne.s32.totalorder %s50, %s64
      %p66 = scmp.eq.s32.totalorder %s24, 0
      %p67 = por %p65, %p66
      %s68 = ssub.s32 %s18, %s25
      %p69 = scmp.eq.s32.totalorder %s68, 0
      %s71 = sadd.s32 %s70, 1
      %s72 = scalar_select %p69, %s70, %s71
      %p75 = pneg %p69
      %p76 = scmp.eq.s32.totalorder %s18, 4
      %p77 = por %p75, %p76
      %p78 = scmp.ne.s32.totalorder %s70, %s73
      %p79 = scmp.eq.s32.totalorder %s18, 0
      %p80 = por %p78, %p79
      %p81 = scmp.ne.s32.totalorder %s70, %s73
      %p82 = scmp.eq.s32.totalorder %s23, 4
      %p83 = por %p81, %p82
      %p84 = scmp.ne.s32.totalorder %s73, %s74
      %p85 = scmp.eq.s32.totalorder %s23, 0
      %p86 = por %p84, %p85
      %p87 = scmp.ne.s32.totalorder %s73, %s74
      %p88 = scmp.eq.s32.totalorder %s24, 4
      %p89 = por %p87, %p88
      %p91 = scmp.ne.s32.totalorder %s74, %s90
      %p92 = scmp.eq.s32.totalorder %s24, 0
      %p93 = por %p91, %p92
      %s94 = ssub.s32 %s18, %s25
      %p95 = scmp.eq.s32.totalorder %s94, 0
      %s97 = sadd.s32 %s96, 1
      %s98 = scalar_select %p95, %s96, %s97
      %p101 = pneg %p95
      %p102 = scmp.eq.s32.totalorder %s18, 4
      %p103 = por %p101, %p102
      %p104 = scmp.ne.s32.totalorder %s96, %s99
      %p105 = scmp.eq.s32.totalorder %s18, 0
      %p106 = por %p104, %p105
      %p107 = scmp.ne.s32.totalorder %s96, %s99
      %p108 = scmp.eq.s32.totalorder %s23, 4
      %p109 = por %p107, %p108
      %p110 = scmp.ne.s32.totalorder %s99, %s100
      %p111 = scmp.eq.s32.totalorder %s23, 0
      %p112 = por %p110, %p111
      %p113 = scmp.ne.s32.totalorder %s99, %s100
      %p114 = scmp.eq.s32.totalorder %s24, 4
      %p115 = por %p113, %p114
      %p117 = scmp.ne.s32.totalorder %s100, %s116
      %p118 = scmp.eq.s32.totalorder %s24, 0
      %p119 = por %p117, %p118
      %s120 = ssub.s32 %s18, %s25
      %p121 = scmp.eq.s32.totalorder %s120, 0
      %s123 = sadd.s32 %s122, 1
      %s124 = scalar_select %p121, %s122, %s123
      %p127 = pneg %p121
      %p128 = scmp.eq.s32.totalorder %s18, 4
      %p129 = por %p127, %p128
      %p130 = scmp.ne.s32.totalorder %s122, %s125
      %p131 = scmp.eq.s32.totalorder %s18, 0
      %p132 = por %p130, %p131
      %p133 = scmp.ne.s32.totalorder %s122, %s125
      %p134 = scmp.eq.s32.totalorder %s23, 4
      %p135 = por %p133, %p134
      %p136 = scmp.ne.s32.totalorder %s125, %s126
      %p137 = scmp.eq.s32.totalorder %s23, 0
      %p138 = por %p136, %p137
      %p139 = scmp.ne.s32.totalorder %s125, %s126
      %p140 = scmp.eq.s32.totalorder %s24, 4
      %p141 = por %p139, %p140
      %p143 = scmp.ne.s32.totalorder %s126, %s142
      %p144 = scmp.eq.s32.totalorder %s24, 0
      %p145 = por %p143, %p144
      %s146 = ssub.s32 %s18, %s25
      %p147 = scmp.eq.s32.totalorder %s146, 0
      %s149 = sadd.s32 %s148, 1
      %s150 = scalar_select %p147, %s148, %s149
      %p153 = pneg %p147
      %p154 = scmp.eq.s32.totalorder %s18, 4
      %p155 = por %p153, %p154
      %p156 = scmp.ne.s32.totalorder %s148, %s151
      %p157 = scmp.eq.s32.totalorder %s18, 0
      %p158 = por %p156, %p157
      %p159 = scmp.ne.s32.totalorder %s148, %s151
      %p160 = scmp.eq.s32.totalorder %s23, 4
      %p161 = por %p159, %p160
      %p162 = scmp.ne.s32.totalorder %s151, %s152
      %p163 = scmp.eq.s32.totalorder %s23, 0
      %p164 = por %p162, %p163
      %p165 = scmp.ne.s32.totalorder %s151, %s152
      %p166 = scmp.eq.s32.totalorder %s24, 4
      %p167 = por %p165, %p166
      %p169 = scmp.ne.s32.totalorder %s152, %s168
      %p170 = scmp.eq.s32.totalorder %s24, 0
      %p171 = por %p169, %p170
      %s173 = sadd.s32 %s172, 1
      %p176 = scmp.eq.s32.totalorder %s18, 4
      %p177 = scmp.ne.s32.totalorder %s172, %s174
      %p178 = scmp.eq.s32.totalorder %s18, 0
      %p179 = por %p177, %p178
      %p180 = scmp.ne.s32.totalorder %s172, %s174
      %p181 = scmp.eq.s32.totalorder %s23, 4
      %p182 = por %p180, %p181
      %p183 = scmp.ne.s32.totalorder %s174, %s175
      %p184 = scmp.eq.s32.totalorder %s23, 0
      %p185 = por %p183, %p184
      %p186 = scmp.ne.s32.totalorder %s174, %s175
      %p187 = scmp.eq.s32.totalorder %s24, 4
      %p188 = por %p186, %p187
      %p190 = scmp.ne.s32.totalorder %s175, %s189
      %p191 = scmp.eq.s32.totalorder %s24, 0
      %p192 = por %p190, %p191
      %p193 = scmp.le.s32.totalorder 1, %s18
      %p194 = scmp.lt.s32.totalorder %s18, 6
      %p195 = pnand %p193, %p194
      %p196 = pneg %p195
      // Predicated region
      $region9: #{sub_hair_mapper.1} parent=5 // pred_check
        _
      $region10: #{sub_hair_mapper.1} parent=5 // pred_check_branch
        %198 = sbr.rel (%p195) target = $region12
      $region11: #{sub_hair_mapper.1} parent=5 // pred_region
        %s199 = ssub.s32 %s18, 1
        // Predicated region
        $region13: #{sub_hair_mapper.1} parent=11 // pred_check
          %p200 = pneg %p39
        $region14: #{sub_hair_mapper.1} parent=11 // pred_check_branch
          %202 = sbr.rel (%p200) target = $region16
        $region15: #{sub_hair_mapper.1} parent=11 // pred_region
          _
        $region16: #{sub_hair_mapper.1} parent=11 // pred_fallthru
          _
        // Predicated region
        $region17: #{sub_hair_mapper.1} parent=11 // pred_check
          %p203 = pneg %p60
        $region18: #{sub_hair_mapper.1} parent=11 // pred_check_branch
          %205 = sbr.rel (%p203) target = $region20
        $region19: #{sub_hair_mapper.1} parent=11 // pred_region
          _
        $region20: #{sub_hair_mapper.1} parent=11 // pred_fallthru
          _
      $region12: #{sub_hair_mapper.1} parent=5 // pred_fallthru
        _
      %p206 = scmp.lt.s32.totalorder %s18, 5
      // Predicated region
      $region21: #{sub_hair_mapper.1} parent=5 // pred_check
        %p207 = pneg %p206
      $region22: #{sub_hair_mapper.1} parent=5 // pred_check_branch
        %209 = sbr.rel (%p207) target = $region24
      $region23: #{sub_hair_mapper.1} parent=5 // pred_region
        // Predicated region
        $region25: #{sub_hair_mapper.1} parent=23 // pred_check
          %p210 = pneg %p80
        $region26: #{sub_hair_mapper.1} parent=23 // pred_check_branch
          %212 = sbr.rel (%p210) target = $region28
        $region27: #{sub_hair_mapper.1} parent=23 // pred_region
          %s213 = sand.u32 %s70, 1
          %s214 = scalar_lea.sflag [#allocation3], %s213
          %s215 = sand.u32 %s70, 1
          %s216 = smul.addr %s215, 1024
          %s217 = scalar_lea.vmem [#allocation2], %s216
          %219 = vsyncadd %s214, 0
          %s220 = smul.addr %s18, 256
          %s221 = smul.addr %s220, 4
          %s222 = scalar_lea.hbm %s2, %s221
          %s223 = sshll.u32 %s222, 4
          %s224 = int_to_ptr.hbm [resolvable:$true] %s223
          %s225 = sshll.u32 %s217, 4
          %s226 = int_to_ptr.vmem [resolvable:$true] %s225
          %231 = dma.hbm_to_vmem [thread:$0]  %s224, 16384, %s226, %s214, 256, 256, 16
        $region28: #{sub_hair_mapper.1} parent=23 // pred_fallthru
          _
        // Predicated region
        $region29: #{sub_hair_mapper.1} parent=23 // pred_check
          %p232 = pneg %p106
        $region30: #{sub_hair_mapper.1} parent=23 // pred_check_branch
          %234 = sbr.rel (%p232) target = $region32
        $region31: #{sub_hair_mapper.1} parent=23 // pred_region
          %s235 = sand.u32 %s18, 1
          %s236 = scalar_lea.sflag [#allocation5], %s235
          %s237 = sand.u32 %s96, 1
          %s238 = smul.addr %s237, 2048
          %s239 = scalar_lea.vmem [#allocation4], %s238
          %241 = vsyncadd %s236, 0
          %s242 = smul.addr %s18, 512
          %s243 = smul.addr %s242, 4
          %s244 = scalar_lea.hbm %s3, %s243
          %s245 = sshll.u32 %s244, 4
          %s246 = int_to_ptr.hbm [resolvable:$true] %s245
          %s247 = sshll.u32 %s239, 4
          %s248 = int_to_ptr.vmem [resolvable:$true] %s247
          %253 = dma.hbm_to_vmem [thread:$0]  %s246, 32768, %s248, %s236, 512, 512, 32
        $region32: #{sub_hair_mapper.1} parent=23 // pred_fallthru
          _
        // Predicated region
        $region33: #{sub_hair_mapper.1} parent=23 // pred_check
          %p254 = pneg %p132
        $region34: #{sub_hair_mapper.1} parent=23 // pred_check_branch
          %256 = sbr.rel (%p254) target = $region36
        $region35: #{sub_hair_mapper.1} parent=23 // pred_region
          %s257 = sand.u32 %s18, 1
          %s258 = scalar_lea.sflag [#allocation5], %s257
          %s259 = sand.u32 %s122, 1
          %s260 = smul.addr %s259, 2048
          %s261 = scalar_lea.vmem [#allocation6], %s260
          %263 = vsyncadd %s258, 0
          %s264 = smul.addr %s18, 512
          %s265 = smul.addr %s264, 4
          %s266 = scalar_lea.hbm %s4, %s265
          %s267 = sshll.u32 %s266, 4
          %s268 = int_to_ptr.hbm [resolvable:$true] %s267
          %s269 = sshll.u32 %s261, 4
          %s270 = int_to_ptr.vmem [resolvable:$true] %s269
          %275 = dma.hbm_to_vmem [thread:$0]  %s268, 32768, %s270, %s258, 256, 256, 16
        $region36: #{sub_hair_mapper.1} parent=23 // pred_fallthru
          _
        // Predicated region
        $region37: #{sub_hair_mapper.1} parent=23 // pred_check
          %p276 = pneg %p158
        $region38: #{sub_hair_mapper.1} parent=23 // pred_check_branch
          %278 = sbr.rel (%p276) target = $region40
        $region39: #{sub_hair_mapper.1} parent=23 // pred_region
          %p279 = scmp.lt.s32.totalorder %s18, 4
          %s280 = scalar_select %p279, %s18, 4
          %s281 = smul.addr %s280, 8
          %s282 = smul.addr %s281, 8
          %s283 = scalar_lea.vmem %s5, %s282
        $region40: #{sub_hair_mapper.1} parent=23 // pred_fallthru
          _
      $region24: #{sub_hair_mapper.1} parent=5 // pred_fallthru
        _
      %p284 = scmp.le.s32.totalorder 1, %s18
      %p285 = scmp.lt.s32.totalorder %s18, 6
      %p286 = pnand %p284, %p285
      %p287 = pneg %p286
      // Predicated region
      $region41: #{sub_hair_mapper.1} parent=5 // pred_check
        _
      $region42: #{sub_hair_mapper.1} parent=5 // pred_check_branch
        %289 = sbr.rel (%p286) target = $region44
      $region43: #{sub_hair_mapper.1} parent=5 // pred_region
        %s290 = ssub.s32 %s18, 1
        %s291 = sand.u32 %s73, 1
        %s292 = scalar_lea.sflag [#allocation3], %s291
        %s293 = sand.u32 %s73, 1
        %s294 = smul.addr %s293, 1024
        %s295 = scalar_lea.vmem [#allocation2], %s294
        // Predicated region
        $region45: #{sub_hair_mapper.1} parent=43 // pred_check
          %p296 = pneg %p86
        $region46: #{sub_hair_mapper.1} parent=43 // pred_check_branch
          %298 = sbr.rel (%p296) target = $region48
        $region47: #{sub_hair_mapper.1} parent=43 // pred_region
          %300 = dma.done %s292, 16384
        $region48: #{sub_hair_mapper.1} parent=43 // pred_fallthru
          _
        %s301 = sand.u32 %s23, 1
        %s302 = scalar_lea.sflag [#allocation5], %s301
        %s303 = sand.u32 %s99, 1
        %s304 = smul.addr %s303, 2048
        %s305 = scalar_lea.vmem [#allocation4], %s304
        // Predicated region
        $region49: #{sub_hair_mapper.1} parent=43 // pred_check
          %p306 = pneg %p112
        $region50: #{sub_hair_mapper.1} parent=43 // pred_check_branch
          %308 = sbr.rel (%p306) target = $region52
        $region51: #{sub_hair_mapper.1} parent=43 // pred_region
          %310 = dma.done %s302, 32768
        $region52: #{sub_hair_mapper.1} parent=43 // pred_fallthru
          _
        %s311 = sand.u32 %s23, 1
        %s312 = scalar_lea.sflag [#allocation5], %s311
        %s313 = sand.u32 %s125, 1
        %s314 = smul.addr %s313, 2048
        %s315 = scalar_lea.vmem [#allocation6], %s314
        // Predicated region
        $region53: #{sub_hair_mapper.1} parent=43 // pred_check
          %p316 = pneg %p138
        $region54: #{sub_hair_mapper.1} parent=43 // pred_check_branch
          %318 = sbr.rel (%p316) target = $region56
        $region55: #{sub_hair_mapper.1} parent=43 // pred_region
          %320 = dma.done %s312, 32768
        $region56: #{sub_hair_mapper.1} parent=43 // pred_fallthru
          _
        %p321 = pneg %p39
        %p322 = pneg %p36
        %p323 = pneg %p60
        %p324 = pneg %p57
        %s325 = sand.u32 %s73, 1
        %s326 = scalar_lea.sflag [#allocation3], %s325
        %s327 = sand.u32 %s73, 1
        %s328 = smul.addr %s327, 1024
        %s329 = scalar_lea.vmem [#allocation2], %s328
        %p330 = pneg %p86
        %p331 = pneg %p83
        %s332 = sand.u32 %s23, 1
        %s333 = scalar_lea.sflag [#allocation5], %s332
        %s334 = sand.u32 %s99, 1
        %s335 = smul.addr %s334, 2048
        %s336 = scalar_lea.vmem [#allocation4], %s335
        %p337 = pneg %p112
        %p338 = pneg %p109
        %s339 = sand.u32 %s23, 1
        %s340 = scalar_lea.sflag [#allocation5], %s339
        %s341 = sand.u32 %s125, 1
        %s342 = smul.addr %s341, 2048
        %s343 = scalar_lea.vmem [#allocation6], %s342
        %p344 = pneg %p138
        %p345 = pneg %p135
        %p346 = scmp.lt.s32.totalorder %s23, 4
        %s347 = scalar_select %p346, %s23, 4
        %s348 = smul.addr %s347, 8
        %s349 = smul.addr %s348, 8
        %s350 = scalar_lea.vmem %s5, %s349
        %p351 = pneg %p164
        %p352 = pneg %p161
        %p353 = pneg %p185
        %p354 = pneg %p182
        %p355 = scmp.lt.s32.totalorder %s23, 4
        %s356 = scalar_select %p355, %s23, 4
        %s357 = smul.addr %s356, 8
        %s358 = smul.addr %s357, 8
        %s359 = scalar_lea.vmem %s5, %s358
        %p360 = scmp.eq.s32.totalorder %s23, 0
        // Predicated region
        $region57: #{sub_hair_mapper.1} parent=43 // pred_check
          %p361 = pneg %p360
        $region58: #{sub_hair_mapper.1} parent=43 // pred_check_branch
          %363 = sbr.rel (%p361) target = $region60
        $region59: #{sub_hair_mapper.1} parent=43 // pred_region
          %v364 = vld [vmem:[%s0] sm:$0xff]
          %v365 = vld [vmem:[%s0 + $0x8] sm:$0xff]
          %v366 = vld [vmem:[%s0 + $0x10] sm:$0xff]
          %v367 = vld [vmem:[%s0 + $0x18] sm:$0xff]
          %368 = vst [vmem:[%s6] sm:$0xff] %v364
          %369 = vst [vmem:[%s6 + $0x8] sm:$0xff] %v365
          %370 = vst [vmem:[%s6 + $0x10] sm:$0xff] %v366
          %371 = vst [vmem:[%s6 + $0x18] sm:$0xff] %v367
        $region60: #{sub_hair_mapper.1} parent=43 // pred_fallthru
          _
        %v372 = vld [vmem:[%s6] sm:$0xff]
        %v373 = vld [vmem:[%s6 + $0x8] sm:$0xff]
        %v374 = vld [vmem:[%s6 + $0x10] sm:$0xff]
        %v375 = vld [vmem:[%s6 + $0x18] sm:$0xff]
        %v376 = vpack.c.bf16 %v372, %v372
        %v377 = vpack.c.bf16 %v373, %v373
        %v378 = vpack.c.bf16 %v374, %v374
        %v379 = vpack.c.bf16 %v375, %v375
        %v380 = vld [vmem:[%s295] sm:$0xff]
        %v381 = vld [vmem:[%s295 + $0x8] sm:$0xff]
        %v382 = vld [vmem:[%s295 + $0x10] sm:$0xff]
        %v383 = vld [vmem:[%s295 + $0x18] sm:$0xff]
        %v384 = vld [vmem:[%s295 + $0x20] sm:$0xff]
        %v385 = vld [vmem:[%s295 + $0x28] sm:$0xff]
        %v386 = vld [vmem:[%s295 + $0x30] sm:$0xff]
        %v387 = vld [vmem:[%s295 + $0x38] sm:$0xff]
        %v388 = vld [vmem:[%s295 + $0x40] sm:$0xff]
        %v389 = vld [vmem:[%s295 + $0x48] sm:$0xff]
        %v390 = vld [vmem:[%s295 + $0x50] sm:$0xff]
        %v391 = vld [vmem:[%s295 + $0x58] sm:$0xff]
        %v392 = vld [vmem:[%s295 + $0x60] sm:$0xff]
        %v393 = vld [vmem:[%s295 + $0x68] sm:$0xff]
        %v394 = vld [vmem:[%s295 + $0x70] sm:$0xff]
        %v395 = vld [vmem:[%s295 + $0x78] sm:$0xff]
        %v396 = vld [vmem:[%s295 + $0x80] sm:$0xff]
        %v397 = vld [vmem:[%s295 + $0x88] sm:$0xff]
        %v398 = vld [vmem:[%s295 + $0x90] sm:$0xff]
        %v399 = vld [vmem:[%s295 + $0x98] sm:$0xff]
        %v400 = vld [vmem:[%s295 + $0xa0] sm:$0xff]
        %v401 = vld [vmem:[%s295 + $0xa8] sm:$0xff]
        %v402 = vld [vmem:[%s295 + $0xb0] sm:$0xff]
        %v403 = vld [vmem:[%s295 + $0xb8] sm:$0xff]
        %v404 = vld [vmem:[%s295 + $0xc0] sm:$0xff]
        %v405 = vld [vmem:[%s295 + $0xc8] sm:$0xff]
        %v406 = vld [vmem:[%s295 + $0xd0] sm:$0xff]
        %v407 = vld [vmem:[%s295 + $0xd8] sm:$0xff]
        %v408 = vld [vmem:[%s295 + $0xe0] sm:$0xff]
        %v409 = vld [vmem:[%s295 + $0xe8] sm:$0xff]
        %v410 = vld [vmem:[%s295 + $0xf0] sm:$0xff]
        %v411 = vld [vmem:[%s295 + $0xf8] sm:$0xff]
        %v412 = vld [vmem:[%s295 + $0x100] sm:$0xff]
        %v413 = vld [vmem:[%s295 + $0x108] sm:$0xff]
        %v414 = vld [vmem:[%s295 + $0x110] sm:$0xff]
        %v415 = vld [vmem:[%s295 + $0x118] sm:$0xff]
        %v416 = vld [vmem:[%s295 + $0x120] sm:$0xff]
        %v417 = vld [vmem:[%s295 + $0x128] sm:$0xff]
        %v418 = vld [vmem:[%s295 + $0x130] sm:$0xff]
        %v419 = vld [vmem:[%s295 + $0x138] sm:$0xff]
        %v420 = vld [vmem:[%s295 + $0x140] sm:$0xff]
        %v421 = vld [vmem:[%s295 + $0x148] sm:$0xff]
        %v422 = vld [vmem:[%s295 + $0x150] sm:$0xff]
        %v423 = vld [vmem:[%s295 + $0x158] sm:$0xff]
        %v424 = vld [vmem:[%s295 + $0x160] sm:$0xff]
        %v425 = vld [vmem:[%s295 + $0x168] sm:$0xff]
        %v426 = vld [vmem:[%s295 + $0x170] sm:$0xff]
        %v427 = vld [vmem:[%s295 + $0x178] sm:$0xff]
        %v428 = vld [vmem:[%s295 + $0x180] sm:$0xff]
        %v429 = vld [vmem:[%s295 + $0x188] sm:$0xff]
        %v430 = vld [vmem:[%s295 + $0x190] sm:$0xff]
        %v431 = vld [vmem:[%s295 + $0x198] sm:$0xff]
        %v432 = vld [vmem:[%s295 + $0x1a0] sm:$0xff]
        %v433 = vld [vmem:[%s295 + $0x1a8] sm:$0xff]
        %v434 = vld [vmem:[%s295 + $0x1b0] sm:$0xff]
        %v435 = vld [vmem:[%s295 + $0x1b8] sm:$0xff]
        %v436 = vld [vmem:[%s295 + $0x1c0] sm:$0xff]
        %v437 = vld [vmem:[%s295 + $0x1c8] sm:$0xff]
        %v438 = vld [vmem:[%s295 + $0x1d0] sm:$0xff]
        %v439 = vld [vmem:[%s295 + $0x1d8] sm:$0xff]
        %v440 = vld [vmem:[%s295 + $0x1e0] sm:$0xff]
        %v441 = vld [vmem:[%s295 + $0x1e8] sm:$0xff]
        %v442 = vld [vmem:[%s295 + $0x1f0] sm:$0xff]
        %v443 = vld [vmem:[%s295 + $0x1f8] sm:$0xff]
        %v444 = vld [vmem:[%s295 + $0x200] sm:$0xff]
        %v445 = vld [vmem:[%s295 + $0x208] sm:$0xff]
        %v446 = vld [vmem:[%s295 + $0x210] sm:$0xff]
        %v447 = vld [vmem:[%s295 + $0x218] sm:$0xff]
        %v448 = vld [vmem:[%s295 + $0x220] sm:$0xff]
        %v449 = vld [vmem:[%s295 + $0x228] sm:$0xff]
        %v450 = vld [vmem:[%s295 + $0x230] sm:$0xff]
        %v451 = vld [vmem:[%s295 + $0x238] sm:$0xff]
        %v452 = vld [vmem:[%s295 + $0x240] sm:$0xff]
        %v453 = vld [vmem:[%s295 + $0x248] sm:$0xff]
        %v454 = vld [vmem:[%s295 + $0x250] sm:$0xff]
        %v455 = vld [vmem:[%s295 + $0x258] sm:$0xff]
        %v456 = vld [vmem:[%s295 + $0x260] sm:$0xff]
        %v457 = vld [vmem:[%s295 + $0x268] sm:$0xff]
        %v458 = vld [vmem:[%s295 + $0x270] sm:$0xff]
        %v459 = vld [vmem:[%s295 + $0x278] sm:$0xff]
        %v460 = vld [vmem:[%s295 + $0x280] sm:$0xff]
        %v461 = vld [vmem:[%s295 + $0x288] sm:$0xff]
        %v462 = vld [vmem:[%s295 + $0x290] sm:$0xff]
        %v463 = vld [vmem:[%s295 + $0x298] sm:$0xff]
        %v464 = vld [vmem:[%s295 + $0x2a0] sm:$0xff]
        %v465 = vld [vmem:[%s295 + $0x2a8] sm:$0xff]
        %v466 = vld [vmem:[%s295 + $0x2b0] sm:$0xff]
        %v467 = vld [vmem:[%s295 + $0x2b8] sm:$0xff]
        %v468 = vld [vmem:[%s295 + $0x2c0] sm:$0xff]
        %v469 = vld [vmem:[%s295 + $0x2c8] sm:$0xff]
        %v470 = vld [vmem:[%s295 + $0x2d0] sm:$0xff]
        %v471 = vld [vmem:[%s295 + $0x2d8] sm:$0xff]
        %v472 = vld [vmem:[%s295 + $0x2e0] sm:$0xff]
        %v473 = vld [vmem:[%s295 + $0x2e8] sm:$0xff]
        %v474 = vld [vmem:[%s295 + $0x2f0] sm:$0xff]
        %v475 = vld [vmem:[%s295 + $0x2f8] sm:$0xff]
        %v476 = vld [vmem:[%s295 + $0x300] sm:$0xff]
        %v477 = vld [vmem:[%s295 + $0x308] sm:$0xff]
        %v478 = vld [vmem:[%s295 + $0x310] sm:$0xff]
        %v479 = vld [vmem:[%s295 + $0x318] sm:$0xff]
        %v480 = vld [vmem:[%s295 + $0x320] sm:$0xff]
        %v481 = vld [vmem:[%s295 + $0x328] sm:$0xff]
        %v482 = vld [vmem:[%s295 + $0x330] sm:$0xff]
        %v483 = vld [vmem:[%s295 + $0x338] sm:$0xff]
        %v484 = vld [vmem:[%s295 + $0x340] sm:$0xff]
        %v485 = vld [vmem:[%s295 + $0x348] sm:$0xff]
        %v486 = vld [vmem:[%s295 + $0x350] sm:$0xff]
        %v487 = vld [vmem:[%s295 + $0x358] sm:$0xff]
        %v488 = vld [vmem:[%s295 + $0x360] sm:$0xff]
        %v489 = vld [vmem:[%s295 + $0x368] sm:$0xff]
        %v490 = vld [vmem:[%s295 + $0x370] sm:$0xff]
        %v491 = vld [vmem:[%s295 + $0x378] sm:$0xff]
        %v492 = vld [vmem:[%s295 + $0x380] sm:$0xff]
        %v493 = vld [vmem:[%s295 + $0x388] sm:$0xff]
        %v494 = vld [vmem:[%s295 + $0x390] sm:$0xff]
        %v495 = vld [vmem:[%s295 + $0x398] sm:$0xff]
        %v496 = vld [vmem:[%s295 + $0x3a0] sm:$0xff]
        %v497 = vld [vmem:[%s295 + $0x3a8] sm:$0xff]
        %v498 = vld [vmem:[%s295 + $0x3b0] sm:$0xff]
        %v499 = vld [vmem:[%s295 + $0x3b8] sm:$0xff]
        %v500 = vld [vmem:[%s295 + $0x3c0] sm:$0xff]
        %v501 = vld [vmem:[%s295 + $0x3c8] sm:$0xff]
        %v502 = vld [vmem:[%s295 + $0x3d0] sm:$0xff]
        %v503 = vld [vmem:[%s295 + $0x3d8] sm:$0xff]
        %v504 = vld [vmem:[%s295 + $0x3e0] sm:$0xff]
        %v505 = vld [vmem:[%s295 + $0x3e8] sm:$0xff]
        %v506 = vld [vmem:[%s295 + $0x3f0] sm:$0xff]
        %v507 = vld [vmem:[%s295 + $0x3f8] sm:$0xff]
        %v508 = vld [vmem:[%s359] ss:$8 sm:$0xf]
        %v510 = vperm.slane %v508, 0
        %v511 = vperm.slane %v508, 1
        %v512 = vperm.slane %v508, 2
        %v513 = vperm.slane %v508, 3
        %v646 = vunpack.c.l.b16 %v380
        %v647 = vunpack.c.h.b16 %v380
        %v648 = vunpack.c.l.b16 %v381
        %v649 = vunpack.c.h.b16 %v381
        %v650 = vunpack.c.l.b16 %v382
        %v651 = vunpack.c.h.b16 %v382
        %v652 = vunpack.c.l.b16 %v383
        %v653 = vunpack.c.h.b16 %v383
        %v654 = vunpack.c.l.b16 %v384
        %v655 = vunpack.c.h.b16 %v384
        %v656 = vunpack.c.l.b16 %v385
        %v657 = vunpack.c.h.b16 %v385
        %v658 = vunpack.c.l.b16 %v386
        %v659 = vunpack.c.h.b16 %v386
        %v660 = vunpack.c.l.b16 %v387
        %v661 = vunpack.c.h.b16 %v387
        %v662 = vunpack.c.l.b16 %v388
        %v663 = vunpack.c.h.b16 %v388
        %v664 = vunpack.c.l.b16 %v389
        %v665 = vunpack.c.h.b16 %v389
        %v666 = vunpack.c.l.b16 %v390
        %v667 = vunpack.c.h.b16 %v390
        %v668 = vunpack.c.l.b16 %v391
        %v669 = vunpack.c.h.b16 %v391
        %v670 = vunpack.c.l.b16 %v392
        %v671 = vunpack.c.h.b16 %v392
        %v672 = vunpack.c.l.b16 %v393
        %v673 = vunpack.c.h.b16 %v393
        %v674 = vunpack.c.l.b16 %v394
        %v675 = vunpack.c.h.b16 %v394
        %v676 = vunpack.c.l.b16 %v395
        %v677 = vunpack.c.h.b16 %v395
        %v678 = vunpack.c.l.b16 %v396
        %v679 = vunpack.c.h.b16 %v396
        %v680 = vunpack.c.l.b16 %v397
        %v681 = vunpack.c.h.b16 %v397
        %v682 = vunpack.c.l.b16 %v398
        %v683 = vunpack.c.h.b16 %v398
        %v684 = vunpack.c.l.b16 %v399
        %v685 = vunpack.c.h.b16 %v399
        %v686 = vunpack.c.l.b16 %v400
        %v687 = vunpack.c.h.b16 %v400
        %v688 = vunpack.c.l.b16 %v401
        %v689 = vunpack.c.h.b16 %v401
        %v690 = vunpack.c.l.b16 %v402
        %v691 = vunpack.c.h.b16 %v402
        %v692 = vunpack.c.l.b16 %v403
        %v693 = vunpack.c.h.b16 %v403
        %v694 = vunpack.c.l.b16 %v404
        %v695 = vunpack.c.h.b16 %v404
        %v696 = vunpack.c.l.b16 %v405
        %v697 = vunpack.c.h.b16 %v405
        %v698 = vunpack.c.l.b16 %v406
        %v699 = vunpack.c.h.b16 %v406
        %v700 = vunpack.c.l.b16 %v407
        %v701 = vunpack.c.h.b16 %v407
        %v702 = vunpack.c.l.b16 %v408
        %v703 = vunpack.c.h.b16 %v408
        %v704 = vunpack.c.l.b16 %v409
        %v705 = vunpack.c.h.b16 %v409
        %v706 = vunpack.c.l.b16 %v410
        %v707 = vunpack.c.h.b16 %v410
        %v708 = vunpack.c.l.b16 %v411
        %v709 = vunpack.c.h.b16 %v411
        %v710 = vunpack.c.l.b16 %v412
        %v711 = vunpack.c.h.b16 %v412
        %v712 = vunpack.c.l.b16 %v413
        %v713 = vunpack.c.h.b16 %v413
        %v714 = vunpack.c.l.b16 %v414
        %v715 = vunpack.c.h.b16 %v414
        %v716 = vunpack.c.l.b16 %v415
        %v717 = vunpack.c.h.b16 %v415
        %v718 = vunpack.c.l.b16 %v416
        %v719 = vunpack.c.h.b16 %v416
        %v720 = vunpack.c.l.b16 %v417
        %v721 = vunpack.c.h.b16 %v417
        %v722 = vunpack.c.l.b16 %v418
        %v723 = vunpack.c.h.b16 %v418
        %v724 = vunpack.c.l.b16 %v419
        %v725 = vunpack.c.h.b16 %v419
        %v726 = vunpack.c.l.b16 %v420
        %v727 = vunpack.c.h.b16 %v420
        %v728 = vunpack.c.l.b16 %v421
        %v729 = vunpack.c.h.b16 %v421
        %v730 = vunpack.c.l.b16 %v422
        %v731 = vunpack.c.h.b16 %v422
        %v732 = vunpack.c.l.b16 %v423
        %v733 = vunpack.c.h.b16 %v423
        %v734 = vunpack.c.l.b16 %v424
        %v735 = vunpack.c.h.b16 %v424
        %v736 = vunpack.c.l.b16 %v425
        %v737 = vunpack.c.h.b16 %v425
        %v738 = vunpack.c.l.b16 %v426
        %v739 = vunpack.c.h.b16 %v426
        %v740 = vunpack.c.l.b16 %v427
        %v741 = vunpack.c.h.b16 %v427
        %v742 = vunpack.c.l.b16 %v428
        %v743 = vunpack.c.h.b16 %v428
        %v744 = vunpack.c.l.b16 %v429
        %v745 = vunpack.c.h.b16 %v429
        %v746 = vunpack.c.l.b16 %v430
        %v747 = vunpack.c.h.b16 %v430
        %v748 = vunpack.c.l.b16 %v431
        %v749 = vunpack.c.h.b16 %v431
        %v750 = vunpack.c.l.b16 %v432
        %v751 = vunpack.c.h.b16 %v432
        %v752 = vunpack.c.l.b16 %v433
        %v753 = vunpack.c.h.b16 %v433
        %v754 = vunpack.c.l.b16 %v434
        %v755 = vunpack.c.h.b16 %v434
        %v756 = vunpack.c.l.b16 %v435
        %v757 = vunpack.c.h.b16 %v435
        %v758 = vunpack.c.l.b16 %v436
        %v759 = vunpack.c.h.b16 %v436
        %v760 = vunpack.c.l.b16 %v437
        %v761 = vunpack.c.h.b16 %v437
        %v762 = vunpack.c.l.b16 %v438
        %v763 = vunpack.c.h.b16 %v438
        %v764 = vunpack.c.l.b16 %v439
        %v765 = vunpack.c.h.b16 %v439
        %v766 = vunpack.c.l.b16 %v440
        %v767 = vunpack.c.h.b16 %v440
        %v768 = vunpack.c.l.b16 %v441
        %v769 = vunpack.c.h.b16 %v441
        %v770 = vunpack.c.l.b16 %v442
        %v771 = vunpack.c.h.b16 %v442
        %v772 = vunpack.c.l.b16 %v443
        %v773 = vunpack.c.h.b16 %v443
        %v774 = vunpack.c.l.b16 %v444
        %v775 = vunpack.c.h.b16 %v444
        %v776 = vunpack.c.l.b16 %v445
        %v777 = vunpack.c.h.b16 %v445
        %v778 = vunpack.c.l.b16 %v446
        %v779 = vunpack.c.h.b16 %v446
        %v780 = vunpack.c.l.b16 %v447
        %v781 = vunpack.c.h.b16 %v447
        %v782 = vunpack.c.l.b16 %v448
        %v783 = vunpack.c.h.b16 %v448
        %v784 = vunpack.c.l.b16 %v449
        %v785 = vunpack.c.h.b16 %v449
        %v786 = vunpack.c.l.b16 %v450
        %v787 = vunpack.c.h.b16 %v450
        %v788 = vunpack.c.l.b16 %v451
        %v789 = vunpack.c.h.b16 %v451
        %v790 = vunpack.c.l.b16 %v452
        %v791 = vunpack.c.h.b16 %v452
        %v792 = vunpack.c.l.b16 %v453
        %v793 = vunpack.c.h.b16 %v453
        %v794 = vunpack.c.l.b16 %v454
        %v795 = vunpack.c.h.b16 %v454
        %v796 = vunpack.c.l.b16 %v455
        %v797 = vunpack.c.h.b16 %v455
        %v798 = vunpack.c.l.b16 %v456
        %v799 = vunpack.c.h.b16 %v456
        %v800 = vunpack.c.l.b16 %v457
        %v801 = vunpack.c.h.b16 %v457
        %v802 = vunpack.c.l.b16 %v458
        %v803 = vunpack.c.h.b16 %v458
        %v804 = vunpack.c.l.b16 %v459
        %v805 = vunpack.c.h.b16 %v459
        %v806 = vunpack.c.l.b16 %v460
        %v807 = vunpack.c.h.b16 %v460
        %v808 = vunpack.c.l.b16 %v461
        %v809 = vunpack.c.h.b16 %v461
        %v810 = vunpack.c.l.b16 %v462
        %v811 = vunpack.c.h.b16 %v462
        %v812 = vunpack.c.l.b16 %v463
        %v813 = vunpack.c.h.b16 %v463
        %v814 = vunpack.c.l.b16 %v464
        %v815 = vunpack.c.h.b16 %v464
        %v816 = vunpack.c.l.b16 %v465
        %v817 = vunpack.c.h.b16 %v465
        %v818 = vunpack.c.l.b16 %v466
        %v819 = vunpack.c.h.b16 %v466
        %v820 = vunpack.c.l.b16 %v467
        %v821 = vunpack.c.h.b16 %v467
        %v822 = vunpack.c.l.b16 %v468
        %v823 = vunpack.c.h.b16 %v468
        %v824 = vunpack.c.l.b16 %v469
        %v825 = vunpack.c.h.b16 %v469
        %v826 = vunpack.c.l.b16 %v470
        %v827 = vunpack.c.h.b16 %v470
        %v828 = vunpack.c.l.b16 %v471
        %v829 = vunpack.c.h.b16 %v471
        %v830 = vunpack.c.l.b16 %v472
        %v831 = vunpack.c.h.b16 %v472
        %v832 = vunpack.c.l.b16 %v473
        %v833 = vunpack.c.h.b16 %v473
        %v834 = vunpack.c.l.b16 %v474
        %v835 = vunpack.c.h.b16 %v474
        %v836 = vunpack.c.l.b16 %v475
        %v837 = vunpack.c.h.b16 %v475
        %v838 = vunpack.c.l.b16 %v476
        %v839 = vunpack.c.h.b16 %v476
        %v840 = vunpack.c.l.b16 %v477
        %v841 = vunpack.c.h.b16 %v477
        %v842 = vunpack.c.l.b16 %v478
        %v843 = vunpack.c.h.b16 %v478
        %v844 = vunpack.c.l.b16 %v479
        %v845 = vunpack.c.h.b16 %v479
        %v846 = vunpack.c.l.b16 %v480
        %v847 = vunpack.c.h.b16 %v480
        %v848 = vunpack.c.l.b16 %v481
        %v849 = vunpack.c.h.b16 %v481
        %v850 = vunpack.c.l.b16 %v482
        %v851 = vunpack.c.h.b16 %v482
        %v852 = vunpack.c.l.b16 %v483
        %v853 = vunpack.c.h.b16 %v483
        %v854 = vunpack.c.l.b16 %v484
        %v855 = vunpack.c.h.b16 %v484
        %v856 = vunpack.c.l.b16 %v485
        %v857 = vunpack.c.h.b16 %v485
        %v858 = vunpack.c.l.b16 %v486
        %v859 = vunpack.c.h.b16 %v486
        %v860 = vunpack.c.l.b16 %v487
        %v861 = vunpack.c.h.b16 %v487
        %v862 = vunpack.c.l.b16 %v488
        %v863 = vunpack.c.h.b16 %v488
        %v864 = vunpack.c.l.b16 %v489
        %v865 = vunpack.c.h.b16 %v489
        %v866 = vunpack.c.l.b16 %v490
        %v867 = vunpack.c.h.b16 %v490
        %v868 = vunpack.c.l.b16 %v491
        %v869 = vunpack.c.h.b16 %v491
        %v870 = vunpack.c.l.b16 %v492
        %v871 = vunpack.c.h.b16 %v492
        %v872 = vunpack.c.l.b16 %v493
        %v873 = vunpack.c.h.b16 %v493
        %v874 = vunpack.c.l.b16 %v494
        %v875 = vunpack.c.h.b16 %v494
        %v876 = vunpack.c.l.b16 %v495
        %v877 = vunpack.c.h.b16 %v495
        %v878 = vunpack.c.l.b16 %v496
        %v879 = vunpack.c.h.b16 %v496
        %v880 = vunpack.c.l.b16 %v497
        %v881 = vunpack.c.h.b16 %v497
        %v882 = vunpack.c.l.b16 %v498
        %v883 = vunpack.c.h.b16 %v498
        %v884 = vunpack.c.l.b16 %v499
        %v885 = vunpack.c.h.b16 %v499
        %v886 = vunpack.c.l.b16 %v500
        %v887 = vunpack.c.h.b16 %v500
        %v888 = vunpack.c.l.b16 %v501
        %v889 = vunpack.c.h.b16 %v501
        %v890 = vunpack.c.l.b16 %v502
        %v891 = vunpack.c.h.b16 %v502
        %v892 = vunpack.c.l.b16 %v503
        %v893 = vunpack.c.h.b16 %v503
        %v894 = vunpack.c.l.b16 %v504
        %v895 = vunpack.c.h.b16 %v504
        %v896 = vunpack.c.l.b16 %v505
        %v897 = vunpack.c.h.b16 %v505
        %v898 = vunpack.c.l.b16 %v506
        %v899 = vunpack.c.h.b16 %v506
        %v900 = vunpack.c.l.b16 %v507
        %v901 = vunpack.c.h.b16 %v507
        %v902 = vpack.c.b16 %v650, %v646
        %v903 = vpack.c.b16 %v651, %v647
        %v904 = vpack.c.b16 %v652, %v648
        %v905 = vpack.c.b16 %v653, %v649
        %v906 = vpack.c.b16 %v658, %v654
        %v907 = vpack.c.b16 %v659, %v655
        %v908 = vpack.c.b16 %v660, %v656
        %v909 = vpack.c.b16 %v661, %v657
        %v910 = vpack.c.b16 %v666, %v662
        %v911 = vpack.c.b16 %v667, %v663
        %v912 = vpack.c.b16 %v668, %v664
        %v913 = vpack.c.b16 %v669, %v665
        %v914 = vpack.c.b16 %v674, %v670
        %v915 = vpack.c.b16 %v675, %v671
        %v916 = vpack.c.b16 %v676, %v672
        %v917 = vpack.c.b16 %v677, %v673
        %v918 = vpack.c.b16 %v682, %v678
        %v919 = vpack.c.b16 %v683, %v679
        %v920 = vpack.c.b16 %v684, %v680
        %v921 = vpack.c.b16 %v685, %v681
        %v922 = vpack.c.b16 %v690, %v686
        %v923 = vpack.c.b16 %v691, %v687
        %v924 = vpack.c.b16 %v692, %v688
        %v925 = vpack.c.b16 %v693, %v689
        %v926 = vpack.c.b16 %v698, %v694
        %v927 = vpack.c.b16 %v699, %v695
        %v928 = vpack.c.b16 %v700, %v696
        %v929 = vpack.c.b16 %v701, %v697
        %v930 = vpack.c.b16 %v706, %v702
        %v931 = vpack.c.b16 %v707, %v703
        %v932 = vpack.c.b16 %v708, %v704
        %v933 = vpack.c.b16 %v709, %v705
        %v934 = vpack.c.b16 %v714, %v710
        %v935 = vpack.c.b16 %v715, %v711
        %v936 = vpack.c.b16 %v716, %v712
        %v937 = vpack.c.b16 %v717, %v713
        %v938 = vpack.c.b16 %v722, %v718
        %v939 = vpack.c.b16 %v723, %v719
        %v940 = vpack.c.b16 %v724, %v720
        %v941 = vpack.c.b16 %v725, %v721
        %v942 = vpack.c.b16 %v730, %v726
        %v943 = vpack.c.b16 %v731, %v727
        %v944 = vpack.c.b16 %v732, %v728
        %v945 = vpack.c.b16 %v733, %v729
        %v946 = vpack.c.b16 %v738, %v734
        %v947 = vpack.c.b16 %v739, %v735
        %v948 = vpack.c.b16 %v740, %v736
        %v949 = vpack.c.b16 %v741, %v737
        %v950 = vpack.c.b16 %v746, %v742
        %v951 = vpack.c.b16 %v747, %v743
        %v952 = vpack.c.b16 %v748, %v744
        %v953 = vpack.c.b16 %v749, %v745
        %v954 = vpack.c.b16 %v754, %v750
        %v955 = vpack.c.b16 %v755, %v751
        %v956 = vpack.c.b16 %v756, %v752
        %v957 = vpack.c.b16 %v757, %v753
        %v958 = vpack.c.b16 %v762, %v758
        %v959 = vpack.c.b16 %v763, %v759
        %v960 = vpack.c.b16 %v764, %v760
        %v961 = vpack.c.b16 %v765, %v761
        %v962 = vpack.c.b16 %v770, %v766
        %v963 = vpack.c.b16 %v771, %v767
        %v964 = vpack.c.b16 %v772, %v768
        %v965 = vpack.c.b16 %v773, %v769
        %v966 = vpack.c.b16 %v778, %v774
        %v967 = vpack.c.b16 %v779, %v775
        %v968 = vpack.c.b16 %v780, %v776
        %v969 = vpack.c.b16 %v781, %v777
        %v970 = vpack.c.b16 %v786, %v782
        %v971 = vpack.c.b16 %v787, %v783
        %v972 = vpack.c.b16 %v788, %v784
        %v973 = vpack.c.b16 %v789, %v785
        %v974 = vpack.c.b16 %v794, %v790
        %v975 = vpack.c.b16 %v795, %v791
        %v976 = vpack.c.b16 %v796, %v792
        %v977 = vpack.c.b16 %v797, %v793
        %v978 = vpack.c.b16 %v802, %v798
        %v979 = vpack.c.b16 %v803, %v799
        %v980 = vpack.c.b16 %v804, %v800
        %v981 = vpack.c.b16 %v805, %v801
        %v982 = vpack.c.b16 %v810, %v806
        %v983 = vpack.c.b16 %v811, %v807
        %v984 = vpack.c.b16 %v812, %v808
        %v985 = vpack.c.b16 %v813, %v809
        %v986 = vpack.c.b16 %v818, %v814
        %v987 = vpack.c.b16 %v819, %v815
        %v988 = vpack.c.b16 %v820, %v816
        %v989 = vpack.c.b16 %v821, %v817
        %v990 = vpack.c.b16 %v826, %v822
        %v991 = vpack.c.b16 %v827, %v823
        %v992 = vpack.c.b16 %v828, %v824
        %v993 = vpack.c.b16 %v829, %v825
        %v994 = vpack.c.b16 %v834, %v830
        %v995 = vpack.c.b16 %v835, %v831
        %v996 = vpack.c.b16 %v836, %v832
        %v997 = vpack.c.b16 %v837, %v833
        %v998 = vpack.c.b16 %v842, %v838
        %v999 = vpack.c.b16 %v843, %v839
        %v1000 = vpack.c.b16 %v844, %v840
        %v1001 = vpack.c.b16 %v845, %v841
        %v1002 = vpack.c.b16 %v850, %v846
        %v1003 = vpack.c.b16 %v851, %v847
        %v1004 = vpack.c.b16 %v852, %v848
        %v1005 = vpack.c.b16 %v853, %v849
        %v1006 = vpack.c.b16 %v858, %v854
        %v1007 = vpack.c.b16 %v859, %v855
        %v1008 = vpack.c.b16 %v860, %v856
        %v1009 = vpack.c.b16 %v861, %v857
        %v1010 = vpack.c.b16 %v866, %v862
        %v1011 = vpack.c.b16 %v867, %v863
        %v1012 = vpack.c.b16 %v868, %v864
        %v1013 = vpack.c.b16 %v869, %v865
        %v1014 = vpack.c.b16 %v874, %v870
        %v1015 = vpack.c.b16 %v875, %v871
        %v1016 = vpack.c.b16 %v876, %v872
        %v1017 = vpack.c.b16 %v877, %v873
        %v1018 = vpack.c.b16 %v882, %v878
        %v1019 = vpack.c.b16 %v883, %v879
        %v1020 = vpack.c.b16 %v884, %v880
        %v1021 = vpack.c.b16 %v885, %v881
        %v1022 = vpack.c.b16 %v890, %v886
        %v1023 = vpack.c.b16 %v891, %v887
        %v1024 = vpack.c.b16 %v892, %v888
        %v1025 = vpack.c.b16 %v893, %v889
        %v1026 = vpack.c.b16 %v898, %v894
        %v1027 = vpack.c.b16 %v899, %v895
        %v1028 = vpack.c.b16 %v900, %v896
        %v1029 = vpack.c.b16 %v901, %v897
        %1158 = vmatpush.bf16.msra.mxu0 %v930
        %1159 = vmatpush.bf16.msra.mxu0 %v926
        %1160 = vmatpush.bf16.msra.mxu0 %v922
        %1161 = vmatpush.bf16.msra.mxu0 %v918
        %1162 = vmatpush.bf16.msra.mxu0 %v914
        %1163 = vmatpush.bf16.msra.mxu0 %v910
        %1164 = vmatpush.bf16.msra.mxu0 %v906
        %1165 = vmatpush.bf16.msra.mxu0 %v902
        %1166 = vmatmul.bf16.gmra.mxu0 %v376
        %v1167 = vpop.f32.mrf.mxu0
        %v1168 = vadd.f32 %v510, %v1167
        %v1169 = vpop.f32.mrf.mxu0
        %1170 = vdwg.mxu0
        %1171 = vmatpush.bf16.msra.mxu0 %v962
        %1172 = vmatpush.bf16.msra.mxu0 %v958
        %1173 = vmatpush.bf16.msra.mxu0 %v954
        %1174 = vmatpush.bf16.msra.mxu0 %v950
        %1175 = vmatpush.bf16.msra.mxu0 %v946
        %1176 = vmatpush.bf16.msra.mxu0 %v942
        %1177 = vmatpush.bf16.msra.mxu0 %v938
        %1178 = vmatpush.bf16.msra.mxu0 %v934
        %1179 = vmatmul.bf16.gmra.mxu0 %v377
        %v1180 = vpop.f32.mrf.mxu0
        %v1181 = vadd.f32 %v1168, %v1180
        %v1182 = vpop.f32.mrf.mxu0
        %1183 = vdwg.mxu0
        %1184 = vmatpush.bf16.msra.mxu0 %v994
        %1185 = vmatpush.bf16.msra.mxu0 %v990
        %1186 = vmatpush.bf16.msra.mxu0 %v986
        %1187 = vmatpush.bf16.msra.mxu0 %v982
        %1188 = vmatpush.bf16.msra.mxu0 %v978
        %1189 = vmatpush.bf16.msra.mxu0 %v974
        %1190 = vmatpush.bf16.msra.mxu0 %v970
        %1191 = vmatpush.bf16.msra.mxu0 %v966
        %1192 = vmatmul.bf16.gmra.mxu0 %v378
        %v1193 = vpop.f32.mrf.mxu0
        %v1194 = vadd.f32 %v1181, %v1193
        %v1195 = vpop.f32.mrf.mxu0
        %1196 = vdwg.mxu0
        %1197 = vmatpush.bf16.msra.mxu0 %v1026
        %1198 = vmatpush.bf16.msra.mxu0 %v1022
        %1199 = vmatpush.bf16.msra.mxu0 %v1018
        %1200 = vmatpush.bf16.msra.mxu0 %v1014
        %1201 = vmatpush.bf16.msra.mxu0 %v1010
        %1202 = vmatpush.bf16.msra.mxu0 %v1006
        %1203 = vmatpush.bf16.msra.mxu0 %v1002
        %1204 = vmatpush.bf16.msra.mxu0 %v998
        %1205 = vmatmul.bf16.gmra.mxu0 %v379
        %v1206 = vpop.f32.mrf.mxu0
        %v1207 = vadd.f32 %v1194, %v1206
        %v1208 = vpop.f32.mrf.mxu0
        %1209 = vdwg.mxu0
        %1210 = vmatpush.bf16.msra.mxu0 %v931
        %1211 = vmatpush.bf16.msra.mxu0 %v927
        %1212 = vmatpush.bf16.msra.mxu0 %v923
        %1213 = vmatpush.bf16.msra.mxu0 %v919
        %1214 = vmatpush.bf16.msra.mxu0 %v915
        %1215 = vmatpush.bf16.msra.mxu0 %v911
        %1216 = vmatpush.bf16.msra.mxu0 %v907
        %1217 = vmatpush.bf16.msra.mxu0 %v903
        %1218 = vmatmul.bf16.gmra.mxu0 %v376
        %v1219 = vpop.f32.mrf.mxu0
        %v1220 = vadd.f32 %v511, %v1219
        %v1221 = vpop.f32.mrf.mxu0
        %1222 = vdwg.mxu0
        %1223 = vmatpush.bf16.msra.mxu0 %v963
        %1224 = vmatpush.bf16.msra.mxu0 %v959
        %1225 = vmatpush.bf16.msra.mxu0 %v955
        %1226 = vmatpush.bf16.msra.mxu0 %v951
        %1227 = vmatpush.bf16.msra.mxu0 %v947
        %1228 = vmatpush.bf16.msra.mxu0 %v943
        %1229 = vmatpush.bf16.msra.mxu0 %v939
        %1230 = vmatpush.bf16.msra.mxu0 %v935
        %1231 = vmatmul.bf16.gmra.mxu0 %v377
        %v1232 = vpop.f32.mrf.mxu0
        %v1233 = vadd.f32 %v1220, %v1232
        %v1234 = vpop.f32.mrf.mxu0
        %1235 = vdwg.mxu0
        %1236 = vmatpush.bf16.msra.mxu0 %v995
        %1237 = vmatpush.bf16.msra.mxu0 %v991
        %1238 = vmatpush.bf16.msra.mxu0 %v987
        %1239 = vmatpush.bf16.msra.mxu0 %v983
        %1240 = vmatpush.bf16.msra.mxu0 %v979
        %1241 = vmatpush.bf16.msra.mxu0 %v975
        %1242 = vmatpush.bf16.msra.mxu0 %v971
        %1243 = vmatpush.bf16.msra.mxu0 %v967
        %1244 = vmatmul.bf16.gmra.mxu0 %v378
        %v1245 = vpop.f32.mrf.mxu0
        %v1246 = vadd.f32 %v1233, %v1245
        %v1247 = vpop.f32.mrf.mxu0
        %1248 = vdwg.mxu0
        %1249 = vmatpush.bf16.msra.mxu0 %v1027
        %1250 = vmatpush.bf16.msra.mxu0 %v1023
        %1251 = vmatpush.bf16.msra.mxu0 %v1019
        %1252 = vmatpush.bf16.msra.mxu0 %v1015
        %1253 = vmatpush.bf16.msra.mxu0 %v1011
        %1254 = vmatpush.bf16.msra.mxu0 %v1007
        %1255 = vmatpush.bf16.msra.mxu0 %v1003
        %1256 = vmatpush.bf16.msra.mxu0 %v999
        %1257 = vmatmul.bf16.gmra.mxu0 %v379
        %v1258 = vpop.f32.mrf.mxu0
        %v1259 = vadd.f32 %v1246, %v1258
        %v1260 = vpop.f32.mrf.mxu0
        %1261 = vdwg.mxu0
        %1262 = vmatpush.bf16.msra.mxu0 %v932
        %1263 = vmatpush.bf16.msra.mxu0 %v928
        %1264 = vmatpush.bf16.msra.mxu0 %v924
        %1265 = vmatpush.bf16.msra.mxu0 %v920
        %1266 = vmatpush.bf16.msra.mxu0 %v916
        %1267 = vmatpush.bf16.msra.mxu0 %v912
        %1268 = vmatpush.bf16.msra.mxu0 %v908
        %1269 = vmatpush.bf16.msra.mxu0 %v904
        %1270 = vmatmul.bf16.gmra.mxu0 %v376
        %v1271 = vpop.f32.mrf.mxu0
        %v1272 = vadd.f32 %v512, %v1271
        %v1273 = vpop.f32.mrf.mxu0
        %1274 = vdwg.mxu0
        %1275 = vmatpush.bf16.msra.mxu0 %v964
        %1276 = vmatpush.bf16.msra.mxu0 %v960
        %1277 = vmatpush.bf16.msra.mxu0 %v956
        %1278 = vmatpush.bf16.msra.mxu0 %v952
        %1279 = vmatpush.bf16.msra.mxu0 %v948
        %1280 = vmatpush.bf16.msra.mxu0 %v944
        %1281 = vmatpush.bf16.msra.mxu0 %v940
        %1282 = vmatpush.bf16.msra.mxu0 %v936
        %1283 = vmatmul.bf16.gmra.mxu0 %v377
        %v1284 = vpop.f32.mrf.mxu0
        %v1285 = vadd.f32 %v1272, %v1284
        %v1286 = vpop.f32.mrf.mxu0
        %1287 = vdwg.mxu0
        %1288 = vmatpush.bf16.msra.mxu0 %v996
        %1289 = vmatpush.bf16.msra.mxu0 %v992
        %1290 = vmatpush.bf16.msra.mxu0 %v988
        %1291 = vmatpush.bf16.msra.mxu0 %v984
        %1292 = vmatpush.bf16.msra.mxu0 %v980
        %1293 = vmatpush.bf16.msra.mxu0 %v976
        %1294 = vmatpush.bf16.msra.mxu0 %v972
        %1295 = vmatpush.bf16.msra.mxu0 %v968
        %1296 = vmatmul.bf16.gmra.mxu0 %v378
        %v1297 = vpop.f32.mrf.mxu0
        %v1298 = vadd.f32 %v1285, %v1297
        %v1299 = vpop.f32.mrf.mxu0
        %1300 = vdwg.mxu0
        %1301 = vmatpush.bf16.msra.mxu0 %v1028
        %1302 = vmatpush.bf16.msra.mxu0 %v1024
        %1303 = vmatpush.bf16.msra.mxu0 %v1020
        %1304 = vmatpush.bf16.msra.mxu0 %v1016
        %1305 = vmatpush.bf16.msra.mxu0 %v1012
        %1306 = vmatpush.bf16.msra.mxu0 %v1008
        %1307 = vmatpush.bf16.msra.mxu0 %v1004
        %1308 = vmatpush.bf16.msra.mxu0 %v1000
        %1309 = vmatmul.bf16.gmra.mxu0 %v379
        %v1310 = vpop.f32.mrf.mxu0
        %v1311 = vadd.f32 %v1298, %v1310
        %v1312 = vpop.f32.mrf.mxu0
        %1313 = vdwg.mxu0
        %1314 = vmatpush.bf16.msra.mxu0 %v933
        %1315 = vmatpush.bf16.msra.mxu0 %v929
        %1316 = vmatpush.bf16.msra.mxu0 %v925
        %1317 = vmatpush.bf16.msra.mxu0 %v921
        %1318 = vmatpush.bf16.msra.mxu0 %v917
        %1319 = vmatpush.bf16.msra.mxu0 %v913
        %1320 = vmatpush.bf16.msra.mxu0 %v909
        %1321 = vmatpush.bf16.msra.mxu0 %v905
        %1322 = vmatmul.bf16.gmra.mxu0 %v376
        %v1323 = vpop.f32.mrf.mxu0
        %v1324 = vadd.f32 %v513, %v1323
        %v1325 = vpop.f32.mrf.mxu0
        %1326 = vdwg.mxu0
        %1327 = vmatpush.bf16.msra.mxu0 %v965
        %1328 = vmatpush.bf16.msra.mxu0 %v961
        %1329 = vmatpush.bf16.msra.mxu0 %v957
        %1330 = vmatpush.bf16.msra.mxu0 %v953
        %1331 = vmatpush.bf16.msra.mxu0 %v949
        %1332 = vmatpush.bf16.msra.mxu0 %v945
        %1333 = vmatpush.bf16.msra.mxu0 %v941
        %1334 = vmatpush.bf16.msra.mxu0 %v937
        %1335 = vmatmul.bf16.gmra.mxu0 %v377
        %v1336 = vpop.f32.mrf.mxu0
        %v1337 = vadd.f32 %v1324, %v1336
        %v1338 = vpop.f32.mrf.mxu0
        %1339 = vdwg.mxu0
        %1340 = vmatpush.bf16.msra.mxu0 %v997
        %1341 = vmatpush.bf16.msra.mxu0 %v993
        %1342 = vmatpush.bf16.msra.mxu0 %v989
        %1343 = vmatpush.bf16.msra.mxu0 %v985
        %1344 = vmatpush.bf16.msra.mxu0 %v981
        %1345 = vmatpush.bf16.msra.mxu0 %v977
        %1346 = vmatpush.bf16.msra.mxu0 %v973
        %1347 = vmatpush.bf16.msra.mxu0 %v969
        %1348 = vmatmul.bf16.gmra.mxu0 %v378
        %v1349 = vpop.f32.mrf.mxu0
        %v1350 = vadd.f32 %v1337, %v1349
        %v1351 = vpop.f32.mrf.mxu0
        %1352 = vdwg.mxu0
        %1353 = vmatpush.bf16.msra.mxu0 %v1029
        %1354 = vmatpush.bf16.msra.mxu0 %v1025
        %1355 = vmatpush.bf16.msra.mxu0 %v1021
        %1356 = vmatpush.bf16.msra.mxu0 %v1017
        %1357 = vmatpush.bf16.msra.mxu0 %v1013
        %1358 = vmatpush.bf16.msra.mxu0 %v1009
        %1359 = vmatpush.bf16.msra.mxu0 %v1005
        %1360 = vmatpush.bf16.msra.mxu0 %v1001
        %1361 = vmatmul.bf16.gmra.mxu0 %v379
        %v1362 = vpop.f32.mrf.mxu0
        %v1363 = vadd.f32 %v1350, %v1362
        %v1364 = vpop.f32.mrf.mxu0
        %1365 = vdwg.mxu0
        %v1366 = vlaneseq
        %v1367 = vshrl.u32 %v1366, 7
        %vm1368 = vcmask 1043456
        %v1369 = vsel %vm1368, %v1207, 0.0
        %v1370 = vsel %vm1368, %v1259, 0.0
        %v1371 = vadd.f32 %v1369, %v1370
        %v1372 = vsel %vm1368, %v1311, 0.0
        %v1373 = vadd.f32 %v1371, %v1372
        %v1374 = vsel %vm1368, %v1363, 0.0
        %v1375 = vadd.f32 %v1373, %v1374
        %1376 = vadd.xlane.f32.xlu0 %v1375
        %v1377 = vpop.xlane.xlu0 %1376
        %v1378 = vrot.slane %v1377, 4
        %v1379 = vadd.f32 %v1377, %v1378
        %v1380 = vrot.slane %v1379, 2
        %v1381 = vadd.f32 %v1379, %v1380
        %v1382 = vrot.slane %v1381, 1
        %v1383 = vadd.f32 %v1381, %v1382
        %s1384 = vtos %v1383
        %v1385 = vstv %s1384
        %v1386 = vrcp.pop 2048.0
        %v1387 = vmul.f32 2048.0, %v1386
        %v1388 = vsub.f32 1.0, %v1387
        %v1389 = vmul.f32 %v1386, %v1388
        %v1390 = vadd.f32 %v1386, %v1389
        %vm1391 = vweird.f32 %v1386
        %v1392 = vsel %vm1391, %v1386, %v1390
        %v1393 = vmul.f32 %v1385, %v1392
        %v1394 = vsub.f32 %v1207, %v1393
        %v1395 = vsub.f32 %v1259, %v1393
        %v1396 = vsub.f32 %v1311, %v1393
        %v1397 = vsub.f32 %v1363, %v1393
        %v1398 = vmul.f32 %v1394, %v1394
        %v1399 = vmul.f32 %v1395, %v1395
        %v1400 = vmul.f32 %v1396, %v1396
        %v1401 = vmul.f32 %v1397, %v1397
        %v1402 = vsel %vm1368, %v1398, 0.0
        %v1403 = vsel %vm1368, %v1399, 0.0
        %v1404 = vadd.f32 %v1402, %v1403
        %v1405 = vsel %vm1368, %v1400, 0.0
        %v1406 = vadd.f32 %v1404, %v1405
        %v1407 = vsel %vm1368, %v1401, 0.0
        %v1408 = vadd.f32 %v1406, %v1407
        %1409 = vadd.xlane.f32.xlu0 %v1408
        %v1410 = vpop.xlane.xlu0 %1409
        %v1411 = vrot.slane %v1410, 4
        %v1412 = vadd.f32 %v1410, %v1411
        %v1413 = vrot.slane %v1412, 2
        %v1414 = vadd.f32 %v1412, %v1413
        %v1415 = vrot.slane %v1414, 1
        %v1416 = vadd.f32 %v1414, %v1415
        %s1417 = vtos %v1416
        %v1418 = vstv %s1417
        %v1419 = vmul.f32 %v1418, %v1392
        %vm1420 = vcmp.ge.s32.totalorder %v1367, 0
        %vm1421 = vcmp.lt.s32.totalorder %v1367, 4
        %vm1422 = vmand %vm1420, %vm1421
        %v1423 = vsel %vm1422, %v1393, 0.0
        %v1424 = vadd.f32 %v1419, 1e-05
        %v1425 = vrsqrt.pop %v1424
        %v1426 = vmul.f32 %v1425, %v1424
        %v1427 = vmul.f32 %v1426, %v1425
        %v1428 = vmul.f32 0.5, %v1427
        %v1429 = vsub.f32 1.5, %v1428
        %v1430 = vmul.f32 %v1425, %v1429
        %vm1431 = vweird.f32 %v1424
        %vm1432 = vweird.f32 %v1425
        %vm1433 = vmor %vm1431, %vm1432
        %v1434 = vsel %vm1433, %v1425, %v1430
        %v1435 = vsel %vm1422, %v1434, 0.0
        %v1440 = vrot.slane %v1207, 4
        %v1441 = vrot.slane %v1259, 4
        %v1442 = vrot.slane %v1311, 4
        %v1443 = vrot.slane %v1363, 4
        %v1448 = vsel %vm1368, %v1440, 0.0
        %v1449 = vsel %vm1368, %v1441, 0.0
        %v1450 = vadd.f32 %v1448, %v1449
        %v1451 = vsel %vm1368, %v1442, 0.0
        %v1452 = vadd.f32 %v1450, %v1451
        %v1453 = vsel %vm1368, %v1443, 0.0
        %v1454 = vadd.f32 %v1452, %v1453
        %1455 = vadd.xlane.f32.xlu0 %v1454
        %v1456 = vpop.xlane.xlu0 %1455
        %v1457 = vrot.slane %v1456, 4
        %v1458 = vadd.f32 %v1456, %v1457
        %v1459 = vrot.slane %v1458, 2
        %v1460 = vadd.f32 %v1458, %v1459
        %v1461 = vrot.slane %v1460, 1
        %v1462 = vadd.f32 %v1460, %v1461
        %s1463 = vtos %v1462
        %v1464 = vstv %s1463
        %v1465 = vmul.f32 %v1464, %v1392
        %v1466 = vsub.f32 %v1207, %v1465
        %v1467 = vsub.f32 %v1259, %v1465
        %v1468 = vsub.f32 %v1311, %v1465
        %v1469 = vsub.f32 %v1363, %v1465
        %v1470 = vmul.f32 %v1466, %v1466
        %v1471 = vmul.f32 %v1467, %v1467
        %v1472 = vmul.f32 %v1468, %v1468
        %v1473 = vmul.f32 %v1469, %v1469
        %v1478 = vrot.slane %v1470, 4
        %v1479 = vrot.slane %v1471, 4
        %v1480 = vrot.slane %v1472, 4
        %v1481 = vrot.slane %v1473, 4
        %v1486 = vsel %vm1368, %v1478, 0.0
        %v1487 = vsel %vm1368, %v1479, 0.0
        %v1488 = vadd.f32 %v1486, %v1487
        %v1489 = vsel %vm1368, %v1480, 0.0
        %v1490 = vadd.f32 %v1488, %v1489
        %v1491 = vsel %vm1368, %v1481, 0.0
        %v1492 = vadd.f32 %v1490, %v1491
        %1493 = vadd.xlane.f32.xlu0 %v1492
        %v1494 = vpop.xlane.xlu0 %1493
        %v1495 = vrot.slane %v1494, 4
        %v1496 = vadd.f32 %v1494, %v1495
        %v1497 = vrot.slane %v1496, 2
        %v1498 = vadd.f32 %v1496, %v1497
        %v1499 = vrot.slane %v1498, 1
        %v1500 = vadd.f32 %v1498, %v1499
        %s1501 = vtos %v1500
        %v1502 = vstv %s1501
        %v1503 = vmul.f32 %v1502, %v1392
        %vm1504 = vcmp.ge.s32.totalorder %v1367, 4
        %vm1505 = vcmp.lt.s32.totalorder %v1367, 8
        %vm1506 = vmand %vm1504, %vm1505
        %v1507 = vsel %vm1506, %v1465, %v1423
        %v1508 = vadd.f32 %v1503, 1e-05
        %v1509 = vrsqrt.pop %v1508
        %v1510 = vmul.f32 %v1509, %v1508
        %v1511 = vmul.f32 %v1510, %v1509
        %v1512 = vmul.f32 0.5, %v1511
        %v1513 = vsub.f32 1.5, %v1512
        %v1514 = vmul.f32 %v1509, %v1513
        %vm1515 = vweird.f32 %v1508
        %vm1516 = vweird.f32 %v1509
        %vm1517 = vmor %vm1515, %vm1516
        %v1518 = vsel %vm1517, %v1509, %v1514
        %v1519 = vsel %vm1506, %v1518, %v1435
        %v1520 = vsub.f32 %v1207, %v1507
        %v1521 = vsub.f32 %v1259, %v1507
        %v1522 = vsub.f32 %v1311, %v1507
        %v1523 = vsub.f32 %v1363, %v1507
        %v1524 = vmul.f32 %v1520, %v1519
        %v1525 = vmul.f32 %v1521, %v1519
        %v1526 = vmul.f32 %v1522, %v1519
        %v1527 = vmul.f32 %v1523, %v1519
        %v1528 = vld [vmem:[%s1] sm:$0xff]
        %v1529 = vld [vmem:[%s1 + $0x8] sm:$0xff]
        %v1530 = vld [vmem:[%s305] sm:$0xff]
        %v1531 = vld [vmem:[%s305 + $0x8] sm:$0xff]
        %v1532 = vld [vmem:[%s305 + $0x10] sm:$0xff]
        %v1533 = vld [vmem:[%s305 + $0x18] sm:$0xff]
        %v1534 = vld [vmem:[%s305 + $0x20] sm:$0xff]
        %v1535 = vld [vmem:[%s305 + $0x28] sm:$0xff]
        %v1536 = vld [vmem:[%s305 + $0x30] sm:$0xff]
        %v1537 = vld [vmem:[%s305 + $0x38] sm:$0xff]
        %v1538 = vld [vmem:[%s305 + $0x40] sm:$0xff]
        %v1539 = vld [vmem:[%s305 + $0x48] sm:$0xff]
        %v1540 = vld [vmem:[%s305 + $0x50] sm:$0xff]
        %v1541 = vld [vmem:[%s305 + $0x58] sm:$0xff]
        %v1542 = vld [vmem:[%s305 + $0x60] sm:$0xff]
        %v1543 = vld [vmem:[%s305 + $0x68] sm:$0xff]
        %v1544 = vld [vmem:[%s305 + $0x70] sm:$0xff]
        %v1545 = vld [vmem:[%s305 + $0x78] sm:$0xff]
        %v1546 = vld [vmem:[%s305 + $0x80] sm:$0xff]
        %v1547 = vld [vmem:[%s305 + $0x88] sm:$0xff]
        %v1548 = vld [vmem:[%s305 + $0x90] sm:$0xff]
        %v1549 = vld [vmem:[%s305 + $0x98] sm:$0xff]
        %v1550 = vld [vmem:[%s305 + $0xa0] sm:$0xff]
        %v1551 = vld [vmem:[%s305 + $0xa8] sm:$0xff]
        %v1552 = vld [vmem:[%s305 + $0xb0] sm:$0xff]
        %v1553 = vld [vmem:[%s305 + $0xb8] sm:$0xff]
        %v1554 = vld [vmem:[%s305 + $0xc0] sm:$0xff]
        %v1555 = vld [vmem:[%s305 + $0xc8] sm:$0xff]
        %v1556 = vld [vmem:[%s305 + $0xd0] sm:$0xff]
        %v1557 = vld [vmem:[%s305 + $0xd8] sm:$0xff]
        %v1558 = vld [vmem:[%s305 + $0xe0] sm:$0xff]
        %v1559 = vld [vmem:[%s305 + $0xe8] sm:$0xff]
        %v1560 = vld [vmem:[%s305 + $0xf0] sm:$0xff]
        %v1561 = vld [vmem:[%s305 + $0xf8] sm:$0xff]
        %v1562 = vld [vmem:[%s305 + $0x100] sm:$0xff]
        %v1563 = vld [vmem:[%s305 + $0x108] sm:$0xff]
        %v1564 = vld [vmem:[%s305 + $0x110] sm:$0xff]
        %v1565 = vld [vmem:[%s305 + $0x118] sm:$0xff]
        %v1566 = vld [vmem:[%s305 + $0x120] sm:$0xff]
        %v1567 = vld [vmem:[%s305 + $0x128] sm:$0xff]
        %v1568 = vld [vmem:[%s305 + $0x130] sm:$0xff]
        %v1569 = vld [vmem:[%s305 + $0x138] sm:$0xff]
        %v1570 = vld [vmem:[%s305 + $0x140] sm:$0xff]
        %v1571 = vld [vmem:[%s305 + $0x148] sm:$0xff]
        %v1572 = vld [vmem:[%s305 + $0x150] sm:$0xff]
        %v1573 = vld [vmem:[%s305 + $0x158] sm:$0xff]
        %v1574 = vld [vmem:[%s305 + $0x160] sm:$0xff]
        %v1575 = vld [vmem:[%s305 + $0x168] sm:$0xff]
        %v1576 = vld [vmem:[%s305 + $0x170] sm:$0xff]
        %v1577 = vld [vmem:[%s305 + $0x178] sm:$0xff]
        %v1578 = vld [vmem:[%s305 + $0x180] sm:$0xff]
        %v1579 = vld [vmem:[%s305 + $0x188] sm:$0xff]
        %v1580 = vld [vmem:[%s305 + $0x190] sm:$0xff]
        %v1581 = vld [vmem:[%s305 + $0x198] sm:$0xff]
        %v1582 = vld [vmem:[%s305 + $0x1a0] sm:$0xff]
        %v1583 = vld [vmem:[%s305 + $0x1a8] sm:$0xff]
        %v1584 = vld [vmem:[%s305 + $0x1b0] sm:$0xff]
        %v1585 = vld [vmem:[%s305 + $0x1b8] sm:$0xff]
        %v1586 = vld [vmem:[%s305 + $0x1c0] sm:$0xff]
        %v1587 = vld [vmem:[%s305 + $0x1c8] sm:$0xff]
        %v1588 = vld [vmem:[%s305 + $0x1d0] sm:$0xff]
        %v1589 = vld [vmem:[%s305 + $0x1d8] sm:$0xff]
        %v1590 = vld [vmem:[%s305 + $0x1e0] sm:$0xff]
        %v1591 = vld [vmem:[%s305 + $0x1e8] sm:$0xff]
        %v1592 = vld [vmem:[%s305 + $0x1f0] sm:$0xff]
        %v1593 = vld [vmem:[%s305 + $0x1f8] sm:$0xff]
        %v1594 = vld [vmem:[%s305 + $0x200] sm:$0xff]
        %v1595 = vld [vmem:[%s305 + $0x208] sm:$0xff]
        %v1596 = vld [vmem:[%s305 + $0x210] sm:$0xff]
        %v1597 = vld [vmem:[%s305 + $0x218] sm:$0xff]
        %v1598 = vld [vmem:[%s305 + $0x220] sm:$0xff]
        %v1599 = vld [vmem:[%s305 + $0x228] sm:$0xff]
        %v1600 = vld [vmem:[%s305 + $0x230] sm:$0xff]
        %v1601 = vld [vmem:[%s305 + $0x238] sm:$0xff]
        %v1602 = vld [vmem:[%s305 + $0x240] sm:$0xff]
        %v1603 = vld [vmem:[%s305 + $0x248] sm:$0xff]
        %v1604 = vld [vmem:[%s305 + $0x250] sm:$0xff]
        %v1605 = vld [vmem:[%s305 + $0x258] sm:$0xff]
        %v1606 = vld [vmem:[%s305 + $0x260] sm:$0xff]
        %v1607 = vld [vmem:[%s305 + $0x268] sm:$0xff]
        %v1608 = vld [vmem:[%s305 + $0x270] sm:$0xff]
        %v1609 = vld [vmem:[%s305 + $0x278] sm:$0xff]
        %v1610 = vld [vmem:[%s305 + $0x280] sm:$0xff]
        %v1611 = vld [vmem:[%s305 + $0x288] sm:$0xff]
        %v1612 = vld [vmem:[%s305 + $0x290] sm:$0xff]
        %v1613 = vld [vmem:[%s305 + $0x298] sm:$0xff]
        %v1614 = vld [vmem:[%s305 + $0x2a0] sm:$0xff]
        %v1615 = vld [vmem:[%s305 + $0x2a8] sm:$0xff]
        %v1616 = vld [vmem:[%s305 + $0x2b0] sm:$0xff]
        %v1617 = vld [vmem:[%s305 + $0x2b8] sm:$0xff]
        %v1618 = vld [vmem:[%s305 + $0x2c0] sm:$0xff]
        %v1619 = vld [vmem:[%s305 + $0x2c8] sm:$0xff]
        %v1620 = vld [vmem:[%s305 + $0x2d0] sm:$0xff]
        %v1621 = vld [vmem:[%s305 + $0x2d8] sm:$0xff]
        %v1622 = vld [vmem:[%s305 + $0x2e0] sm:$0xff]
        %v1623 = vld [vmem:[%s305 + $0x2e8] sm:$0xff]
        %v1624 = vld [vmem:[%s305 + $0x2f0] sm:$0xff]
        %v1625 = vld [vmem:[%s305 + $0x2f8] sm:$0xff]
        %v1626 = vld [vmem:[%s305 + $0x300] sm:$0xff]
        %v1627 = vld [vmem:[%s305 + $0x308] sm:$0xff]
        %v1628 = vld [vmem:[%s305 + $0x310] sm:$0xff]
        %v1629 = vld [vmem:[%s305 + $0x318] sm:$0xff]
        %v1630 = vld [vmem:[%s305 + $0x320] sm:$0xff]
        %v1631 = vld [vmem:[%s305 + $0x328] sm:$0xff]
        %v1632 = vld [vmem:[%s305 + $0x330] sm:$0xff]
        %v1633 = vld [vmem:[%s305 + $0x338] sm:$0xff]
        %v1634 = vld [vmem:[%s305 + $0x340] sm:$0xff]
        %v1635 = vld [vmem:[%s305 + $0x348] sm:$0xff]
        %v1636 = vld [vmem:[%s305 + $0x350] sm:$0xff]
        %v1637 = vld [vmem:[%s305 + $0x358] sm:$0xff]
        %v1638 = vld [vmem:[%s305 + $0x360] sm:$0xff]
        %v1639 = vld [vmem:[%s305 + $0x368] sm:$0xff]
        %v1640 = vld [vmem:[%s305 + $0x370] sm:$0xff]
        %v1641 = vld [vmem:[%s305 + $0x378] sm:$0xff]
        %v1642 = vld [vmem:[%s305 + $0x380] sm:$0xff]
        %v1643 = vld [vmem:[%s305 + $0x388] sm:$0xff]
        %v1644 = vld [vmem:[%s305 + $0x390] sm:$0xff]
        %v1645 = vld [vmem:[%s305 + $0x398] sm:$0xff]
        %v1646 = vld [vmem:[%s305 + $0x3a0] sm:$0xff]
        %v1647 = vld [vmem:[%s305 + $0x3a8] sm:$0xff]
        %v1648 = vld [vmem:[%s305 + $0x3b0] sm:$0xff]
        %v1649 = vld [vmem:[%s305 + $0x3b8] sm:$0xff]
        %v1650 = vld [vmem:[%s305 + $0x3c0] sm:$0xff]
        %v1651 = vld [vmem:[%s305 + $0x3c8] sm:$0xff]
        %v1652 = vld [vmem:[%s305 + $0x3d0] sm:$0xff]
        %v1653 = vld [vmem:[%s305 + $0x3d8] sm:$0xff]
        %v1654 = vld [vmem:[%s305 + $0x3e0] sm:$0xff]
        %v1655 = vld [vmem:[%s305 + $0x3e8] sm:$0xff]
        %v1656 = vld [vmem:[%s305 + $0x3f0] sm:$0xff]
        %v1657 = vld [vmem:[%s305 + $0x3f8] sm:$0xff]
        %v1658 = vld [vmem:[%s305 + $0x400] sm:$0xff]
        %v1659 = vld [vmem:[%s305 + $0x408] sm:$0xff]
        %v1660 = vld [vmem:[%s305 + $0x410] sm:$0xff]
        %v1661 = vld [vmem:[%s305 + $0x418] sm:$0xff]
        %v1662 = vld [vmem:[%s305 + $0x420] sm:$0xff]
        %v1663 = vld [vmem:[%s305 + $0x428] sm:$0xff]
        %v1664 = vld [vmem:[%s305 + $0x430] sm:$0xff]
        %v1665 = vld [vmem:[%s305 + $0x438] sm:$0xff]
        %v1666 = vld [vmem:[%s305 + $0x440] sm:$0xff]
        %v1667 = vld [vmem:[%s305 + $0x448] sm:$0xff]
        %v1668 = vld [vmem:[%s305 + $0x450] sm:$0xff]
        %v1669 = vld [vmem:[%s305 + $0x458] sm:$0xff]
        %v1670 = vld [vmem:[%s305 + $0x460] sm:$0xff]
        %v1671 = vld [vmem:[%s305 + $0x468] sm:$0xff]
        %v1672 = vld [vmem:[%s305 + $0x470] sm:$0xff]
        %v1673 = vld [vmem:[%s305 + $0x478] sm:$0xff]
        %v1674 = vld [vmem:[%s305 + $0x480] sm:$0xff]
        %v1675 = vld [vmem:[%s305 + $0x488] sm:$0xff]
        %v1676 = vld [vmem:[%s305 + $0x490] sm:$0xff]
        %v1677 = vld [vmem:[%s305 + $0x498] sm:$0xff]
        %v1678 = vld [vmem:[%s305 + $0x4a0] sm:$0xff]
        %v1679 = vld [vmem:[%s305 + $0x4a8] sm:$0xff]
        %v1680 = vld [vmem:[%s305 + $0x4b0] sm:$0xff]
        %v1681 = vld [vmem:[%s305 + $0x4b8] sm:$0xff]
        %v1682 = vld [vmem:[%s305 + $0x4c0] sm:$0xff]
        %v1683 = vld [vmem:[%s305 + $0x4c8] sm:$0xff]
        %v1684 = vld [vmem:[%s305 + $0x4d0] sm:$0xff]
        %v1685 = vld [vmem:[%s305 + $0x4d8] sm:$0xff]
        %v1686 = vld [vmem:[%s305 + $0x4e0] sm:$0xff]
        %v1687 = vld [vmem:[%s305 + $0x4e8] sm:$0xff]
        %v1688 = vld [vmem:[%s305 + $0x4f0] sm:$0xff]
        %v1689 = vld [vmem:[%s305 + $0x4f8] sm:$0xff]
        %v1690 = vld [vmem:[%s305 + $0x500] sm:$0xff]
        %v1691 = vld [vmem:[%s305 + $0x508] sm:$0xff]
        %v1692 = vld [vmem:[%s305 + $0x510] sm:$0xff]
        %v1693 = vld [vmem:[%s305 + $0x518] sm:$0xff]
        %v1694 = vld [vmem:[%s305 + $0x520] sm:$0xff]
        %v1695 = vld [vmem:[%s305 + $0x528] sm:$0xff]
        %v1696 = vld [vmem:[%s305 + $0x530] sm:$0xff]
        %v1697 = vld [vmem:[%s305 + $0x538] sm:$0xff]
        %v1698 = vld [vmem:[%s305 + $0x540] sm:$0xff]
        %v1699 = vld [vmem:[%s305 + $0x548] sm:$0xff]
        %v1700 = vld [vmem:[%s305 + $0x550] sm:$0xff]
        %v1701 = vld [vmem:[%s305 + $0x558] sm:$0xff]
        %v1702 = vld [vmem:[%s305 + $0x560] sm:$0xff]
        %v1703 = vld [vmem:[%s305 + $0x568] sm:$0xff]
        %v1704 = vld [vmem:[%s305 + $0x570] sm:$0xff]
        %v1705 = vld [vmem:[%s305 + $0x578] sm:$0xff]
        %v1706 = vld [vmem:[%s305 + $0x580] sm:$0xff]
        %v1707 = vld [vmem:[%s305 + $0x588] sm:$0xff]
        %v1708 = vld [vmem:[%s305 + $0x590] sm:$0xff]
        %v1709 = vld [vmem:[%s305 + $0x598] sm:$0xff]
        %v1710 = vld [vmem:[%s305 + $0x5a0] sm:$0xff]
        %v1711 = vld [vmem:[%s305 + $0x5a8] sm:$0xff]
        %v1712 = vld [vmem:[%s305 + $0x5b0] sm:$0xff]
        %v1713 = vld [vmem:[%s305 + $0x5b8] sm:$0xff]
        %v1714 = vld [vmem:[%s305 + $0x5c0] sm:$0xff]
        %v1715 = vld [vmem:[%s305 + $0x5c8] sm:$0xff]
        %v1716 = vld [vmem:[%s305 + $0x5d0] sm:$0xff]
        %v1717 = vld [vmem:[%s305 + $0x5d8] sm:$0xff]
        %v1718 = vld [vmem:[%s305 + $0x5e0] sm:$0xff]
        %v1719 = vld [vmem:[%s305 + $0x5e8] sm:$0xff]
        %v1720 = vld [vmem:[%s305 + $0x5f0] sm:$0xff]
        %v1721 = vld [vmem:[%s305 + $0x5f8] sm:$0xff]
        %v1722 = vld [vmem:[%s305 + $0x600] sm:$0xff]
        %v1723 = vld [vmem:[%s305 + $0x608] sm:$0xff]
        %v1724 = vld [vmem:[%s305 + $0x610] sm:$0xff]
        %v1725 = vld [vmem:[%s305 + $0x618] sm:$0xff]
        %v1726 = vld [vmem:[%s305 + $0x620] sm:$0xff]
        %v1727 = vld [vmem:[%s305 + $0x628] sm:$0xff]
        %v1728 = vld [vmem:[%s305 + $0x630] sm:$0xff]
        %v1729 = vld [vmem:[%s305 + $0x638] sm:$0xff]
        %v1730 = vld [vmem:[%s305 + $0x640] sm:$0xff]
        %v1731 = vld [vmem:[%s305 + $0x648] sm:$0xff]
        %v1732 = vld [vmem:[%s305 + $0x650] sm:$0xff]
        %v1733 = vld [vmem:[%s305 + $0x658] sm:$0xff]
        %v1734 = vld [vmem:[%s305 + $0x660] sm:$0xff]
        %v1735 = vld [vmem:[%s305 + $0x668] sm:$0xff]
        %v1736 = vld [vmem:[%s305 + $0x670] sm:$0xff]
        %v1737 = vld [vmem:[%s305 + $0x678] sm:$0xff]
        %v1738 = vld [vmem:[%s305 + $0x680] sm:$0xff]
        %v1739 = vld [vmem:[%s305 + $0x688] sm:$0xff]
        %v1740 = vld [vmem:[%s305 + $0x690] sm:$0xff]
        %v1741 = vld [vmem:[%s305 + $0x698] sm:$0xff]
        %v1742 = vld [vmem:[%s305 + $0x6a0] sm:$0xff]
        %v1743 = vld [vmem:[%s305 + $0x6a8] sm:$0xff]
        %v1744 = vld [vmem:[%s305 + $0x6b0] sm:$0xff]
        %v1745 = vld [vmem:[%s305 + $0x6b8] sm:$0xff]
        %v1746 = vld [vmem:[%s305 + $0x6c0] sm:$0xff]
        %v1747 = vld [vmem:[%s305 + $0x6c8] sm:$0xff]
        %v1748 = vld [vmem:[%s305 + $0x6d0] sm:$0xff]
        %v1749 = vld [vmem:[%s305 + $0x6d8] sm:$0xff]
        %v1750 = vld [vmem:[%s305 + $0x6e0] sm:$0xff]
        %v1751 = vld [vmem:[%s305 + $0x6e8] sm:$0xff]
        %v1752 = vld [vmem:[%s305 + $0x6f0] sm:$0xff]
        %v1753 = vld [vmem:[%s305 + $0x6f8] sm:$0xff]
        %v1754 = vld [vmem:[%s305 + $0x700] sm:$0xff]
        %v1755 = vld [vmem:[%s305 + $0x708] sm:$0xff]
        %v1756 = vld [vmem:[%s305 + $0x710] sm:$0xff]
        %v1757 = vld [vmem:[%s305 + $0x718] sm:$0xff]
        %v1758 = vld [vmem:[%s305 + $0x720] sm:$0xff]
        %v1759 = vld [vmem:[%s305 + $0x728] sm:$0xff]
        %v1760 = vld [vmem:[%s305 + $0x730] sm:$0xff]
        %v1761 = vld [vmem:[%s305 + $0x738] sm:$0xff]
        %v1762 = vld [vmem:[%s305 + $0x740] sm:$0xff]
        %v1763 = vld [vmem:[%s305 + $0x748] sm:$0xff]
        %v1764 = vld [vmem:[%s305 + $0x750] sm:$0xff]
        %v1765 = vld [vmem:[%s305 + $0x758] sm:$0xff]
        %v1766 = vld [vmem:[%s305 + $0x760] sm:$0xff]
        %v1767 = vld [vmem:[%s305 + $0x768] sm:$0xff]
        %v1768 = vld [vmem:[%s305 + $0x770] sm:$0xff]
        %v1769 = vld [vmem:[%s305 + $0x778] sm:$0xff]
        %v1770 = vld [vmem:[%s305 + $0x780] sm:$0xff]
        %v1771 = vld [vmem:[%s305 + $0x788] sm:$0xff]
        %v1772 = vld [vmem:[%s305 + $0x790] sm:$0xff]
        %v1773 = vld [vmem:[%s305 + $0x798] sm:$0xff]
        %v1774 = vld [vmem:[%s305 + $0x7a0] sm:$0xff]
        %v1775 = vld [vmem:[%s305 + $0x7a8] sm:$0xff]
        %v1776 = vld [vmem:[%s305 + $0x7b0] sm:$0xff]
        %v1777 = vld [vmem:[%s305 + $0x7b8] sm:$0xff]
        %v1778 = vld [vmem:[%s305 + $0x7c0] sm:$0xff]
        %v1779 = vld [vmem:[%s305 + $0x7c8] sm:$0xff]
        %v1780 = vld [vmem:[%s305 + $0x7d0] sm:$0xff]
        %v1781 = vld [vmem:[%s305 + $0x7d8] sm:$0xff]
        %v1782 = vld [vmem:[%s305 + $0x7e0] sm:$0xff]
        %v1783 = vld [vmem:[%s305 + $0x7e8] sm:$0xff]
        %v1784 = vld [vmem:[%s305 + $0x7f0] sm:$0xff]
        %v1785 = vld [vmem:[%s305 + $0x7f8] sm:$0xff]
        %v1788 = vunpack.c.l.b16 %v1528
        %v1789 = vunpack.c.h.b16 %v1528
        %v1790 = vunpack.c.l.b16 %v1529
        %v1791 = vunpack.c.h.b16 %v1529
        %v1792 = vpack.c.b16 %v1788, %v1788
        %v1793 = vpack.c.b16 %v1789, %v1789
        %v1794 = vpack.c.b16 %v1790, %v1790
        %v1795 = vpack.c.b16 %v1791, %v1791
        %v2056 = vunpack.c.l.b16 %v1530
        %v2057 = vunpack.c.h.b16 %v1530
        %v2058 = vunpack.c.l.b16 %v1531
        %v2059 = vunpack.c.h.b16 %v1531
        %v2060 = vunpack.c.l.b16 %v1532
        %v2061 = vunpack.c.h.b16 %v1532
        %v2062 = vunpack.c.l.b16 %v1533
        %v2063 = vunpack.c.h.b16 %v1533
        %v2064 = vunpack.c.l.b16 %v1534
        %v2065 = vunpack.c.h.b16 %v1534
        %v2066 = vunpack.c.l.b16 %v1535
        %v2067 = vunpack.c.h.b16 %v1535
        %v2068 = vunpack.c.l.b16 %v1536
        %v2069 = vunpack.c.h.b16 %v1536
        %v2070 = vunpack.c.l.b16 %v1537
        %v2071 = vunpack.c.h.b16 %v1537
        %v2072 = vunpack.c.l.b16 %v1538
        %v2073 = vunpack.c.h.b16 %v1538
        %v2074 = vunpack.c.l.b16 %v1539
        %v2075 = vunpack.c.h.b16 %v1539
        %v2076 = vunpack.c.l.b16 %v1540
        %v2077 = vunpack.c.h.b16 %v1540
        %v2078 = vunpack.c.l.b16 %v1541
        %v2079 = vunpack.c.h.b16 %v1541
        %v2080 = vunpack.c.l.b16 %v1542
        %v2081 = vunpack.c.h.b16 %v1542
        %v2082 = vunpack.c.l.b16 %v1543
        %v2083 = vunpack.c.h.b16 %v1543
        %v2084 = vunpack.c.l.b16 %v1544
        %v2085 = vunpack.c.h.b16 %v1544
        %v2086 = vunpack.c.l.b16 %v1545
        %v2087 = vunpack.c.h.b16 %v1545
        %v2088 = vunpack.c.l.b16 %v1546
        %v2089 = vunpack.c.h.b16 %v1546
        %v2090 = vunpack.c.l.b16 %v1547
        %v2091 = vunpack.c.h.b16 %v1547
        %v2092 = vunpack.c.l.b16 %v1548
        %v2093 = vunpack.c.h.b16 %v1548
        %v2094 = vunpack.c.l.b16 %v1549
        %v2095 = vunpack.c.h.b16 %v1549
        %v2096 = vunpack.c.l.b16 %v1550
        %v2097 = vunpack.c.h.b16 %v1550
        %v2098 = vunpack.c.l.b16 %v1551
        %v2099 = vunpack.c.h.b16 %v1551
        %v2100 = vunpack.c.l.b16 %v1552
        %v2101 = vunpack.c.h.b16 %v1552
        %v2102 = vunpack.c.l.b16 %v1553
        %v2103 = vunpack.c.h.b16 %v1553
        %v2104 = vunpack.c.l.b16 %v1554
        %v2105 = vunpack.c.h.b16 %v1554
        %v2106 = vunpack.c.l.b16 %v1555
        %v2107 = vunpack.c.h.b16 %v1555
        %v2108 = vunpack.c.l.b16 %v1556
        %v2109 = vunpack.c.h.b16 %v1556
        %v2110 = vunpack.c.l.b16 %v1557
        %v2111 = vunpack.c.h.b16 %v1557
        %v2112 = vunpack.c.l.b16 %v1558
        %v2113 = vunpack.c.h.b16 %v1558
        %v2114 = vunpack.c.l.b16 %v1559
        %v2115 = vunpack.c.h.b16 %v1559
        %v2116 = vunpack.c.l.b16 %v1560
        %v2117 = vunpack.c.h.b16 %v1560
        %v2118 = vunpack.c.l.b16 %v1561
        %v2119 = vunpack.c.h.b16 %v1561
        %v2120 = vunpack.c.l.b16 %v1562
        %v2121 = vunpack.c.h.b16 %v1562
        %v2122 = vunpack.c.l.b16 %v1563
        %v2123 = vunpack.c.h.b16 %v1563
        %v2124 = vunpack.c.l.b16 %v1564
        %v2125 = vunpack.c.h.b16 %v1564
        %v2126 = vunpack.c.l.b16 %v1565
        %v2127 = vunpack.c.h.b16 %v1565
        %v2128 = vunpack.c.l.b16 %v1566
        %v2129 = vunpack.c.h.b16 %v1566
        %v2130 = vunpack.c.l.b16 %v1567
        %v2131 = vunpack.c.h.b16 %v1567
        %v2132 = vunpack.c.l.b16 %v1568
        %v2133 = vunpack.c.h.b16 %v1568
        %v2134 = vunpack.c.l.b16 %v1569
        %v2135 = vunpack.c.h.b16 %v1569
        %v2136 = vunpack.c.l.b16 %v1570
        %v2137 = vunpack.c.h.b16 %v1570
        %v2138 = vunpack.c.l.b16 %v1571
        %v2139 = vunpack.c.h.b16 %v1571
        %v2140 = vunpack.c.l.b16 %v1572
        %v2141 = vunpack.c.h.b16 %v1572
        %v2142 = vunpack.c.l.b16 %v1573
        %v2143 = vunpack.c.h.b16 %v1573
        %v2144 = vunpack.c.l.b16 %v1574
        %v2145 = vunpack.c.h.b16 %v1574
        %v2146 = vunpack.c.l.b16 %v1575
        %v2147 = vunpack.c.h.b16 %v1575
        %v2148 = vunpack.c.l.b16 %v1576
        %v2149 = vunpack.c.h.b16 %v1576
        %v2150 = vunpack.c.l.b16 %v1577
        %v2151 = vunpack.c.h.b16 %v1577
        %v2152 = vunpack.c.l.b16 %v1578
        %v2153 = vunpack.c.h.b16 %v1578
        %v2154 = vunpack.c.l.b16 %v1579
        %v2155 = vunpack.c.h.b16 %v1579
        %v2156 = vunpack.c.l.b16 %v1580
        %v2157 = vunpack.c.h.b16 %v1580
        %v2158 = vunpack.c.l.b16 %v1581
        %v2159 = vunpack.c.h.b16 %v1581
        %v2160 = vunpack.c.l.b16 %v1582
        %v2161 = vunpack.c.h.b16 %v1582
        %v2162 = vunpack.c.l.b16 %v1583
        %v2163 = vunpack.c.h.b16 %v1583
        %v2164 = vunpack.c.l.b16 %v1584
        %v2165 = vunpack.c.h.b16 %v1584
        %v2166 = vunpack.c.l.b16 %v1585
        %v2167 = vunpack.c.h.b16 %v1585
        %v2168 = vunpack.c.l.b16 %v1586
        %v2169 = vunpack.c.h.b16 %v1586
        %v2170 = vunpack.c.l.b16 %v1587
        %v2171 = vunpack.c.h.b16 %v1587
        %v2172 = vunpack.c.l.b16 %v1588
        %v2173 = vunpack.c.h.b16 %v1588
        %v2174 = vunpack.c.l.b16 %v1589
        %v2175 = vunpack.c.h.b16 %v1589
        %v2176 = vunpack.c.l.b16 %v1590
        %v2177 = vunpack.c.h.b16 %v1590
        %v2178 = vunpack.c.l.b16 %v1591
        %v2179 = vunpack.c.h.b16 %v1591
        %v2180 = vunpack.c.l.b16 %v1592
        %v2181 = vunpack.c.h.b16 %v1592
        %v2182 = vunpack.c.l.b16 %v1593
        %v2183 = vunpack.c.h.b16 %v1593
        %v2184 = vunpack.c.l.b16 %v1594
        %v2185 = vunpack.c.h.b16 %v1594
        %v2186 = vunpack.c.l.b16 %v1595
        %v2187 = vunpack.c.h.b16 %v1595
        %v2188 = vunpack.c.l.b16 %v1596
        %v2189 = vunpack.c.h.b16 %v1596
        %v2190 = vunpack.c.l.b16 %v1597
        %v2191 = vunpack.c.h.b16 %v1597
        %v2192 = vunpack.c.l.b16 %v1598
        %v2193 = vunpack.c.h.b16 %v1598
        %v2194 = vunpack.c.l.b16 %v1599
        %v2195 = vunpack.c.h.b16 %v1599
        %v2196 = vunpack.c.l.b16 %v1600
        %v2197 = vunpack.c.h.b16 %v1600
        %v2198 = vunpack.c.l.b16 %v1601
        %v2199 = vunpack.c.h.b16 %v1601
        %v2200 = vunpack.c.l.b16 %v1602
        %v2201 = vunpack.c.h.b16 %v1602
        %v2202 = vunpack.c.l.b16 %v1603
        %v2203 = vunpack.c.h.b16 %v1603
        %v2204 = vunpack.c.l.b16 %v1604
        %v2205 = vunpack.c.h.b16 %v1604
        %v2206 = vunpack.c.l.b16 %v1605
        %v2207 = vunpack.c.h.b16 %v1605
        %v2208 = vunpack.c.l.b16 %v1606
        %v2209 = vunpack.c.h.b16 %v1606
        %v2210 = vunpack.c.l.b16 %v1607
        %v2211 = vunpack.c.h.b16 %v1607
        %v2212 = vunpack.c.l.b16 %v1608
        %v2213 = vunpack.c.h.b16 %v1608
        %v2214 = vunpack.c.l.b16 %v1609
        %v2215 = vunpack.c.h.b16 %v1609
        %v2216 = vunpack.c.l.b16 %v1610
        %v2217 = vunpack.c.h.b16 %v1610
        %v2218 = vunpack.c.l.b16 %v1611
        %v2219 = vunpack.c.h.b16 %v1611
        %v2220 = vunpack.c.l.b16 %v1612
        %v2221 = vunpack.c.h.b16 %v1612
        %v2222 = vunpack.c.l.b16 %v1613
        %v2223 = vunpack.c.h.b16 %v1613
        %v2224 = vunpack.c.l.b16 %v1614
        %v2225 = vunpack.c.h.b16 %v1614
        %v2226 = vunpack.c.l.b16 %v1615
        %v2227 = vunpack.c.h.b16 %v1615
        %v2228 = vunpack.c.l.b16 %v1616
        %v2229 = vunpack.c.h.b16 %v1616
        %v2230 = vunpack.c.l.b16 %v1617
        %v2231 = vunpack.c.h.b16 %v1617
        %v2232 = vunpack.c.l.b16 %v1618
        %v2233 = vunpack.c.h.b16 %v1618
        %v2234 = vunpack.c.l.b16 %v1619
        %v2235 = vunpack.c.h.b16 %v1619
        %v2236 = vunpack.c.l.b16 %v1620
        %v2237 = vunpack.c.h.b16 %v1620
        %v2238 = vunpack.c.l.b16 %v1621
        %v2239 = vunpack.c.h.b16 %v1621
        %v2240 = vunpack.c.l.b16 %v1622
        %v2241 = vunpack.c.h.b16 %v1622
        %v2242 = vunpack.c.l.b16 %v1623
        %v2243 = vunpack.c.h.b16 %v1623
        %v2244 = vunpack.c.l.b16 %v1624
        %v2245 = vunpack.c.h.b16 %v1624
        %v2246 = vunpack.c.l.b16 %v1625
        %v2247 = vunpack.c.h.b16 %v1625
        %v2248 = vunpack.c.l.b16 %v1626
        %v2249 = vunpack.c.h.b16 %v1626
        %v2250 = vunpack.c.l.b16 %v1627
        %v2251 = vunpack.c.h.b16 %v1627
        %v2252 = vunpack.c.l.b16 %v1628
        %v2253 = vunpack.c.h.b16 %v1628
        %v2254 = vunpack.c.l.b16 %v1629
        %v2255 = vunpack.c.h.b16 %v1629
        %v2256 = vunpack.c.l.b16 %v1630
        %v2257 = vunpack.c.h.b16 %v1630
        %v2258 = vunpack.c.l.b16 %v1631
        %v2259 = vunpack.c.h.b16 %v1631
        %v2260 = vunpack.c.l.b16 %v1632
        %v2261 = vunpack.c.h.b16 %v1632
        %v2262 = vunpack.c.l.b16 %v1633
        %v2263 = vunpack.c.h.b16 %v1633
        %v2264 = vunpack.c.l.b16 %v1634
        %v2265 = vunpack.c.h.b16 %v1634
        %v2266 = vunpack.c.l.b16 %v1635
        %v2267 = vunpack.c.h.b16 %v1635
        %v2268 = vunpack.c.l.b16 %v1636
        %v2269 = vunpack.c.h.b16 %v1636
        %v2270 = vunpack.c.l.b16 %v1637
        %v2271 = vunpack.c.h.b16 %v1637
        %v2272 = vunpack.c.l.b16 %v1638
        %v2273 = vunpack.c.h.b16 %v1638
        %v2274 = vunpack.c.l.b16 %v1639
        %v2275 = vunpack.c.h.b16 %v1639
        %v2276 = vunpack.c.l.b16 %v1640
        %v2277 = vunpack.c.h.b16 %v1640
        %v2278 = vunpack.c.l.b16 %v1641
        %v2279 = vunpack.c.h.b16 %v1641
        %v2280 = vunpack.c.l.b16 %v1642
        %v2281 = vunpack.c.h.b16 %v1642
        %v2282 = vunpack.c.l.b16 %v1643
        %v2283 = vunpack.c.h.b16 %v1643
        %v2284 = vunpack.c.l.b16 %v1644
        %v2285 = vunpack.c.h.b16 %v1644
        %v2286 = vunpack.c.l.b16 %v1645
        %v2287 = vunpack.c.h.b16 %v1645
        %v2288 = vunpack.c.l.b16 %v1646
        %v2289 = vunpack.c.h.b16 %v1646
        %v2290 = vunpack.c.l.b16 %v1647
        %v2291 = vunpack.c.h.b16 %v1647
        %v2292 = vunpack.c.l.b16 %v1648
        %v2293 = vunpack.c.h.b16 %v1648
        %v2294 = vunpack.c.l.b16 %v1649
        %v2295 = vunpack.c.h.b16 %v1649
        %v2296 = vunpack.c.l.b16 %v1650
        %v2297 = vunpack.c.h.b16 %v1650
        %v2298 = vunpack.c.l.b16 %v1651
        %v2299 = vunpack.c.h.b16 %v1651
        %v2300 = vunpack.c.l.b16 %v1652
        %v2301 = vunpack.c.h.b16 %v1652
        %v2302 = vunpack.c.l.b16 %v1653
        %v2303 = vunpack.c.h.b16 %v1653
        %v2304 = vunpack.c.l.b16 %v1654
        %v2305 = vunpack.c.h.b16 %v1654
        %v2306 = vunpack.c.l.b16 %v1655
        %v2307 = vunpack.c.h.b16 %v1655
        %v2308 = vunpack.c.l.b16 %v1656
        %v2309 = vunpack.c.h.b16 %v1656
        %v2310 = vunpack.c.l.b16 %v1657
        %v2311 = vunpack.c.h.b16 %v1657
        %v2312 = vunpack.c.l.b16 %v1658
        %v2313 = vunpack.c.h.b16 %v1658
        %v2314 = vunpack.c.l.b16 %v1659
        %v2315 = vunpack.c.h.b16 %v1659
        %v2316 = vunpack.c.l.b16 %v1660
        %v2317 = vunpack.c.h.b16 %v1660
        %v2318 = vunpack.c.l.b16 %v1661
        %v2319 = vunpack.c.h.b16 %v1661
        %v2320 = vunpack.c.l.b16 %v1662
        %v2321 = vunpack.c.h.b16 %v1662
        %v2322 = vunpack.c.l.b16 %v1663
        %v2323 = vunpack.c.h.b16 %v1663
        %v2324 = vunpack.c.l.b16 %v1664
        %v2325 = vunpack.c.h.b16 %v1664
        %v2326 = vunpack.c.l.b16 %v1665
        %v2327 = vunpack.c.h.b16 %v1665
        %v2328 = vunpack.c.l.b16 %v1666
        %v2329 = vunpack.c.h.b16 %v1666
        %v2330 = vunpack.c.l.b16 %v1667
        %v2331 = vunpack.c.h.b16 %v1667
        %v2332 = vunpack.c.l.b16 %v1668
        %v2333 = vunpack.c.h.b16 %v1668
        %v2334 = vunpack.c.l.b16 %v1669
        %v2335 = vunpack.c.h.b16 %v1669
        %v2336 = vunpack.c.l.b16 %v1670
        %v2337 = vunpack.c.h.b16 %v1670
        %v2338 = vunpack.c.l.b16 %v1671
        %v2339 = vunpack.c.h.b16 %v1671
        %v2340 = vunpack.c.l.b16 %v1672
        %v2341 = vunpack.c.h.b16 %v1672
        %v2342 = vunpack.c.l.b16 %v1673
        %v2343 = vunpack.c.h.b16 %v1673
        %v2344 = vunpack.c.l.b16 %v1674
        %v2345 = vunpack.c.h.b16 %v1674
        %v2346 = vunpack.c.l.b16 %v1675
        %v2347 = vunpack.c.h.b16 %v1675
        %v2348 = vunpack.c.l.b16 %v1676
        %v2349 = vunpack.c.h.b16 %v1676
        %v2350 = vunpack.c.l.b16 %v1677
        %v2351 = vunpack.c.h.b16 %v1677
        %v2352 = vunpack.c.l.b16 %v1678
        %v2353 = vunpack.c.h.b16 %v1678
        %v2354 = vunpack.c.l.b16 %v1679
        %v2355 = vunpack.c.h.b16 %v1679
        %v2356 = vunpack.c.l.b16 %v1680
        %v2357 = vunpack.c.h.b16 %v1680
        %v2358 = vunpack.c.l.b16 %v1681
        %v2359 = vunpack.c.h.b16 %v1681
        %v2360 = vunpack.c.l.b16 %v1682
        %v2361 = vunpack.c.h.b16 %v1682
        %v2362 = vunpack.c.l.b16 %v1683
        %v2363 = vunpack.c.h.b16 %v1683
        %v2364 = vunpack.c.l.b16 %v1684
        %v2365 = vunpack.c.h.b16 %v1684
        %v2366 = vunpack.c.l.b16 %v1685
        %v2367 = vunpack.c.h.b16 %v1685
        %v2368 = vunpack.c.l.b16 %v1686
        %v2369 = vunpack.c.h.b16 %v1686
        %v2370 = vunpack.c.l.b16 %v1687
        %v2371 = vunpack.c.h.b16 %v1687
        %v2372 = vunpack.c.l.b16 %v1688
        %v2373 = vunpack.c.h.b16 %v1688
        %v2374 = vunpack.c.l.b16 %v1689
        %v2375 = vunpack.c.h.b16 %v1689
        %v2376 = vunpack.c.l.b16 %v1690
        %v2377 = vunpack.c.h.b16 %v1690
        %v2378 = vunpack.c.l.b16 %v1691
        %v2379 = vunpack.c.h.b16 %v1691
        %v2380 = vunpack.c.l.b16 %v1692
        %v2381 = vunpack.c.h.b16 %v1692
        %v2382 = vunpack.c.l.b16 %v1693
        %v2383 = vunpack.c.h.b16 %v1693
        %v2384 = vunpack.c.l.b16 %v1694
        %v2385 = vunpack.c.h.b16 %v1694
        %v2386 = vunpack.c.l.b16 %v1695
        %v2387 = vunpack.c.h.b16 %v1695
        %v2388 = vunpack.c.l.b16 %v1696
        %v2389 = vunpack.c.h.b16 %v1696
        %v2390 = vunpack.c.l.b16 %v1697
        %v2391 = vunpack.c.h.b16 %v1697
        %v2392 = vunpack.c.l.b16 %v1698
        %v2393 = vunpack.c.h.b16 %v1698
        %v2394 = vunpack.c.l.b16 %v1699
        %v2395 = vunpack.c.h.b16 %v1699
        %v2396 = vunpack.c.l.b16 %v1700
        %v2397 = vunpack.c.h.b16 %v1700
        %v2398 = vunpack.c.l.b16 %v1701
        %v2399 = vunpack.c.h.b16 %v1701
        %v2400 = vunpack.c.l.b16 %v1702
        %v2401 = vunpack.c.h.b16 %v1702
        %v2402 = vunpack.c.l.b16 %v1703
        %v2403 = vunpack.c.h.b16 %v1703
        %v2404 = vunpack.c.l.b16 %v1704
        %v2405 = vunpack.c.h.b16 %v1704
        %v2406 = vunpack.c.l.b16 %v1705
        %v2407 = vunpack.c.h.b16 %v1705
        %v2408 = vunpack.c.l.b16 %v1706
        %v2409 = vunpack.c.h.b16 %v1706
        %v2410 = vunpack.c.l.b16 %v1707
        %v2411 = vunpack.c.h.b16 %v1707
        %v2412 = vunpack.c.l.b16 %v1708
        %v2413 = vunpack.c.h.b16 %v1708
        %v2414 = vunpack.c.l.b16 %v1709
        %v2415 = vunpack.c.h.b16 %v1709
        %v2416 = vunpack.c.l.b16 %v1710
        %v2417 = vunpack.c.h.b16 %v1710
        %v2418 = vunpack.c.l.b16 %v1711
        %v2419 = vunpack.c.h.b16 %v1711
        %v2420 = vunpack.c.l.b16 %v1712
        %v2421 = vunpack.c.h.b16 %v1712
        %v2422 = vunpack.c.l.b16 %v1713
        %v2423 = vunpack.c.h.b16 %v1713
        %v2424 = vunpack.c.l.b16 %v1714
        %v2425 = vunpack.c.h.b16 %v1714
        %v2426 = vunpack.c.l.b16 %v1715
        %v2427 = vunpack.c.h.b16 %v1715
        %v2428 = vunpack.c.l.b16 %v1716
        %v2429 = vunpack.c.h.b16 %v1716
        %v2430 = vunpack.c.l.b16 %v1717
        %v2431 = vunpack.c.h.b16 %v1717
        %v2432 = vunpack.c.l.b16 %v1718
        %v2433 = vunpack.c.h.b16 %v1718
        %v2434 = vunpack.c.l.b16 %v1719
        %v2435 = vunpack.c.h.b16 %v1719
        %v2436 = vunpack.c.l.b16 %v1720
        %v2437 = vunpack.c.h.b16 %v1720
        %v2438 = vunpack.c.l.b16 %v1721
        %v2439 = vunpack.c.h.b16 %v1721
        %v2440 = vunpack.c.l.b16 %v1722
        %v2441 = vunpack.c.h.b16 %v1722
        %v2442 = vunpack.c.l.b16 %v1723
        %v2443 = vunpack.c.h.b16 %v1723
        %v2444 = vunpack.c.l.b16 %v1724
        %v2445 = vunpack.c.h.b16 %v1724
        %v2446 = vunpack.c.l.b16 %v1725
        %v2447 = vunpack.c.h.b16 %v1725
        %v2448 = vunpack.c.l.b16 %v1726
        %v2449 = vunpack.c.h.b16 %v1726
        %v2450 = vunpack.c.l.b16 %v1727
        %v2451 = vunpack.c.h.b16 %v1727
        %v2452 = vunpack.c.l.b16 %v1728
        %v2453 = vunpack.c.h.b16 %v1728
        %v2454 = vunpack.c.l.b16 %v1729
        %v2455 = vunpack.c.h.b16 %v1729
        %v2456 = vunpack.c.l.b16 %v1730
        %v2457 = vunpack.c.h.b16 %v1730
        %v2458 = vunpack.c.l.b16 %v1731
        %v2459 = vunpack.c.h.b16 %v1731
        %v2460 = vunpack.c.l.b16 %v1732
        %v2461 = vunpack.c.h.b16 %v1732
        %v2462 = vunpack.c.l.b16 %v1733
        %v2463 = vunpack.c.h.b16 %v1733
        %v2464 = vunpack.c.l.b16 %v1734
        %v2465 = vunpack.c.h.b16 %v1734
        %v2466 = vunpack.c.l.b16 %v1735
        %v2467 = vunpack.c.h.b16 %v1735
        %v2468 = vunpack.c.l.b16 %v1736
        %v2469 = vunpack.c.h.b16 %v1736
        %v2470 = vunpack.c.l.b16 %v1737
        %v2471 = vunpack.c.h.b16 %v1737
        %v2472 = vunpack.c.l.b16 %v1738
        %v2473 = vunpack.c.h.b16 %v1738
        %v2474 = vunpack.c.l.b16 %v1739
        %v2475 = vunpack.c.h.b16 %v1739
        %v2476 = vunpack.c.l.b16 %v1740
        %v2477 = vunpack.c.h.b16 %v1740
        %v2478 = vunpack.c.l.b16 %v1741
        %v2479 = vunpack.c.h.b16 %v1741
        %v2480 = vunpack.c.l.b16 %v1742
        %v2481 = vunpack.c.h.b16 %v1742
        %v2482 = vunpack.c.l.b16 %v1743
        %v2483 = vunpack.c.h.b16 %v1743
        %v2484 = vunpack.c.l.b16 %v1744
        %v2485 = vunpack.c.h.b16 %v1744
        %v2486 = vunpack.c.l.b16 %v1745
        %v2487 = vunpack.c.h.b16 %v1745
        %v2488 = vunpack.c.l.b16 %v1746
        %v2489 = vunpack.c.h.b16 %v1746
        %v2490 = vunpack.c.l.b16 %v1747
        %v2491 = vunpack.c.h.b16 %v1747
        %v2492 = vunpack.c.l.b16 %v1748
        %v2493 = vunpack.c.h.b16 %v1748
        %v2494 = vunpack.c.l.b16 %v1749
        %v2495 = vunpack.c.h.b16 %v1749
        %v2496 = vunpack.c.l.b16 %v1750
        %v2497 = vunpack.c.h.b16 %v1750
        %v2498 = vunpack.c.l.b16 %v1751
        %v2499 = vunpack.c.h.b16 %v1751
        %v2500 = vunpack.c.l.b16 %v1752
        %v2501 = vunpack.c.h.b16 %v1752
        %v2502 = vunpack.c.l.b16 %v1753
        %v2503 = vunpack.c.h.b16 %v1753
        %v2504 = vunpack.c.l.b16 %v1754
        %v2505 = vunpack.c.h.b16 %v1754
        %v2506 = vunpack.c.l.b16 %v1755
        %v2507 = vunpack.c.h.b16 %v1755
        %v2508 = vunpack.c.l.b16 %v1756
        %v2509 = vunpack.c.h.b16 %v1756
        %v2510 = vunpack.c.l.b16 %v1757
        %v2511 = vunpack.c.h.b16 %v1757
        %v2512 = vunpack.c.l.b16 %v1758
        %v2513 = vunpack.c.h.b16 %v1758
        %v2514 = vunpack.c.l.b16 %v1759
        %v2515 = vunpack.c.h.b16 %v1759
        %v2516 = vunpack.c.l.b16 %v1760
        %v2517 = vunpack.c.h.b16 %v1760
        %v2518 = vunpack.c.l.b16 %v1761
        %v2519 = vunpack.c.h.b16 %v1761
        %v2520 = vunpack.c.l.b16 %v1762
        %v2521 = vunpack.c.h.b16 %v1762
        %v2522 = vunpack.c.l.b16 %v1763
        %v2523 = vunpack.c.h.b16 %v1763
        %v2524 = vunpack.c.l.b16 %v1764
        %v2525 = vunpack.c.h.b16 %v1764
        %v2526 = vunpack.c.l.b16 %v1765
        %v2527 = vunpack.c.h.b16 %v1765
        %v2528 = vunpack.c.l.b16 %v1766
        %v2529 = vunpack.c.h.b16 %v1766
        %v2530 = vunpack.c.l.b16 %v1767
        %v2531 = vunpack.c.h.b16 %v1767
        %v2532 = vunpack.c.l.b16 %v1768
        %v2533 = vunpack.c.h.b16 %v1768
        %v2534 = vunpack.c.l.b16 %v1769
        %v2535 = vunpack.c.h.b16 %v1769
        %v2536 = vunpack.c.l.b16 %v1770
        %v2537 = vunpack.c.h.b16 %v1770
        %v2538 = vunpack.c.l.b16 %v1771
        %v2539 = vunpack.c.h.b16 %v1771
        %v2540 = vunpack.c.l.b16 %v1772
        %v2541 = vunpack.c.h.b16 %v1772
        %v2542 = vunpack.c.l.b16 %v1773
        %v2543 = vunpack.c.h.b16 %v1773
        %v2544 = vunpack.c.l.b16 %v1774
        %v2545 = vunpack.c.h.b16 %v1774
        %v2546 = vunpack.c.l.b16 %v1775
        %v2547 = vunpack.c.h.b16 %v1775
        %v2548 = vunpack.c.l.b16 %v1776
        %v2549 = vunpack.c.h.b16 %v1776
        %v2550 = vunpack.c.l.b16 %v1777
        %v2551 = vunpack.c.h.b16 %v1777
        %v2552 = vunpack.c.l.b16 %v1778
        %v2553 = vunpack.c.h.b16 %v1778
        %v2554 = vunpack.c.l.b16 %v1779
        %v2555 = vunpack.c.h.b16 %v1779
        %v2556 = vunpack.c.l.b16 %v1780
        %v2557 = vunpack.c.h.b16 %v1780
        %v2558 = vunpack.c.l.b16 %v1781
        %v2559 = vunpack.c.h.b16 %v1781
        %v2560 = vunpack.c.l.b16 %v1782
        %v2561 = vunpack.c.h.b16 %v1782
        %v2562 = vunpack.c.l.b16 %v1783
        %v2563 = vunpack.c.h.b16 %v1783
        %v2564 = vunpack.c.l.b16 %v1784
        %v2565 = vunpack.c.h.b16 %v1784
        %v2566 = vunpack.c.l.b16 %v1785
        %v2567 = vunpack.c.h.b16 %v1785
        %v2568 = vpack.c.b16 %v2064, %v2056
        %v2569 = vpack.c.b16 %v2065, %v2057
        %v2570 = vpack.c.b16 %v2066, %v2058
        %v2571 = vpack.c.b16 %v2067, %v2059
        %v2572 = vpack.c.b16 %v2068, %v2060
        %v2573 = vpack.c.b16 %v2069, %v2061
        %v2574 = vpack.c.b16 %v2070, %v2062
        %v2575 = vpack.c.b16 %v2071, %v2063
        %v2576 = vpack.c.b16 %v2080, %v2072
        %v2577 = vpack.c.b16 %v2081, %v2073
        %v2578 = vpack.c.b16 %v2082, %v2074
        %v2579 = vpack.c.b16 %v2083, %v2075
        %v2580 = vpack.c.b16 %v2084, %v2076
        %v2581 = vpack.c.b16 %v2085, %v2077
        %v2582 = vpack.c.b16 %v2086, %v2078
        %v2583 = vpack.c.b16 %v2087, %v2079
        %v2584 = vpack.c.b16 %v2096, %v2088
        %v2585 = vpack.c.b16 %v2097, %v2089
        %v2586 = vpack.c.b16 %v2098, %v2090
        %v2587 = vpack.c.b16 %v2099, %v2091
        %v2588 = vpack.c.b16 %v2100, %v2092
        %v2589 = vpack.c.b16 %v2101, %v2093
        %v2590 = vpack.c.b16 %v2102, %v2094
        %v2591 = vpack.c.b16 %v2103, %v2095
        %v2592 = vpack.c.b16 %v2112, %v2104
        %v2593 = vpack.c.b16 %v2113, %v2105
        %v2594 = vpack.c.b16 %v2114, %v2106
        %v2595 = vpack.c.b16 %v2115, %v2107
        %v2596 = vpack.c.b16 %v2116, %v2108
        %v2597 = vpack.c.b16 %v2117, %v2109
        %v2598 = vpack.c.b16 %v2118, %v2110
        %v2599 = vpack.c.b16 %v2119, %v2111
        %v2600 = vpack.c.b16 %v2128, %v2120
        %v2601 = vpack.c.b16 %v2129, %v2121
        %v2602 = vpack.c.b16 %v2130, %v2122
        %v2603 = vpack.c.b16 %v2131, %v2123
        %v2604 = vpack.c.b16 %v2132, %v2124
        %v2605 = vpack.c.b16 %v2133, %v2125
        %v2606 = vpack.c.b16 %v2134, %v2126
        %v2607 = vpack.c.b16 %v2135, %v2127
        %v2608 = vpack.c.b16 %v2144, %v2136
        %v2609 = vpack.c.b16 %v2145, %v2137
        %v2610 = vpack.c.b16 %v2146, %v2138
        %v2611 = vpack.c.b16 %v2147, %v2139
        %v2612 = vpack.c.b16 %v2148, %v2140
        %v2613 = vpack.c.b16 %v2149, %v2141
        %v2614 = vpack.c.b16 %v2150, %v2142
        %v2615 = vpack.c.b16 %v2151, %v2143
        %v2616 = vpack.c.b16 %v2160, %v2152
        %v2617 = vpack.c.b16 %v2161, %v2153
        %v2618 = vpack.c.b16 %v2162, %v2154
        %v2619 = vpack.c.b16 %v2163, %v2155
        %v2620 = vpack.c.b16 %v2164, %v2156
        %v2621 = vpack.c.b16 %v2165, %v2157
        %v2622 = vpack.c.b16 %v2166, %v2158
        %v2623 = vpack.c.b16 %v2167, %v2159
        %v2624 = vpack.c.b16 %v2176, %v2168
        %v2625 = vpack.c.b16 %v2177, %v2169
        %v2626 = vpack.c.b16 %v2178, %v2170
        %v2627 = vpack.c.b16 %v2179, %v2171
        %v2628 = vpack.c.b16 %v2180, %v2172
        %v2629 = vpack.c.b16 %v2181, %v2173
        %v2630 = vpack.c.b16 %v2182, %v2174
        %v2631 = vpack.c.b16 %v2183, %v2175
        %v2632 = vpack.c.b16 %v2192, %v2184
        %v2633 = vpack.c.b16 %v2193, %v2185
        %v2634 = vpack.c.b16 %v2194, %v2186
        %v2635 = vpack.c.b16 %v2195, %v2187
        %v2636 = vpack.c.b16 %v2196, %v2188
        %v2637 = vpack.c.b16 %v2197, %v2189
        %v2638 = vpack.c.b16 %v2198, %v2190
        %v2639 = vpack.c.b16 %v2199, %v2191
        %v2640 = vpack.c.b16 %v2208, %v2200
        %v2641 = vpack.c.b16 %v2209, %v2201
        %v2642 = vpack.c.b16 %v2210, %v2202
        %v2643 = vpack.c.b16 %v2211, %v2203
        %v2644 = vpack.c.b16 %v2212, %v2204
        %v2645 = vpack.c.b16 %v2213, %v2205
        %v2646 = vpack.c.b16 %v2214, %v2206
        %v2647 = vpack.c.b16 %v2215, %v2207
        %v2648 = vpack.c.b16 %v2224, %v2216
        %v2649 = vpack.c.b16 %v2225, %v2217
        %v2650 = vpack.c.b16 %v2226, %v2218
        %v2651 = vpack.c.b16 %v2227, %v2219
        %v2652 = vpack.c.b16 %v2228, %v2220
        %v2653 = vpack.c.b16 %v2229, %v2221
        %v2654 = vpack.c.b16 %v2230, %v2222
        %v2655 = vpack.c.b16 %v2231, %v2223
        %v2656 = vpack.c.b16 %v2240, %v2232
        %v2657 = vpack.c.b16 %v2241, %v2233
        %v2658 = vpack.c.b16 %v2242, %v2234
        %v2659 = vpack.c.b16 %v2243, %v2235
        %v2660 = vpack.c.b16 %v2244, %v2236
        %v2661 = vpack.c.b16 %v2245, %v2237
        %v2662 = vpack.c.b16 %v2246, %v2238
        %v2663 = vpack.c.b16 %v2247, %v2239
        %v2664 = vpack.c.b16 %v2256, %v2248
        %v2665 = vpack.c.b16 %v2257, %v2249
        %v2666 = vpack.c.b16 %v2258, %v2250
        %v2667 = vpack.c.b16 %v2259, %v2251
        %v2668 = vpack.c.b16 %v2260, %v2252
        %v2669 = vpack.c.b16 %v2261, %v2253
        %v2670 = vpack.c.b16 %v2262, %v2254
        %v2671 = vpack.c.b16 %v2263, %v2255
        %v2672 = vpack.c.b16 %v2272, %v2264
        %v2673 = vpack.c.b16 %v2273, %v2265
        %v2674 = vpack.c.b16 %v2274, %v2266
        %v2675 = vpack.c.b16 %v2275, %v2267
        %v2676 = vpack.c.b16 %v2276, %v2268
        %v2677 = vpack.c.b16 %v2277, %v2269
        %v2678 = vpack.c.b16 %v2278, %v2270
        %v2679 = vpack.c.b16 %v2279, %v2271
        %v2680 = vpack.c.b16 %v2288, %v2280
        %v2681 = vpack.c.b16 %v2289, %v2281
        %v2682 = vpack.c.b16 %v2290, %v2282
        %v2683 = vpack.c.b16 %v2291, %v2283
        %v2684 = vpack.c.b16 %v2292, %v2284
        %v2685 = vpack.c.b16 %v2293, %v2285
        %v2686 = vpack.c.b16 %v2294, %v2286
        %v2687 = vpack.c.b16 %v2295, %v2287
        %v2688 = vpack.c.b16 %v2304, %v2296
        %v2689 = vpack.c.b16 %v2305, %v2297
        %v2690 = vpack.c.b16 %v2306, %v2298
        %v2691 = vpack.c.b16 %v2307, %v2299
        %v2692 = vpack.c.b16 %v2308, %v2300
        %v2693 = vpack.c.b16 %v2309, %v2301
        %v2694 = vpack.c.b16 %v2310, %v2302
        %v2695 = vpack.c.b16 %v2311, %v2303
        %v2696 = vpack.c.b16 %v2320, %v2312
        %v2697 = vpack.c.b16 %v2321, %v2313
        %v2698 = vpack.c.b16 %v2322, %v2314
        %v2699 = vpack.c.b16 %v2323, %v2315
        %v2700 = vpack.c.b16 %v2324, %v2316
        %v2701 = vpack.c.b16 %v2325, %v2317
        %v2702 = vpack.c.b16 %v2326, %v2318
        %v2703 = vpack.c.b16 %v2327, %v2319
        %v2704 = vpack.c.b16 %v2336, %v2328
        %v2705 = vpack.c.b16 %v2337, %v2329
        %v2706 = vpack.c.b16 %v2338, %v2330
        %v2707 = vpack.c.b16 %v2339, %v2331
        %v2708 = vpack.c.b16 %v2340, %v2332
        %v2709 = vpack.c.b16 %v2341, %v2333
        %v2710 = vpack.c.b16 %v2342, %v2334
        %v2711 = vpack.c.b16 %v2343, %v2335
        %v2712 = vpack.c.b16 %v2352, %v2344
        %v2713 = vpack.c.b16 %v2353, %v2345
        %v2714 = vpack.c.b16 %v2354, %v2346
        %v2715 = vpack.c.b16 %v2355, %v2347
        %v2716 = vpack.c.b16 %v2356, %v2348
        %v2717 = vpack.c.b16 %v2357, %v2349
        %v2718 = vpack.c.b16 %v2358, %v2350
        %v2719 = vpack.c.b16 %v2359, %v2351
        %v2720 = vpack.c.b16 %v2368, %v2360
        %v2721 = vpack.c.b16 %v2369, %v2361
        %v2722 = vpack.c.b16 %v2370, %v2362
        %v2723 = vpack.c.b16 %v2371, %v2363
        %v2724 = vpack.c.b16 %v2372, %v2364
        %v2725 = vpack.c.b16 %v2373, %v2365
        %v2726 = vpack.c.b16 %v2374, %v2366
        %v2727 = vpack.c.b16 %v2375, %v2367
        %v2728 = vpack.c.b16 %v2384, %v2376
        %v2729 = vpack.c.b16 %v2385, %v2377
        %v2730 = vpack.c.b16 %v2386, %v2378
        %v2731 = vpack.c.b16 %v2387, %v2379
        %v2732 = vpack.c.b16 %v2388, %v2380
        %v2733 = vpack.c.b16 %v2389, %v2381
        %v2734 = vpack.c.b16 %v2390, %v2382
        %v2735 = vpack.c.b16 %v2391, %v2383
        %v2736 = vpack.c.b16 %v2400, %v2392
        %v2737 = vpack.c.b16 %v2401, %v2393
        %v2738 = vpack.c.b16 %v2402, %v2394
        %v2739 = vpack.c.b16 %v2403, %v2395
        %v2740 = vpack.c.b16 %v2404, %v2396
        %v2741 = vpack.c.b16 %v2405, %v2397
        %v2742 = vpack.c.b16 %v2406, %v2398
        %v2743 = vpack.c.b16 %v2407, %v2399
        %v2744 = vpack.c.b16 %v2416, %v2408
        %v2745 = vpack.c.b16 %v2417, %v2409
        %v2746 = vpack.c.b16 %v2418, %v2410
        %v2747 = vpack.c.b16 %v2419, %v2411
        %v2748 = vpack.c.b16 %v2420, %v2412
        %v2749 = vpack.c.b16 %v2421, %v2413
        %v2750 = vpack.c.b16 %v2422, %v2414
        %v2751 = vpack.c.b16 %v2423, %v2415
        %v2752 = vpack.c.b16 %v2432, %v2424
        %v2753 = vpack.c.b16 %v2433, %v2425
        %v2754 = vpack.c.b16 %v2434, %v2426
        %v2755 = vpack.c.b16 %v2435, %v2427
        %v2756 = vpack.c.b16 %v2436, %v2428
        %v2757 = vpack.c.b16 %v2437, %v2429
        %v2758 = vpack.c.b16 %v2438, %v2430
        %v2759 = vpack.c.b16 %v2439, %v2431
        %v2760 = vpack.c.b16 %v2448, %v2440
        %v2761 = vpack.c.b16 %v2449, %v2441
        %v2762 = vpack.c.b16 %v2450, %v2442
        %v2763 = vpack.c.b16 %v2451, %v2443
        %v2764 = vpack.c.b16 %v2452, %v2444
        %v2765 = vpack.c.b16 %v2453, %v2445
        %v2766 = vpack.c.b16 %v2454, %v2446
        %v2767 = vpack.c.b16 %v2455, %v2447
        %v2768 = vpack.c.b16 %v2464, %v2456
        %v2769 = vpack.c.b16 %v2465, %v2457
        %v2770 = vpack.c.b16 %v2466, %v2458
        %v2771 = vpack.c.b16 %v2467, %v2459
        %v2772 = vpack.c.b16 %v2468, %v2460
        %v2773 = vpack.c.b16 %v2469, %v2461
        %v2774 = vpack.c.b16 %v2470, %v2462
        %v2775 = vpack.c.b16 %v2471, %v2463
        %v2776 = vpack.c.b16 %v2480, %v2472
        %v2777 = vpack.c.b16 %v2481, %v2473
        %v2778 = vpack.c.b16 %v2482, %v2474
        %v2779 = vpack.c.b16 %v2483, %v2475
        %v2780 = vpack.c.b16 %v2484, %v2476
        %v2781 = vpack.c.b16 %v2485, %v2477
        %v2782 = vpack.c.b16 %v2486, %v2478
        %v2783 = vpack.c.b16 %v2487, %v2479
        %v2784 = vpack.c.b16 %v2496, %v2488
        %v2785 = vpack.c.b16 %v2497, %v2489
        %v2786 = vpack.c.b16 %v2498, %v2490
        %v2787 = vpack.c.b16 %v2499, %v2491
        %v2788 = vpack.c.b16 %v2500, %v2492
        %v2789 = vpack.c.b16 %v2501, %v2493
        %v2790 = vpack.c.b16 %v2502, %v2494
        %v2791 = vpack.c.b16 %v2503, %v2495
        %v2792 = vpack.c.b16 %v2512, %v2504
        %v2793 = vpack.c.b16 %v2513, %v2505
        %v2794 = vpack.c.b16 %v2514, %v2506
        %v2795 = vpack.c.b16 %v2515, %v2507
        %v2796 = vpack.c.b16 %v2516, %v2508
        %v2797 = vpack.c.b16 %v2517, %v2509
        %v2798 = vpack.c.b16 %v2518, %v2510
        %v2799 = vpack.c.b16 %v2519, %v2511
        %v2800 = vpack.c.b16 %v2528, %v2520
        %v2801 = vpack.c.b16 %v2529, %v2521
        %v2802 = vpack.c.b16 %v2530, %v2522
        %v2803 = vpack.c.b16 %v2531, %v2523
        %v2804 = vpack.c.b16 %v2532, %v2524
        %v2805 = vpack.c.b16 %v2533, %v2525
        %v2806 = vpack.c.b16 %v2534, %v2526
        %v2807 = vpack.c.b16 %v2535, %v2527
        %v2808 = vpack.c.b16 %v2544, %v2536
        %v2809 = vpack.c.b16 %v2545, %v2537
        %v2810 = vpack.c.b16 %v2546, %v2538
        %v2811 = vpack.c.b16 %v2547, %v2539
        %v2812 = vpack.c.b16 %v2548, %v2540
        %v2813 = vpack.c.b16 %v2549, %v2541
        %v2814 = vpack.c.b16 %v2550, %v2542
        %v2815 = vpack.c.b16 %v2551, %v2543
        %v2816 = vpack.c.b16 %v2560, %v2552
        %v2817 = vpack.c.b16 %v2561, %v2553
        %v2818 = vpack.c.b16 %v2562, %v2554
        %v2819 = vpack.c.b16 %v2563, %v2555
        %v2820 = vpack.c.b16 %v2564, %v2556
        %v2821 = vpack.c.b16 %v2565, %v2557
        %v2822 = vpack.c.b16 %v2566, %v2558
        %v2823 = vpack.c.b16 %v2567, %v2559
        %3080 = vmatpush.bf16.msra.mxu0 %v2624
        %3081 = vmatpush.bf16.msra.mxu0 %v2616
        %3082 = vmatpush.bf16.msra.mxu0 %v2608
        %3083 = vmatpush.bf16.msra.mxu0 %v2600
        %3084 = vmatpush.bf16.msra.mxu0 %v2592
        %3085 = vmatpush.bf16.msra.mxu0 %v2584
        %3086 = vmatpush.bf16.msra.mxu0 %v2576
        %3087 = vmatpush.bf16.msra.mxu0 %v2568
        %3088 = vmatmul.bf16.gmra.mxu0 %v1792
        %v3089 = vpop.f32.mrf.mxu0
        %v3090 = vadd.f32 0.0, %v3089
        %v3091 = vpop.f32.mrf.mxu0
        %3092 = vdwg.mxu0
        %3093 = vmatpush.bf16.msra.mxu0 %v2688
        %3094 = vmatpush.bf16.msra.mxu0 %v2680
        %3095 = vmatpush.bf16.msra.mxu0 %v2672
        %3096 = vmatpush.bf16.msra.mxu0 %v2664
        %3097 = vmatpush.bf16.msra.mxu0 %v2656
        %3098 = vmatpush.bf16.msra.mxu0 %v2648
        %3099 = vmatpush.bf16.msra.mxu0 %v2640
        %3100 = vmatpush.bf16.msra.mxu0 %v2632
        %3101 = vmatmul.bf16.gmra.mxu0 %v1793
        %v3102 = vpop.f32.mrf.mxu0
        %v3103 = vadd.f32 %v3090, %v3102
        %v3104 = vpop.f32.mrf.mxu0
        %3105 = vdwg.mxu0
        %3106 = vmatpush.bf16.msra.mxu0 %v2752
        %3107 = vmatpush.bf16.msra.mxu0 %v2744
        %3108 = vmatpush.bf16.msra.mxu0 %v2736
        %3109 = vmatpush.bf16.msra.mxu0 %v2728
        %3110 = vmatpush.bf16.msra.mxu0 %v2720
        %3111 = vmatpush.bf16.msra.mxu0 %v2712
        %3112 = vmatpush.bf16.msra.mxu0 %v2704
        %3113 = vmatpush.bf16.msra.mxu0 %v2696
        %3114 = vmatmul.bf16.gmra.mxu0 %v1794
        %v3115 = vpop.f32.mrf.mxu0
        %v3116 = vadd.f32 %v3103, %v3115
        %v3117 = vpop.f32.mrf.mxu0
        %3118 = vdwg.mxu0
        %3119 = vmatpush.bf16.msra.mxu0 %v2816
        %3120 = vmatpush.bf16.msra.mxu0 %v2808
        %3121 = vmatpush.bf16.msra.mxu0 %v2800
        %3122 = vmatpush.bf16.msra.mxu0 %v2792
        %3123 = vmatpush.bf16.msra.mxu0 %v2784
        %3124 = vmatpush.bf16.msra.mxu0 %v2776
        %3125 = vmatpush.bf16.msra.mxu0 %v2768
        %3126 = vmatpush.bf16.msra.mxu0 %v2760
        %3127 = vmatmul.bf16.gmra.mxu0 %v1795
        %v3128 = vpop.f32.mrf.mxu0
        %v3129 = vadd.f32 %v3116, %v3128
        %v3130 = vpop.f32.mrf.mxu0
        %3131 = vdwg.mxu0
        %3132 = vmatpush.bf16.msra.mxu0 %v2625
        %3133 = vmatpush.bf16.msra.mxu0 %v2617
        %3134 = vmatpush.bf16.msra.mxu0 %v2609
        %3135 = vmatpush.bf16.msra.mxu0 %v2601
        %3136 = vmatpush.bf16.msra.mxu0 %v2593
        %3137 = vmatpush.bf16.msra.mxu0 %v2585
        %3138 = vmatpush.bf16.msra.mxu0 %v2577
        %3139 = vmatpush.bf16.msra.mxu0 %v2569
        %3140 = vmatmul.bf16.gmra.mxu0 %v1792
        %v3141 = vpop.f32.mrf.mxu0
        %v3142 = vadd.f32 0.0, %v3141
        %v3143 = vpop.f32.mrf.mxu0
        %3144 = vdwg.mxu0
        %3145 = vmatpush.bf16.msra.mxu0 %v2689
        %3146 = vmatpush.bf16.msra.mxu0 %v2681
        %3147 = vmatpush.bf16.msra.mxu0 %v2673
        %3148 = vmatpush.bf16.msra.mxu0 %v2665
        %3149 = vmatpush.bf16.msra.mxu0 %v2657
        %3150 = vmatpush.bf16.msra.mxu0 %v2649
        %3151 = vmatpush.bf16.msra.mxu0 %v2641
        %3152 = vmatpush.bf16.msra.mxu0 %v2633
        %3153 = vmatmul.bf16.gmra.mxu0 %v1793
        %v3154 = vpop.f32.mrf.mxu0
        %v3155 = vadd.f32 %v3142, %v3154
        %v3156 = vpop.f32.mrf.mxu0
        %3157 = vdwg.mxu0
        %3158 = vmatpush.bf16.msra.mxu0 %v2753
        %3159 = vmatpush.bf16.msra.mxu0 %v2745
        %3160 = vmatpush.bf16.msra.mxu0 %v2737
        %3161 = vmatpush.bf16.msra.mxu0 %v2729
        %3162 = vmatpush.bf16.msra.mxu0 %v2721
        %3163 = vmatpush.bf16.msra.mxu0 %v2713
        %3164 = vmatpush.bf16.msra.mxu0 %v2705
        %3165 = vmatpush.bf16.msra.mxu0 %v2697
        %3166 = vmatmul.bf16.gmra.mxu0 %v1794
        %v3167 = vpop.f32.mrf.mxu0
        %v3168 = vadd.f32 %v3155, %v3167
        %v3169 = vpop.f32.mrf.mxu0
        %3170 = vdwg.mxu0
        %3171 = vmatpush.bf16.msra.mxu0 %v2817
        %3172 = vmatpush.bf16.msra.mxu0 %v2809
        %3173 = vmatpush.bf16.msra.mxu0 %v2801
        %3174 = vmatpush.bf16.msra.mxu0 %v2793
        %3175 = vmatpush.bf16.msra.mxu0 %v2785
        %3176 = vmatpush.bf16.msra.mxu0 %v2777
        %3177 = vmatpush.bf16.msra.mxu0 %v2769
        %3178 = vmatpush.bf16.msra.mxu0 %v2761
        %3179 = vmatmul.bf16.gmra.mxu0 %v1795
        %v3180 = vpop.f32.mrf.mxu0
        %v3181 = vadd.f32 %v3168, %v3180
        %v3182 = vpop.f32.mrf.mxu0
        %3183 = vdwg.mxu0
        %3184 = vmatpush.bf16.msra.mxu0 %v2626
        %3185 = vmatpush.bf16.msra.mxu0 %v2618
        %3186 = vmatpush.bf16.msra.mxu0 %v2610
        %3187 = vmatpush.bf16.msra.mxu0 %v2602
        %3188 = vmatpush.bf16.msra.mxu0 %v2594
        %3189 = vmatpush.bf16.msra.mxu0 %v2586
        %3190 = vmatpush.bf16.msra.mxu0 %v2578
        %3191 = vmatpush.bf16.msra.mxu0 %v2570
        %3192 = vmatmul.bf16.gmra.mxu0 %v1792
        %v3193 = vpop.f32.mrf.mxu0
        %v3194 = vadd.f32 0.0, %v3193
        %v3195 = vpop.f32.mrf.mxu0
        %3196 = vdwg.mxu0
        %3197 = vmatpush.bf16.msra.mxu0 %v2690
        %3198 = vmatpush.bf16.msra.mxu0 %v2682
        %3199 = vmatpush.bf16.msra.mxu0 %v2674
        %3200 = vmatpush.bf16.msra.mxu0 %v2666
        %3201 = vmatpush.bf16.msra.mxu0 %v2658
        %3202 = vmatpush.bf16.msra.mxu0 %v2650
        %3203 = vmatpush.bf16.msra.mxu0 %v2642
        %3204 = vmatpush.bf16.msra.mxu0 %v2634
        %3205 = vmatmul.bf16.gmra.mxu0 %v1793
        %v3206 = vpop.f32.mrf.mxu0
        %v3207 = vadd.f32 %v3194, %v3206
        %v3208 = vpop.f32.mrf.mxu0
        %3209 = vdwg.mxu0
        %3210 = vmatpush.bf16.msra.mxu0 %v2754
        %3211 = vmatpush.bf16.msra.mxu0 %v2746
        %3212 = vmatpush.bf16.msra.mxu0 %v2738
        %3213 = vmatpush.bf16.msra.mxu0 %v2730
        %3214 = vmatpush.bf16.msra.mxu0 %v2722
        %3215 = vmatpush.bf16.msra.mxu0 %v2714
        %3216 = vmatpush.bf16.msra.mxu0 %v2706
        %3217 = vmatpush.bf16.msra.mxu0 %v2698
        %3218 = vmatmul.bf16.gmra.mxu0 %v1794
        %v3219 = vpop.f32.mrf.mxu0
        %v3220 = vadd.f32 %v3207, %v3219
        %v3221 = vpop.f32.mrf.mxu0
        %3222 = vdwg.mxu0
        %3223 = vmatpush.bf16.msra.mxu0 %v2818
        %3224 = vmatpush.bf16.msra.mxu0 %v2810
        %3225 = vmatpush.bf16.msra.mxu0 %v2802
        %3226 = vmatpush.bf16.msra.mxu0 %v2794
        %3227 = vmatpush.bf16.msra.mxu0 %v2786
        %3228 = vmatpush.bf16.msra.mxu0 %v2778
        %3229 = vmatpush.bf16.msra.mxu0 %v2770
        %3230 = vmatpush.bf16.msra.mxu0 %v2762
        %3231 = vmatmul.bf16.gmra.mxu0 %v1795
        %v3232 = vpop.f32.mrf.mxu0
        %v3233 = vadd.f32 %v3220, %v3232
        %v3234 = vpop.f32.mrf.mxu0
        %3235 = vdwg.mxu0
        %3236 = vmatpush.bf16.msra.mxu0 %v2627
        %3237 = vmatpush.bf16.msra.mxu0 %v2619
        %3238 = vmatpush.bf16.msra.mxu0 %v2611
        %3239 = vmatpush.bf16.msra.mxu0 %v2603
        %3240 = vmatpush.bf16.msra.mxu0 %v2595
        %3241 = vmatpush.bf16.msra.mxu0 %v2587
        %3242 = vmatpush.bf16.msra.mxu0 %v2579
        %3243 = vmatpush.bf16.msra.mxu0 %v2571
        %3244 = vmatmul.bf16.gmra.mxu0 %v1792
        %v3245 = vpop.f32.mrf.mxu0
        %v3246 = vadd.f32 0.0, %v3245
        %v3247 = vpop.f32.mrf.mxu0
        %3248 = vdwg.mxu0
        %3249 = vmatpush.bf16.msra.mxu0 %v2691
        %3250 = vmatpush.bf16.msra.mxu0 %v2683
        %3251 = vmatpush.bf16.msra.mxu0 %v2675
        %3252 = vmatpush.bf16.msra.mxu0 %v2667
        %3253 = vmatpush.bf16.msra.mxu0 %v2659
        %3254 = vmatpush.bf16.msra.mxu0 %v2651
        %3255 = vmatpush.bf16.msra.mxu0 %v2643
        %3256 = vmatpush.bf16.msra.mxu0 %v2635
        %3257 = vmatmul.bf16.gmra.mxu0 %v1793
        %v3258 = vpop.f32.mrf.mxu0
        %v3259 = vadd.f32 %v3246, %v3258
        %v3260 = vpop.f32.mrf.mxu0
        %3261 = vdwg.mxu0
        %3262 = vmatpush.bf16.msra.mxu0 %v2755
        %3263 = vmatpush.bf16.msra.mxu0 %v2747
        %3264 = vmatpush.bf16.msra.mxu0 %v2739
        %3265 = vmatpush.bf16.msra.mxu0 %v2731
        %3266 = vmatpush.bf16.msra.mxu0 %v2723
        %3267 = vmatpush.bf16.msra.mxu0 %v2715
        %3268 = vmatpush.bf16.msra.mxu0 %v2707
        %3269 = vmatpush.bf16.msra.mxu0 %v2699
        %3270 = vmatmul.bf16.gmra.mxu0 %v1794
        %v3271 = vpop.f32.mrf.mxu0
        %v3272 = vadd.f32 %v3259, %v3271
        %v3273 = vpop.f32.mrf.mxu0
        %3274 = vdwg.mxu0
        %3275 = vmatpush.bf16.msra.mxu0 %v2819
        %3276 = vmatpush.bf16.msra.mxu0 %v2811
        %3277 = vmatpush.bf16.msra.mxu0 %v2803
        %3278 = vmatpush.bf16.msra.mxu0 %v2795
        %3279 = vmatpush.bf16.msra.mxu0 %v2787
        %3280 = vmatpush.bf16.msra.mxu0 %v2779
        %3281 = vmatpush.bf16.msra.mxu0 %v2771
        %3282 = vmatpush.bf16.msra.mxu0 %v2763
        %3283 = vmatmul.bf16.gmra.mxu0 %v1795
        %v3284 = vpop.f32.mrf.mxu0
        %v3285 = vadd.f32 %v3272, %v3284
        %v3286 = vpop.f32.mrf.mxu0
        %3287 = vdwg.mxu0
        %3288 = vmatpush.bf16.msra.mxu0 %v2628
        %3289 = vmatpush.bf16.msra.mxu0 %v2620
        %3290 = vmatpush.bf16.msra.mxu0 %v2612
        %3291 = vmatpush.bf16.msra.mxu0 %v2604
        %3292 = vmatpush.bf16.msra.mxu0 %v2596
        %3293 = vmatpush.bf16.msra.mxu0 %v2588
        %3294 = vmatpush.bf16.msra.mxu0 %v2580
        %3295 = vmatpush.bf16.msra.mxu0 %v2572
        %3296 = vmatmul.bf16.gmra.mxu0 %v1792
        %v3297 = vpop.f32.mrf.mxu0
        %v3298 = vadd.f32 0.0, %v3297
        %v3299 = vpop.f32.mrf.mxu0
        %3300 = vdwg.mxu0
        %3301 = vmatpush.bf16.msra.mxu0 %v2692
        %3302 = vmatpush.bf16.msra.mxu0 %v2684
        %3303 = vmatpush.bf16.msra.mxu0 %v2676
        %3304 = vmatpush.bf16.msra.mxu0 %v2668
        %3305 = vmatpush.bf16.msra.mxu0 %v2660
        %3306 = vmatpush.bf16.msra.mxu0 %v2652
        %3307 = vmatpush.bf16.msra.mxu0 %v2644
        %3308 = vmatpush.bf16.msra.mxu0 %v2636
        %3309 = vmatmul.bf16.gmra.mxu0 %v1793
        %v3310 = vpop.f32.mrf.mxu0
        %v3311 = vadd.f32 %v3298, %v3310
        %v3312 = vpop.f32.mrf.mxu0
        %3313 = vdwg.mxu0
        %3314 = vmatpush.bf16.msra.mxu0 %v2756
        %3315 = vmatpush.bf16.msra.mxu0 %v2748
        %3316 = vmatpush.bf16.msra.mxu0 %v2740
        %3317 = vmatpush.bf16.msra.mxu0 %v2732
        %3318 = vmatpush.bf16.msra.mxu0 %v2724
        %3319 = vmatpush.bf16.msra.mxu0 %v2716
        %3320 = vmatpush.bf16.msra.mxu0 %v2708
        %3321 = vmatpush.bf16.msra.mxu0 %v2700
        %3322 = vmatmul.bf16.gmra.mxu0 %v1794
        %v3323 = vpop.f32.mrf.mxu0
        %v3324 = vadd.f32 %v3311, %v3323
        %v3325 = vpop.f32.mrf.mxu0
        %3326 = vdwg.mxu0
        %3327 = vmatpush.bf16.msra.mxu0 %v2820
        %3328 = vmatpush.bf16.msra.mxu0 %v2812
        %3329 = vmatpush.bf16.msra.mxu0 %v2804
        %3330 = vmatpush.bf16.msra.mxu0 %v2796
        %3331 = vmatpush.bf16.msra.mxu0 %v2788
        %3332 = vmatpush.bf16.msra.mxu0 %v2780
        %3333 = vmatpush.bf16.msra.mxu0 %v2772
        %3334 = vmatpush.bf16.msra.mxu0 %v2764
        %3335 = vmatmul.bf16.gmra.mxu0 %v1795
        %v3336 = vpop.f32.mrf.mxu0
        %v3337 = vadd.f32 %v3324, %v3336
        %v3338 = vpop.f32.mrf.mxu0
        %3339 = vdwg.mxu0
        %3340 = vmatpush.bf16.msra.mxu0 %v2629
        %3341 = vmatpush.bf16.msra.mxu0 %v2621
        %3342 = vmatpush.bf16.msra.mxu0 %v2613
        %3343 = vmatpush.bf16.msra.mxu0 %v2605
        %3344 = vmatpush.bf16.msra.mxu0 %v2597
        %3345 = vmatpush.bf16.msra.mxu0 %v2589
        %3346 = vmatpush.bf16.msra.mxu0 %v2581
        %3347 = vmatpush.bf16.msra.mxu0 %v2573
        %3348 = vmatmul.bf16.gmra.mxu0 %v1792
        %v3349 = vpop.f32.mrf.mxu0
        %v3350 = vadd.f32 0.0, %v3349
        %v3351 = vpop.f32.mrf.mxu0
        %3352 = vdwg.mxu0
        %3353 = vmatpush.bf16.msra.mxu0 %v2693
        %3354 = vmatpush.bf16.msra.mxu0 %v2685
        %3355 = vmatpush.bf16.msra.mxu0 %v2677
        %3356 = vmatpush.bf16.msra.mxu0 %v2669
        %3357 = vmatpush.bf16.msra.mxu0 %v2661
        %3358 = vmatpush.bf16.msra.mxu0 %v2653
        %3359 = vmatpush.bf16.msra.mxu0 %v2645
        %3360 = vmatpush.bf16.msra.mxu0 %v2637
        %3361 = vmatmul.bf16.gmra.mxu0 %v1793
        %v3362 = vpop.f32.mrf.mxu0
        %v3363 = vadd.f32 %v3350, %v3362
        %v3364 = vpop.f32.mrf.mxu0
        %3365 = vdwg.mxu0
        %3366 = vmatpush.bf16.msra.mxu0 %v2757
        %3367 = vmatpush.bf16.msra.mxu0 %v2749
        %3368 = vmatpush.bf16.msra.mxu0 %v2741
        %3369 = vmatpush.bf16.msra.mxu0 %v2733
        %3370 = vmatpush.bf16.msra.mxu0 %v2725
        %3371 = vmatpush.bf16.msra.mxu0 %v2717
        %3372 = vmatpush.bf16.msra.mxu0 %v2709
        %3373 = vmatpush.bf16.msra.mxu0 %v2701
        %3374 = vmatmul.bf16.gmra.mxu0 %v1794
        %v3375 = vpop.f32.mrf.mxu0
        %v3376 = vadd.f32 %v3363, %v3375
        %v3377 = vpop.f32.mrf.mxu0
        %3378 = vdwg.mxu0
        %3379 = vmatpush.bf16.msra.mxu0 %v2821
        %3380 = vmatpush.bf16.msra.mxu0 %v2813
        %3381 = vmatpush.bf16.msra.mxu0 %v2805
        %3382 = vmatpush.bf16.msra.mxu0 %v2797
        %3383 = vmatpush.bf16.msra.mxu0 %v2789
        %3384 = vmatpush.bf16.msra.mxu0 %v2781
        %3385 = vmatpush.bf16.msra.mxu0 %v2773
        %3386 = vmatpush.bf16.msra.mxu0 %v2765
        %3387 = vmatmul.bf16.gmra.mxu0 %v1795
        %v3388 = vpop.f32.mrf.mxu0
        %v3389 = vadd.f32 %v3376, %v3388
        %v3390 = vpop.f32.mrf.mxu0
        %3391 = vdwg.mxu0
        %3392 = vmatpush.bf16.msra.mxu0 %v2630
        %3393 = vmatpush.bf16.msra.mxu0 %v2622
        %3394 = vmatpush.bf16.msra.mxu0 %v2614
        %3395 = vmatpush.bf16.msra.mxu0 %v2606
        %3396 = vmatpush.bf16.msra.mxu0 %v2598
        %3397 = vmatpush.bf16.msra.mxu0 %v2590
        %3398 = vmatpush.bf16.msra.mxu0 %v2582
        %3399 = vmatpush.bf16.msra.mxu0 %v2574
        %3400 = vmatmul.bf16.gmra.mxu0 %v1792
        %v3401 = vpop.f32.mrf.mxu0
        %v3402 = vadd.f32 0.0, %v3401
        %v3403 = vpop.f32.mrf.mxu0
        %3404 = vdwg.mxu0
        %3405 = vmatpush.bf16.msra.mxu0 %v2694
        %3406 = vmatpush.bf16.msra.mxu0 %v2686
        %3407 = vmatpush.bf16.msra.mxu0 %v2678
        %3408 = vmatpush.bf16.msra.mxu0 %v2670
        %3409 = vmatpush.bf16.msra.mxu0 %v2662
        %3410 = vmatpush.bf16.msra.mxu0 %v2654
        %3411 = vmatpush.bf16.msra.mxu0 %v2646
        %3412 = vmatpush.bf16.msra.mxu0 %v2638
        %3413 = vmatmul.bf16.gmra.mxu0 %v1793
        %v3414 = vpop.f32.mrf.mxu0
        %v3415 = vadd.f32 %v3402, %v3414
        %v3416 = vpop.f32.mrf.mxu0
        %3417 = vdwg.mxu0
        %3418 = vmatpush.bf16.msra.mxu0 %v2758
        %3419 = vmatpush.bf16.msra.mxu0 %v2750
        %3420 = vmatpush.bf16.msra.mxu0 %v2742
        %3421 = vmatpush.bf16.msra.mxu0 %v2734
        %3422 = vmatpush.bf16.msra.mxu0 %v2726
        %3423 = vmatpush.bf16.msra.mxu0 %v2718
        %3424 = vmatpush.bf16.msra.mxu0 %v2710
        %3425 = vmatpush.bf16.msra.mxu0 %v2702
        %3426 = vmatmul.bf16.gmra.mxu0 %v1794
        %v3427 = vpop.f32.mrf.mxu0
        %v3428 = vadd.f32 %v3415, %v3427
        %v3429 = vpop.f32.mrf.mxu0
        %3430 = vdwg.mxu0
        %3431 = vmatpush.bf16.msra.mxu0 %v2822
        %3432 = vmatpush.bf16.msra.mxu0 %v2814
        %3433 = vmatpush.bf16.msra.mxu0 %v2806
        %3434 = vmatpush.bf16.msra.mxu0 %v2798
        %3435 = vmatpush.bf16.msra.mxu0 %v2790
        %3436 = vmatpush.bf16.msra.mxu0 %v2782
        %3437 = vmatpush.bf16.msra.mxu0 %v2774
        %3438 = vmatpush.bf16.msra.mxu0 %v2766
        %3439 = vmatmul.bf16.gmra.mxu0 %v1795
        %v3440 = vpop.f32.mrf.mxu0
        %v3441 = vadd.f32 %v3428, %v3440
        %v3442 = vpop.f32.mrf.mxu0
        %3443 = vdwg.mxu0
        %3444 = vmatpush.bf16.msra.mxu0 %v2631
        %3445 = vmatpush.bf16.msra.mxu0 %v2623
        %3446 = vmatpush.bf16.msra.mxu0 %v2615
        %3447 = vmatpush.bf16.msra.mxu0 %v2607
        %3448 = vmatpush.bf16.msra.mxu0 %v2599
        %3449 = vmatpush.bf16.msra.mxu0 %v2591
        %3450 = vmatpush.bf16.msra.mxu0 %v2583
        %3451 = vmatpush.bf16.msra.mxu0 %v2575
        %3452 = vmatmul.bf16.gmra.mxu0 %v1792
        %v3453 = vpop.f32.mrf.mxu0
        %v3454 = vadd.f32 0.0, %v3453
        %v3455 = vpop.f32.mrf.mxu0
        %3456 = vdwg.mxu0
        %3457 = vmatpush.bf16.msra.mxu0 %v2695
        %3458 = vmatpush.bf16.msra.mxu0 %v2687
        %3459 = vmatpush.bf16.msra.mxu0 %v2679
        %3460 = vmatpush.bf16.msra.mxu0 %v2671
        %3461 = vmatpush.bf16.msra.mxu0 %v2663
        %3462 = vmatpush.bf16.msra.mxu0 %v2655
        %3463 = vmatpush.bf16.msra.mxu0 %v2647
        %3464 = vmatpush.bf16.msra.mxu0 %v2639
        %3465 = vmatmul.bf16.gmra.mxu0 %v1793
        %v3466 = vpop.f32.mrf.mxu0
        %v3467 = vadd.f32 %v3454, %v3466
        %v3468 = vpop.f32.mrf.mxu0
        %3469 = vdwg.mxu0
        %3470 = vmatpush.bf16.msra.mxu0 %v2759
        %3471 = vmatpush.bf16.msra.mxu0 %v2751
        %3472 = vmatpush.bf16.msra.mxu0 %v2743
        %3473 = vmatpush.bf16.msra.mxu0 %v2735
        %3474 = vmatpush.bf16.msra.mxu0 %v2727
        %3475 = vmatpush.bf16.msra.mxu0 %v2719
        %3476 = vmatpush.bf16.msra.mxu0 %v2711
        %3477 = vmatpush.bf16.msra.mxu0 %v2703
        %3478 = vmatmul.bf16.gmra.mxu0 %v1794
        %v3479 = vpop.f32.mrf.mxu0
        %v3480 = vadd.f32 %v3467, %v3479
        %v3481 = vpop.f32.mrf.mxu0
        %3482 = vdwg.mxu0
        %3483 = vmatpush.bf16.msra.mxu0 %v2823
        %3484 = vmatpush.bf16.msra.mxu0 %v2815
        %3485 = vmatpush.bf16.msra.mxu0 %v2807
        %3486 = vmatpush.bf16.msra.mxu0 %v2799
        %3487 = vmatpush.bf16.msra.mxu0 %v2791
        %3488 = vmatpush.bf16.msra.mxu0 %v2783
        %3489 = vmatpush.bf16.msra.mxu0 %v2775
        %3490 = vmatpush.bf16.msra.mxu0 %v2767
        %3491 = vmatmul.bf16.gmra.mxu0 %v1795
        %v3492 = vpop.f32.mrf.mxu0
        %v3493 = vadd.f32 %v3480, %v3492
        %v3494 = vpop.f32.mrf.mxu0
        %3495 = vdwg.mxu0
        %s3496 = scalar_lea.vmem %s359, 1
        %v3497 = vld [vmem:[%s3496] ss:$8 sm:$0xf]
        %s3498 = scalar_lea.vmem %s359, 3
        %v3499 = vld [vmem:[%s3498] ss:$8 sm:$0xf]
        %s3500 = scalar_lea.vmem %s359, 5
        %v3501 = vld [vmem:[%s3500] ss:$8 sm:$0xf]
        %v3503 = vperm.slane %v3497, 0
        %v3504 = vperm.slane %v3497, 1
        %v3505 = vperm.slane %v3497, 2
        %v3506 = vperm.slane %v3497, 3
        %v3511 = vadd.f32 %v3129, %v3503
        %v3512 = vadd.f32 %v3181, %v3504
        %v3513 = vadd.f32 %v3233, %v3505
        %v3514 = vadd.f32 %v3285, %v3506
        %v3515 = vadd.f32 %v3511, %v3512
        %v3516 = vadd.f32 %v3515, %v3513
        %v3517 = vadd.f32 %v3516, %v3514
        %3518 = vadd.xlane.f32.xlu0 %v3517
        %v3519 = vpop.xlane.xlu0 %3518
        %v3520 = vrcp.pop 512.0
        %v3521 = vmul.f32 512.0, %v3520
        %v3522 = vsub.f32 1.0, %v3521
        %v3523 = vmul.f32 %v3520, %v3522
        %v3524 = vadd.f32 %v3520, %v3523
        %vm3525 = vweird.f32 %v3520
        %v3526 = vsel %vm3525, %v3520, %v3524
        %v3527 = vmul.f32 %v3519, %v3526
        %v3528 = vsub.f32 %v3511, %v3527
        %v3529 = vsub.f32 %v3512, %v3527
        %v3530 = vsub.f32 %v3513, %v3527
        %v3531 = vsub.f32 %v3514, %v3527
        %v3532 = vmul.f32 %v3528, %v3528
        %v3533 = vmul.f32 %v3529, %v3529
        %v3534 = vmul.f32 %v3530, %v3530
        %v3535 = vmul.f32 %v3531, %v3531
        %v3536 = vadd.f32 %v3532, %v3533
        %v3537 = vadd.f32 %v3536, %v3534
        %v3538 = vadd.f32 %v3537, %v3535
        %3539 = vadd.xlane.f32.xlu0 %v3538
        %v3540 = vpop.xlane.xlu0 %3539
        %v3541 = vmul.f32 %v3540, %v3526
        %v3542 = vadd.f32 %v3541, 1e-05
        %v3543 = vrsqrt.pop %v3542
        %v3544 = vmul.f32 %v3543, %v3542
        %v3545 = vmul.f32 %v3544, %v3543
        %v3546 = vmul.f32 0.5, %v3545
        %v3547 = vsub.f32 1.5, %v3546
        %v3548 = vmul.f32 %v3543, %v3547
        %vm3549 = vweird.f32 %v3542
        %vm3550 = vweird.f32 %v3543
        %vm3551 = vmor %vm3549, %vm3550
        %v3552 = vsel %vm3551, %v3543, %v3548
        %v3553 = vmul.f32 %v3528, %v3552
        %v3554 = vmul.f32 %v3529, %v3552
        %v3555 = vmul.f32 %v3530, %v3552
        %v3556 = vmul.f32 %v3531, %v3552
        %v3558 = vperm.slane %v3499, 0
        %v3559 = vperm.slane %v3499, 1
        %v3560 = vperm.slane %v3499, 2
        %v3561 = vperm.slane %v3499, 3
        %v3566 = vmul.f32 %v3553, %v3558
        %v3567 = vmul.f32 %v3554, %v3559
        %v3568 = vmul.f32 %v3555, %v3560
        %v3569 = vmul.f32 %v3556, %v3561
        %v3571 = vperm.slane %v3501, 0
        %v3572 = vperm.slane %v3501, 1
        %v3573 = vperm.slane %v3501, 2
        %v3574 = vperm.slane %v3501, 3
        %v3579 = vadd.f32 %v3566, %v3571
        %v3580 = vadd.f32 %v3567, %v3572
        %v3581 = vadd.f32 %v3568, %v3573
        %v3582 = vadd.f32 %v3569, %v3574
        %vm3583 = vcmp.ge.f32.partialorder %v3579, 0.0
        %vm3584 = vcmp.ge.f32.partialorder %v3580, 0.0
        %vm3585 = vcmp.ge.f32.partialorder %v3581, 0.0
        %vm3586 = vcmp.ge.f32.partialorder %v3582, 0.0
        %v3587 = vmul.f32 %v3579, 0.01
        %v3588 = vmul.f32 %v3580, 0.01
        %v3589 = vmul.f32 %v3581, 0.01
        %v3590 = vmul.f32 %v3582, 0.01
        %v3591 = vsel %vm3583, %v3579, %v3587
        %v3592 = vsel %vm3584, %v3580, %v3588
        %v3593 = vsel %vm3585, %v3581, %v3589
        %v3594 = vsel %vm3586, %v3582, %v3590
        %v3595 = vpack.c.bf16 %v3591, %v3591
        %v3596 = vpack.c.bf16 %v3592, %v3592
        %v3597 = vpack.c.bf16 %v3593, %v3593
        %v3598 = vpack.c.bf16 %v3594, %v3594
        %s3599 = scalar_lea.vmem %s359, 2
        %v3600 = vld [vmem:[%s3599] ss:$8 sm:$0xf]
        %s3601 = scalar_lea.vmem %s359, 4
        %v3602 = vld [vmem:[%s3601] ss:$8 sm:$0xf]
        %s3603 = scalar_lea.vmem %s359, 6
        %v3604 = vld [vmem:[%s3603] ss:$8 sm:$0xf]
        %v3606 = vperm.slane %v3600, 0
        %v3607 = vperm.slane %v3600, 1
        %v3608 = vperm.slane %v3600, 2
        %v3609 = vperm.slane %v3600, 3
        %v3614 = vadd.f32 %v3337, %v3606
        %v3615 = vadd.f32 %v3389, %v3607
        %v3616 = vadd.f32 %v3441, %v3608
        %v3617 = vadd.f32 %v3493, %v3609
        %v3618 = vadd.f32 %v3614, %v3615
        %v3619 = vadd.f32 %v3618, %v3616
        %v3620 = vadd.f32 %v3619, %v3617
        %3621 = vadd.xlane.f32.xlu0 %v3620
        %v3622 = vpop.xlane.xlu0 %3621
        %v3623 = vmul.f32 %v3622, %v3526
        %v3624 = vsub.f32 %v3614, %v3623
        %v3625 = vsub.f32 %v3615, %v3623
        %v3626 = vsub.f32 %v3616, %v3623
        %v3627 = vsub.f32 %v3617, %v3623
        %v3628 = vmul.f32 %v3624, %v3624
        %v3629 = vmul.f32 %v3625, %v3625
        %v3630 = vmul.f32 %v3626, %v3626
        %v3631 = vmul.f32 %v3627, %v3627
        %v3632 = vadd.f32 %v3628, %v3629
        %v3633 = vadd.f32 %v3632, %v3630
        %v3634 = vadd.f32 %v3633, %v3631
        %3635 = vadd.xlane.f32.xlu0 %v3634
        %v3636 = vpop.xlane.xlu0 %3635
        %v3637 = vmul.f32 %v3636, %v3526
        %v3638 = vadd.f32 %v3637, 1e-05
        %v3639 = vrsqrt.pop %v3638
        %v3640 = vmul.f32 %v3639, %v3638
        %v3641 = vmul.f32 %v3640, %v3639
        %v3642 = vmul.f32 0.5, %v3641
        %v3643 = vsub.f32 1.5, %v3642
        %v3644 = vmul.f32 %v3639, %v3643
        %vm3645 = vweird.f32 %v3638
        %vm3646 = vweird.f32 %v3639
        %vm3647 = vmor %vm3645, %vm3646
        %v3648 = vsel %vm3647, %v3639, %v3644
        %v3649 = vmul.f32 %v3624, %v3648
        %v3650 = vmul.f32 %v3625, %v3648
        %v3651 = vmul.f32 %v3626, %v3648
        %v3652 = vmul.f32 %v3627, %v3648
        %v3654 = vperm.slane %v3602, 0
        %v3655 = vperm.slane %v3602, 1
        %v3656 = vperm.slane %v3602, 2
        %v3657 = vperm.slane %v3602, 3
        %v3662 = vmul.f32 %v3649, %v3654
        %v3663 = vmul.f32 %v3650, %v3655
        %v3664 = vmul.f32 %v3651, %v3656
        %v3665 = vmul.f32 %v3652, %v3657
        %v3667 = vperm.slane %v3604, 0
        %v3668 = vperm.slane %v3604, 1
        %v3669 = vperm.slane %v3604, 2
        %v3670 = vperm.slane %v3604, 3
        %v3675 = vadd.f32 %v3662, %v3667
        %v3676 = vadd.f32 %v3663, %v3668
        %v3677 = vadd.f32 %v3664, %v3669
        %v3678 = vadd.f32 %v3665, %v3670
        %vm3679 = vcmp.ge.f32.partialorder %v3675, 0.0
        %vm3680 = vcmp.ge.f32.partialorder %v3676, 0.0
        %vm3681 = vcmp.ge.f32.partialorder %v3677, 0.0
        %vm3682 = vcmp.ge.f32.partialorder %v3678, 0.0
        %v3683 = vmul.f32 %v3675, 0.01
        %v3684 = vmul.f32 %v3676, 0.01
        %v3685 = vmul.f32 %v3677, 0.01
        %v3686 = vmul.f32 %v3678, 0.01
        %v3687 = vsel %vm3679, %v3675, %v3683
        %v3688 = vsel %vm3680, %v3676, %v3684
        %v3689 = vsel %vm3681, %v3677, %v3685
        %v3690 = vsel %vm3682, %v3678, %v3686
        %v3691 = vpack.c.bf16 %v3687, %v3687
        %v3692 = vpack.c.bf16 %v3688, %v3688
        %v3693 = vpack.c.bf16 %v3689, %v3689
        %v3694 = vpack.c.bf16 %v3690, %v3690
        %v3695 = vld [vmem:[%s315] sm:$0xff]
        %v3696 = vld [vmem:[%s315 + $0x8] sm:$0xff]
        %v3697 = vld [vmem:[%s315 + $0x10] sm:$0xff]
        %v3698 = vld [vmem:[%s315 + $0x18] sm:$0xff]
        %v3699 = vld [vmem:[%s315 + $0x20] sm:$0xff]
        %v3700 = vld [vmem:[%s315 + $0x28] sm:$0xff]
        %v3701 = vld [vmem:[%s315 + $0x30] sm:$0xff]
        %v3702 = vld [vmem:[%s315 + $0x38] sm:$0xff]
        %v3703 = vld [vmem:[%s315 + $0x40] sm:$0xff]
        %v3704 = vld [vmem:[%s315 + $0x48] sm:$0xff]
        %v3705 = vld [vmem:[%s315 + $0x50] sm:$0xff]
        %v3706 = vld [vmem:[%s315 + $0x58] sm:$0xff]
        %v3707 = vld [vmem:[%s315 + $0x60] sm:$0xff]
        %v3708 = vld [vmem:[%s315 + $0x68] sm:$0xff]
        %v3709 = vld [vmem:[%s315 + $0x70] sm:$0xff]
        %v3710 = vld [vmem:[%s315 + $0x78] sm:$0xff]
        %v3711 = vld [vmem:[%s315 + $0x80] sm:$0xff]
        %v3712 = vld [vmem:[%s315 + $0x88] sm:$0xff]
        %v3713 = vld [vmem:[%s315 + $0x90] sm:$0xff]
        %v3714 = vld [vmem:[%s315 + $0x98] sm:$0xff]
        %v3715 = vld [vmem:[%s315 + $0xa0] sm:$0xff]
        %v3716 = vld [vmem:[%s315 + $0xa8] sm:$0xff]
        %v3717 = vld [vmem:[%s315 + $0xb0] sm:$0xff]
        %v3718 = vld [vmem:[%s315 + $0xb8] sm:$0xff]
        %v3719 = vld [vmem:[%s315 + $0xc0] sm:$0xff]
        %v3720 = vld [vmem:[%s315 + $0xc8] sm:$0xff]
        %v3721 = vld [vmem:[%s315 + $0xd0] sm:$0xff]
        %v3722 = vld [vmem:[%s315 + $0xd8] sm:$0xff]
        %v3723 = vld [vmem:[%s315 + $0xe0] sm:$0xff]
        %v3724 = vld [vmem:[%s315 + $0xe8] sm:$0xff]
        %v3725 = vld [vmem:[%s315 + $0xf0] sm:$0xff]
        %v3726 = vld [vmem:[%s315 + $0xf8] sm:$0xff]
        %v3727 = vld [vmem:[%s315 + $0x100] sm:$0xff]
        %v3728 = vld [vmem:[%s315 + $0x108] sm:$0xff]
        %v3729 = vld [vmem:[%s315 + $0x110] sm:$0xff]
        %v3730 = vld [vmem:[%s315 + $0x118] sm:$0xff]
        %v3731 = vld [vmem:[%s315 + $0x120] sm:$0xff]
        %v3732 = vld [vmem:[%s315 + $0x128] sm:$0xff]
        %v3733 = vld [vmem:[%s315 + $0x130] sm:$0xff]
        %v3734 = vld [vmem:[%s315 + $0x138] sm:$0xff]
        %v3735 = vld [vmem:[%s315 + $0x140] sm:$0xff]
        %v3736 = vld [vmem:[%s315 + $0x148] sm:$0xff]
        %v3737 = vld [vmem:[%s315 + $0x150] sm:$0xff]
        %v3738 = vld [vmem:[%s315 + $0x158] sm:$0xff]
        %v3739 = vld [vmem:[%s315 + $0x160] sm:$0xff]
        %v3740 = vld [vmem:[%s315 + $0x168] sm:$0xff]
        %v3741 = vld [vmem:[%s315 + $0x170] sm:$0xff]
        %v3742 = vld [vmem:[%s315 + $0x178] sm:$0xff]
        %v3743 = vld [vmem:[%s315 + $0x180] sm:$0xff]
        %v3744 = vld [vmem:[%s315 + $0x188] sm:$0xff]
        %v3745 = vld [vmem:[%s315 + $0x190] sm:$0xff]
        %v3746 = vld [vmem:[%s315 + $0x198] sm:$0xff]
        %v3747 = vld [vmem:[%s315 + $0x1a0] sm:$0xff]
        %v3748 = vld [vmem:[%s315 + $0x1a8] sm:$0xff]
        %v3749 = vld [vmem:[%s315 + $0x1b0] sm:$0xff]
        %v3750 = vld [vmem:[%s315 + $0x1b8] sm:$0xff]
        %v3751 = vld [vmem:[%s315 + $0x1c0] sm:$0xff]
        %v3752 = vld [vmem:[%s315 + $0x1c8] sm:$0xff]
        %v3753 = vld [vmem:[%s315 + $0x1d0] sm:$0xff]
        %v3754 = vld [vmem:[%s315 + $0x1d8] sm:$0xff]
        %v3755 = vld [vmem:[%s315 + $0x1e0] sm:$0xff]
        %v3756 = vld [vmem:[%s315 + $0x1e8] sm:$0xff]
        %v3757 = vld [vmem:[%s315 + $0x1f0] sm:$0xff]
        %v3758 = vld [vmem:[%s315 + $0x1f8] sm:$0xff]
        %v3759 = vld [vmem:[%s315 + $0x200] sm:$0xff]
        %v3760 = vld [vmem:[%s315 + $0x208] sm:$0xff]
        %v3761 = vld [vmem:[%s315 + $0x210] sm:$0xff]
        %v3762 = vld [vmem:[%s315 + $0x218] sm:$0xff]
        %v3763 = vld [vmem:[%s315 + $0x220] sm:$0xff]
        %v3764 = vld [vmem:[%s315 + $0x228] sm:$0xff]
        %v3765 = vld [vmem:[%s315 + $0x230] sm:$0xff]
        %v3766 = vld [vmem:[%s315 + $0x238] sm:$0xff]
        %v3767 = vld [vmem:[%s315 + $0x240] sm:$0xff]
        %v3768 = vld [vmem:[%s315 + $0x248] sm:$0xff]
        %v3769 = vld [vmem:[%s315 + $0x250] sm:$0xff]
        %v3770 = vld [vmem:[%s315 + $0x258] sm:$0xff]
        %v3771 = vld [vmem:[%s315 + $0x260] sm:$0xff]
        %v3772 = vld [vmem:[%s315 + $0x268] sm:$0xff]
        %v3773 = vld [vmem:[%s315 + $0x270] sm:$0xff]
        %v3774 = vld [vmem:[%s315 + $0x278] sm:$0xff]
        %v3775 = vld [vmem:[%s315 + $0x280] sm:$0xff]
        %v3776 = vld [vmem:[%s315 + $0x288] sm:$0xff]
        %v3777 = vld [vmem:[%s315 + $0x290] sm:$0xff]
        %v3778 = vld [vmem:[%s315 + $0x298] sm:$0xff]
        %v3779 = vld [vmem:[%s315 + $0x2a0] sm:$0xff]
        %v3780 = vld [vmem:[%s315 + $0x2a8] sm:$0xff]
        %v3781 = vld [vmem:[%s315 + $0x2b0] sm:$0xff]
        %v3782 = vld [vmem:[%s315 + $0x2b8] sm:$0xff]
        %v3783 = vld [vmem:[%s315 + $0x2c0] sm:$0xff]
        %v3784 = vld [vmem:[%s315 + $0x2c8] sm:$0xff]
        %v3785 = vld [vmem:[%s315 + $0x2d0] sm:$0xff]
        %v3786 = vld [vmem:[%s315 + $0x2d8] sm:$0xff]
        %v3787 = vld [vmem:[%s315 + $0x2e0] sm:$0xff]
        %v3788 = vld [vmem:[%s315 + $0x2e8] sm:$0xff]
        %v3789 = vld [vmem:[%s315 + $0x2f0] sm:$0xff]
        %v3790 = vld [vmem:[%s315 + $0x2f8] sm:$0xff]
        %v3791 = vld [vmem:[%s315 + $0x300] sm:$0xff]
        %v3792 = vld [vmem:[%s315 + $0x308] sm:$0xff]
        %v3793 = vld [vmem:[%s315 + $0x310] sm:$0xff]
        %v3794 = vld [vmem:[%s315 + $0x318] sm:$0xff]
        %v3795 = vld [vmem:[%s315 + $0x320] sm:$0xff]
        %v3796 = vld [vmem:[%s315 + $0x328] sm:$0xff]
        %v3797 = vld [vmem:[%s315 + $0x330] sm:$0xff]
        %v3798 = vld [vmem:[%s315 + $0x338] sm:$0xff]
        %v3799 = vld [vmem:[%s315 + $0x340] sm:$0xff]
        %v3800 = vld [vmem:[%s315 + $0x348] sm:$0xff]
        %v3801 = vld [vmem:[%s315 + $0x350] sm:$0xff]
        %v3802 = vld [vmem:[%s315 + $0x358] sm:$0xff]
        %v3803 = vld [vmem:[%s315 + $0x360] sm:$0xff]
        %v3804 = vld [vmem:[%s315 + $0x368] sm:$0xff]
        %v3805 = vld [vmem:[%s315 + $0x370] sm:$0xff]
        %v3806 = vld [vmem:[%s315 + $0x378] sm:$0xff]
        %v3807 = vld [vmem:[%s315 + $0x380] sm:$0xff]
        %v3808 = vld [vmem:[%s315 + $0x388] sm:$0xff]
        %v3809 = vld [vmem:[%s315 + $0x390] sm:$0xff]
        %v3810 = vld [vmem:[%s315 + $0x398] sm:$0xff]
        %v3811 = vld [vmem:[%s315 + $0x3a0] sm:$0xff]
        %v3812 = vld [vmem:[%s315 + $0x3a8] sm:$0xff]
        %v3813 = vld [vmem:[%s315 + $0x3b0] sm:$0xff]
        %v3814 = vld [vmem:[%s315 + $0x3b8] sm:$0xff]
        %v3815 = vld [vmem:[%s315 + $0x3c0] sm:$0xff]
        %v3816 = vld [vmem:[%s315 + $0x3c8] sm:$0xff]
        %v3817 = vld [vmem:[%s315 + $0x3d0] sm:$0xff]
        %v3818 = vld [vmem:[%s315 + $0x3d8] sm:$0xff]
        %v3819 = vld [vmem:[%s315 + $0x3e0] sm:$0xff]
        %v3820 = vld [vmem:[%s315 + $0x3e8] sm:$0xff]
        %v3821 = vld [vmem:[%s315 + $0x3f0] sm:$0xff]
        %v3822 = vld [vmem:[%s315 + $0x3f8] sm:$0xff]
        %s3823 = scalar_lea.vmem %s359, 7
        %v3824 = vld [vmem:[%s3823] ss:$8 sm:$0xf]
        %v3826 = vperm.slane %v3824, 0
        %v3827 = vperm.slane %v3824, 1
        %v3828 = vperm.slane %v3824, 2
        %v3829 = vperm.slane %v3824, 3
        %v3962 = vunpack.c.l.b16 %v3695
        %v3963 = vunpack.c.h.b16 %v3695
        %v3964 = vunpack.c.l.b16 %v3696
        %v3965 = vunpack.c.h.b16 %v3696
        %v3966 = vunpack.c.l.b16 %v3697
        %v3967 = vunpack.c.h.b16 %v3697
        %v3968 = vunpack.c.l.b16 %v3698
        %v3969 = vunpack.c.h.b16 %v3698
        %v3970 = vunpack.c.l.b16 %v3699
        %v3971 = vunpack.c.h.b16 %v3699
        %v3972 = vunpack.c.l.b16 %v3700
        %v3973 = vunpack.c.h.b16 %v3700
        %v3974 = vunpack.c.l.b16 %v3701
        %v3975 = vunpack.c.h.b16 %v3701
        %v3976 = vunpack.c.l.b16 %v3702
        %v3977 = vunpack.c.h.b16 %v3702
        %v3978 = vunpack.c.l.b16 %v3703
        %v3979 = vunpack.c.h.b16 %v3703
        %v3980 = vunpack.c.l.b16 %v3704
        %v3981 = vunpack.c.h.b16 %v3704
        %v3982 = vunpack.c.l.b16 %v3705
        %v3983 = vunpack.c.h.b16 %v3705
        %v3984 = vunpack.c.l.b16 %v3706
        %v3985 = vunpack.c.h.b16 %v3706
        %v3986 = vunpack.c.l.b16 %v3707
        %v3987 = vunpack.c.h.b16 %v3707
        %v3988 = vunpack.c.l.b16 %v3708
        %v3989 = vunpack.c.h.b16 %v3708
        %v3990 = vunpack.c.l.b16 %v3709
        %v3991 = vunpack.c.h.b16 %v3709
        %v3992 = vunpack.c.l.b16 %v3710
        %v3993 = vunpack.c.h.b16 %v3710
        %v3994 = vunpack.c.l.b16 %v3711
        %v3995 = vunpack.c.h.b16 %v3711
        %v3996 = vunpack.c.l.b16 %v3712
        %v3997 = vunpack.c.h.b16 %v3712
        %v3998 = vunpack.c.l.b16 %v3713
        %v3999 = vunpack.c.h.b16 %v3713
        %v4000 = vunpack.c.l.b16 %v3714
        %v4001 = vunpack.c.h.b16 %v3714
        %v4002 = vunpack.c.l.b16 %v3715
        %v4003 = vunpack.c.h.b16 %v3715
        %v4004 = vunpack.c.l.b16 %v3716
        %v4005 = vunpack.c.h.b16 %v3716
        %v4006 = vunpack.c.l.b16 %v3717
        %v4007 = vunpack.c.h.b16 %v3717
        %v4008 = vunpack.c.l.b16 %v3718
        %v4009 = vunpack.c.h.b16 %v3718
        %v4010 = vunpack.c.l.b16 %v3719
        %v4011 = vunpack.c.h.b16 %v3719
        %v4012 = vunpack.c.l.b16 %v3720
        %v4013 = vunpack.c.h.b16 %v3720
        %v4014 = vunpack.c.l.b16 %v3721
        %v4015 = vunpack.c.h.b16 %v3721
        %v4016 = vunpack.c.l.b16 %v3722
        %v4017 = vunpack.c.h.b16 %v3722
        %v4018 = vunpack.c.l.b16 %v3723
        %v4019 = vunpack.c.h.b16 %v3723
        %v4020 = vunpack.c.l.b16 %v3724
        %v4021 = vunpack.c.h.b16 %v3724
        %v4022 = vunpack.c.l.b16 %v3725
        %v4023 = vunpack.c.h.b16 %v3725
        %v4024 = vunpack.c.l.b16 %v3726
        %v4025 = vunpack.c.h.b16 %v3726
        %v4026 = vunpack.c.l.b16 %v3727
        %v4027 = vunpack.c.h.b16 %v3727
        %v4028 = vunpack.c.l.b16 %v3728
        %v4029 = vunpack.c.h.b16 %v3728
        %v4030 = vunpack.c.l.b16 %v3729
        %v4031 = vunpack.c.h.b16 %v3729
        %v4032 = vunpack.c.l.b16 %v3730
        %v4033 = vunpack.c.h.b16 %v3730
        %v4034 = vunpack.c.l.b16 %v3731
        %v4035 = vunpack.c.h.b16 %v3731
        %v4036 = vunpack.c.l.b16 %v3732
        %v4037 = vunpack.c.h.b16 %v3732
        %v4038 = vunpack.c.l.b16 %v3733
        %v4039 = vunpack.c.h.b16 %v3733
        %v4040 = vunpack.c.l.b16 %v3734
        %v4041 = vunpack.c.h.b16 %v3734
        %v4042 = vunpack.c.l.b16 %v3735
        %v4043 = vunpack.c.h.b16 %v3735
        %v4044 = vunpack.c.l.b16 %v3736
        %v4045 = vunpack.c.h.b16 %v3736
        %v4046 = vunpack.c.l.b16 %v3737
        %v4047 = vunpack.c.h.b16 %v3737
        %v4048 = vunpack.c.l.b16 %v3738
        %v4049 = vunpack.c.h.b16 %v3738
        %v4050 = vunpack.c.l.b16 %v3739
        %v4051 = vunpack.c.h.b16 %v3739
        %v4052 = vunpack.c.l.b16 %v3740
        %v4053 = vunpack.c.h.b16 %v3740
        %v4054 = vunpack.c.l.b16 %v3741
        %v4055 = vunpack.c.h.b16 %v3741
        %v4056 = vunpack.c.l.b16 %v3742
        %v4057 = vunpack.c.h.b16 %v3742
        %v4058 = vunpack.c.l.b16 %v3743
        %v4059 = vunpack.c.h.b16 %v3743
        %v4060 = vunpack.c.l.b16 %v3744
        %v4061 = vunpack.c.h.b16 %v3744
        %v4062 = vunpack.c.l.b16 %v3745
        %v4063 = vunpack.c.h.b16 %v3745
        %v4064 = vunpack.c.l.b16 %v3746
        %v4065 = vunpack.c.h.b16 %v3746
        %v4066 = vunpack.c.l.b16 %v3747
        %v4067 = vunpack.c.h.b16 %v3747
        %v4068 = vunpack.c.l.b16 %v3748
        %v4069 = vunpack.c.h.b16 %v3748
        %v4070 = vunpack.c.l.b16 %v3749
        %v4071 = vunpack.c.h.b16 %v3749
        %v4072 = vunpack.c.l.b16 %v3750
        %v4073 = vunpack.c.h.b16 %v3750
        %v4074 = vunpack.c.l.b16 %v3751
        %v4075 = vunpack.c.h.b16 %v3751
        %v4076 = vunpack.c.l.b16 %v3752
        %v4077 = vunpack.c.h.b16 %v3752
        %v4078 = vunpack.c.l.b16 %v3753
        %v4079 = vunpack.c.h.b16 %v3753
        %v4080 = vunpack.c.l.b16 %v3754
        %v4081 = vunpack.c.h.b16 %v3754
        %v4082 = vunpack.c.l.b16 %v3755
        %v4083 = vunpack.c.h.b16 %v3755
        %v4084 = vunpack.c.l.b16 %v3756
        %v4085 = vunpack.c.h.b16 %v3756
        %v4086 = vunpack.c.l.b16 %v3757
        %v4087 = vunpack.c.h.b16 %v3757
        %v4088 = vunpack.c.l.b16 %v3758
        %v4089 = vunpack.c.h.b16 %v3758
        %v4090 = vunpack.c.l.b16 %v3759
        %v4091 = vunpack.c.h.b16 %v3759
        %v4092 = vunpack.c.l.b16 %v3760
        %v4093 = vunpack.c.h.b16 %v3760
        %v4094 = vunpack.c.l.b16 %v3761
        %v4095 = vunpack.c.h.b16 %v3761
        %v4096 = vunpack.c.l.b16 %v3762
        %v4097 = vunpack.c.h.b16 %v3762
        %v4098 = vunpack.c.l.b16 %v3763
        %v4099 = vunpack.c.h.b16 %v3763
        %v4100 = vunpack.c.l.b16 %v3764
        %v4101 = vunpack.c.h.b16 %v3764
        %v4102 = vunpack.c.l.b16 %v3765
        %v4103 = vunpack.c.h.b16 %v3765
        %v4104 = vunpack.c.l.b16 %v3766
        %v4105 = vunpack.c.h.b16 %v3766
        %v4106 = vunpack.c.l.b16 %v3767
        %v4107 = vunpack.c.h.b16 %v3767
        %v4108 = vunpack.c.l.b16 %v3768
        %v4109 = vunpack.c.h.b16 %v3768
        %v4110 = vunpack.c.l.b16 %v3769
        %v4111 = vunpack.c.h.b16 %v3769
        %v4112 = vunpack.c.l.b16 %v3770
        %v4113 = vunpack.c.h.b16 %v3770
        %v4114 = vunpack.c.l.b16 %v3771
        %v4115 = vunpack.c.h.b16 %v3771
        %v4116 = vunpack.c.l.b16 %v3772
        %v4117 = vunpack.c.h.b16 %v3772
        %v4118 = vunpack.c.l.b16 %v3773
        %v4119 = vunpack.c.h.b16 %v3773
        %v4120 = vunpack.c.l.b16 %v3774
        %v4121 = vunpack.c.h.b16 %v3774
        %v4122 = vunpack.c.l.b16 %v3775
        %v4123 = vunpack.c.h.b16 %v3775
        %v4124 = vunpack.c.l.b16 %v3776
        %v4125 = vunpack.c.h.b16 %v3776
        %v4126 = vunpack.c.l.b16 %v3777
        %v4127 = vunpack.c.h.b16 %v3777
        %v4128 = vunpack.c.l.b16 %v3778
        %v4129 = vunpack.c.h.b16 %v3778
        %v4130 = vunpack.c.l.b16 %v3779
        %v4131 = vunpack.c.h.b16 %v3779
        %v4132 = vunpack.c.l.b16 %v3780
        %v4133 = vunpack.c.h.b16 %v3780
        %v4134 = vunpack.c.l.b16 %v3781
        %v4135 = vunpack.c.h.b16 %v3781
        %v4136 = vunpack.c.l.b16 %v3782
        %v4137 = vunpack.c.h.b16 %v3782
        %v4138 = vunpack.c.l.b16 %v3783
        %v4139 = vunpack.c.h.b16 %v3783
        %v4140 = vunpack.c.l.b16 %v3784
        %v4141 = vunpack.c.h.b16 %v3784
        %v4142 = vunpack.c.l.b16 %v3785
        %v4143 = vunpack.c.h.b16 %v3785
        %v4144 = vunpack.c.l.b16 %v3786
        %v4145 = vunpack.c.h.b16 %v3786
        %v4146 = vunpack.c.l.b16 %v3787
        %v4147 = vunpack.c.h.b16 %v3787
        %v4148 = vunpack.c.l.b16 %v3788
        %v4149 = vunpack.c.h.b16 %v3788
        %v4150 = vunpack.c.l.b16 %v3789
        %v4151 = vunpack.c.h.b16 %v3789
        %v4152 = vunpack.c.l.b16 %v3790
        %v4153 = vunpack.c.h.b16 %v3790
        %v4154 = vunpack.c.l.b16 %v3791
        %v4155 = vunpack.c.h.b16 %v3791
        %v4156 = vunpack.c.l.b16 %v3792
        %v4157 = vunpack.c.h.b16 %v3792
        %v4158 = vunpack.c.l.b16 %v3793
        %v4159 = vunpack.c.h.b16 %v3793
        %v4160 = vunpack.c.l.b16 %v3794
        %v4161 = vunpack.c.h.b16 %v3794
        %v4162 = vunpack.c.l.b16 %v3795
        %v4163 = vunpack.c.h.b16 %v3795
        %v4164 = vunpack.c.l.b16 %v3796
        %v4165 = vunpack.c.h.b16 %v3796
        %v4166 = vunpack.c.l.b16 %v3797
        %v4167 = vunpack.c.h.b16 %v3797
        %v4168 = vunpack.c.l.b16 %v3798
        %v4169 = vunpack.c.h.b16 %v3798
        %v4170 = vunpack.c.l.b16 %v3799
        %v4171 = vunpack.c.h.b16 %v3799
        %v4172 = vunpack.c.l.b16 %v3800
        %v4173 = vunpack.c.h.b16 %v3800
        %v4174 = vunpack.c.l.b16 %v3801
        %v4175 = vunpack.c.h.b16 %v3801
        %v4176 = vunpack.c.l.b16 %v3802
        %v4177 = vunpack.c.h.b16 %v3802
        %v4178 = vunpack.c.l.b16 %v3803
        %v4179 = vunpack.c.h.b16 %v3803
        %v4180 = vunpack.c.l.b16 %v3804
        %v4181 = vunpack.c.h.b16 %v3804
        %v4182 = vunpack.c.l.b16 %v3805
        %v4183 = vunpack.c.h.b16 %v3805
        %v4184 = vunpack.c.l.b16 %v3806
        %v4185 = vunpack.c.h.b16 %v3806
        %v4186 = vunpack.c.l.b16 %v3807
        %v4187 = vunpack.c.h.b16 %v3807
        %v4188 = vunpack.c.l.b16 %v3808
        %v4189 = vunpack.c.h.b16 %v3808
        %v4190 = vunpack.c.l.b16 %v3809
        %v4191 = vunpack.c.h.b16 %v3809
        %v4192 = vunpack.c.l.b16 %v3810
        %v4193 = vunpack.c.h.b16 %v3810
        %v4194 = vunpack.c.l.b16 %v3811
        %v4195 = vunpack.c.h.b16 %v3811
        %v4196 = vunpack.c.l.b16 %v3812
        %v4197 = vunpack.c.h.b16 %v3812
        %v4198 = vunpack.c.l.b16 %v3813
        %v4199 = vunpack.c.h.b16 %v3813
        %v4200 = vunpack.c.l.b16 %v3814
        %v4201 = vunpack.c.h.b16 %v3814
        %v4202 = vunpack.c.l.b16 %v3815
        %v4203 = vunpack.c.h.b16 %v3815
        %v4204 = vunpack.c.l.b16 %v3816
        %v4205 = vunpack.c.h.b16 %v3816
        %v4206 = vunpack.c.l.b16 %v3817
        %v4207 = vunpack.c.h.b16 %v3817
        %v4208 = vunpack.c.l.b16 %v3818
        %v4209 = vunpack.c.h.b16 %v3818
        %v4210 = vunpack.c.l.b16 %v3819
        %v4211 = vunpack.c.h.b16 %v3819
        %v4212 = vunpack.c.l.b16 %v3820
        %v4213 = vunpack.c.h.b16 %v3820
        %v4214 = vunpack.c.l.b16 %v3821
        %v4215 = vunpack.c.h.b16 %v3821
        %v4216 = vunpack.c.l.b16 %v3822
        %v4217 = vunpack.c.h.b16 %v3822
        %v4218 = vpack.c.b16 %v3966, %v3962
        %v4219 = vpack.c.b16 %v3967, %v3963
        %v4220 = vpack.c.b16 %v3968, %v3964
        %v4221 = vpack.c.b16 %v3969, %v3965
        %v4222 = vpack.c.b16 %v3974, %v3970
        %v4223 = vpack.c.b16 %v3975, %v3971
        %v4224 = vpack.c.b16 %v3976, %v3972
        %v4225 = vpack.c.b16 %v3977, %v3973
        %v4226 = vpack.c.b16 %v3982, %v3978
        %v4227 = vpack.c.b16 %v3983, %v3979
        %v4228 = vpack.c.b16 %v3984, %v3980
        %v4229 = vpack.c.b16 %v3985, %v3981
        %v4230 = vpack.c.b16 %v3990, %v3986
        %v4231 = vpack.c.b16 %v3991, %v3987
        %v4232 = vpack.c.b16 %v3992, %v3988
        %v4233 = vpack.c.b16 %v3993, %v3989
        %v4234 = vpack.c.b16 %v3998, %v3994
        %v4235 = vpack.c.b16 %v3999, %v3995
        %v4236 = vpack.c.b16 %v4000, %v3996
        %v4237 = vpack.c.b16 %v4001, %v3997
        %v4238 = vpack.c.b16 %v4006, %v4002
        %v4239 = vpack.c.b16 %v4007, %v4003
        %v4240 = vpack.c.b16 %v4008, %v4004
        %v4241 = vpack.c.b16 %v4009, %v4005
        %v4242 = vpack.c.b16 %v4014, %v4010
        %v4243 = vpack.c.b16 %v4015, %v4011
        %v4244 = vpack.c.b16 %v4016, %v4012
        %v4245 = vpack.c.b16 %v4017, %v4013
        %v4246 = vpack.c.b16 %v4022, %v4018
        %v4247 = vpack.c.b16 %v4023, %v4019
        %v4248 = vpack.c.b16 %v4024, %v4020
        %v4249 = vpack.c.b16 %v4025, %v4021
        %v4250 = vpack.c.b16 %v4030, %v4026
        %v4251 = vpack.c.b16 %v4031, %v4027
        %v4252 = vpack.c.b16 %v4032, %v4028
        %v4253 = vpack.c.b16 %v4033, %v4029
        %v4254 = vpack.c.b16 %v4038, %v4034
        %v4255 = vpack.c.b16 %v4039, %v4035
        %v4256 = vpack.c.b16 %v4040, %v4036
        %v4257 = vpack.c.b16 %v4041, %v4037
        %v4258 = vpack.c.b16 %v4046, %v4042
        %v4259 = vpack.c.b16 %v4047, %v4043
        %v4260 = vpack.c.b16 %v4048, %v4044
        %v4261 = vpack.c.b16 %v4049, %v4045
        %v4262 = vpack.c.b16 %v4054, %v4050
        %v4263 = vpack.c.b16 %v4055, %v4051
        %v4264 = vpack.c.b16 %v4056, %v4052
        %v4265 = vpack.c.b16 %v4057, %v4053
        %v4266 = vpack.c.b16 %v4062, %v4058
        %v4267 = vpack.c.b16 %v4063, %v4059
        %v4268 = vpack.c.b16 %v4064, %v4060
        %v4269 = vpack.c.b16 %v4065, %v4061
        %v4270 = vpack.c.b16 %v4070, %v4066
        %v4271 = vpack.c.b16 %v4071, %v4067
        %v4272 = vpack.c.b16 %v4072, %v4068
        %v4273 = vpack.c.b16 %v4073, %v4069
        %v4274 = vpack.c.b16 %v4078, %v4074
        %v4275 = vpack.c.b16 %v4079, %v4075
        %v4276 = vpack.c.b16 %v4080, %v4076
        %v4277 = vpack.c.b16 %v4081, %v4077
        %v4278 = vpack.c.b16 %v4086, %v4082
        %v4279 = vpack.c.b16 %v4087, %v4083
        %v4280 = vpack.c.b16 %v4088, %v4084
        %v4281 = vpack.c.b16 %v4089, %v4085
        %v4282 = vpack.c.b16 %v4094, %v4090
        %v4283 = vpack.c.b16 %v4095, %v4091
        %v4284 = vpack.c.b16 %v4096, %v4092
        %v4285 = vpack.c.b16 %v4097, %v4093
        %v4286 = vpack.c.b16 %v4102, %v4098
        %v4287 = vpack.c.b16 %v4103, %v4099
        %v4288 = vpack.c.b16 %v4104, %v4100
        %v4289 = vpack.c.b16 %v4105, %v4101
        %v4290 = vpack.c.b16 %v4110, %v4106
        %v4291 = vpack.c.b16 %v4111, %v4107
        %v4292 = vpack.c.b16 %v4112, %v4108
        %v4293 = vpack.c.b16 %v4113, %v4109
        %v4294 = vpack.c.b16 %v4118, %v4114
        %v4295 = vpack.c.b16 %v4119, %v4115
        %v4296 = vpack.c.b16 %v4120, %v4116
        %v4297 = vpack.c.b16 %v4121, %v4117
        %v4298 = vpack.c.b16 %v4126, %v4122
        %v4299 = vpack.c.b16 %v4127, %v4123
        %v4300 = vpack.c.b16 %v4128, %v4124
        %v4301 = vpack.c.b16 %v4129, %v4125
        %v4302 = vpack.c.b16 %v4134, %v4130
        %v4303 = vpack.c.b16 %v4135, %v4131
        %v4304 = vpack.c.b16 %v4136, %v4132
        %v4305 = vpack.c.b16 %v4137, %v4133
        %v4306 = vpack.c.b16 %v4142, %v4138
        %v4307 = vpack.c.b16 %v4143, %v4139
        %v4308 = vpack.c.b16 %v4144, %v4140
        %v4309 = vpack.c.b16 %v4145, %v4141
        %v4310 = vpack.c.b16 %v4150, %v4146
        %v4311 = vpack.c.b16 %v4151, %v4147
        %v4312 = vpack.c.b16 %v4152, %v4148
        %v4313 = vpack.c.b16 %v4153, %v4149
        %v4314 = vpack.c.b16 %v4158, %v4154
        %v4315 = vpack.c.b16 %v4159, %v4155
        %v4316 = vpack.c.b16 %v4160, %v4156
        %v4317 = vpack.c.b16 %v4161, %v4157
        %v4318 = vpack.c.b16 %v4166, %v4162
        %v4319 = vpack.c.b16 %v4167, %v4163
        %v4320 = vpack.c.b16 %v4168, %v4164
        %v4321 = vpack.c.b16 %v4169, %v4165
        %v4322 = vpack.c.b16 %v4174, %v4170
        %v4323 = vpack.c.b16 %v4175, %v4171
        %v4324 = vpack.c.b16 %v4176, %v4172
        %v4325 = vpack.c.b16 %v4177, %v4173
        %v4326 = vpack.c.b16 %v4182, %v4178
        %v4327 = vpack.c.b16 %v4183, %v4179
        %v4328 = vpack.c.b16 %v4184, %v4180
        %v4329 = vpack.c.b16 %v4185, %v4181
        %v4330 = vpack.c.b16 %v4190, %v4186
        %v4331 = vpack.c.b16 %v4191, %v4187
        %v4332 = vpack.c.b16 %v4192, %v4188
        %v4333 = vpack.c.b16 %v4193, %v4189
        %v4334 = vpack.c.b16 %v4198, %v4194
        %v4335 = vpack.c.b16 %v4199, %v4195
        %v4336 = vpack.c.b16 %v4200, %v4196
        %v4337 = vpack.c.b16 %v4201, %v4197
        %v4338 = vpack.c.b16 %v4206, %v4202
        %v4339 = vpack.c.b16 %v4207, %v4203
        %v4340 = vpack.c.b16 %v4208, %v4204
        %v4341 = vpack.c.b16 %v4209, %v4205
        %v4342 = vpack.c.b16 %v4214, %v4210
        %v4343 = vpack.c.b16 %v4215, %v4211
        %v4344 = vpack.c.b16 %v4216, %v4212
        %v4345 = vpack.c.b16 %v4217, %v4213
        %4474 = vmatpush.bf16.msra.mxu0 %v4246
        %4475 = vmatpush.bf16.msra.mxu0 %v4242
        %4476 = vmatpush.bf16.msra.mxu0 %v4238
        %4477 = vmatpush.bf16.msra.mxu0 %v4234
        %4478 = vmatpush.bf16.msra.mxu0 %v4230
        %4479 = vmatpush.bf16.msra.mxu0 %v4226
        %4480 = vmatpush.bf16.msra.mxu0 %v4222
        %4481 = vmatpush.bf16.msra.mxu0 %v4218
        %4482 = vmatmul.bf16.gmra.mxu0 %v3595
        %v4483 = vpop.f32.mrf.mxu0
        %v4484 = vadd.f32 %v3826, %v4483
        %v4485 = vpop.f32.mrf.mxu0
        %4486 = vdwg.mxu0
        %4487 = vmatpush.bf16.msra.mxu0 %v4278
        %4488 = vmatpush.bf16.msra.mxu0 %v4274
        %4489 = vmatpush.bf16.msra.mxu0 %v4270
        %4490 = vmatpush.bf16.msra.mxu0 %v4266
        %4491 = vmatpush.bf16.msra.mxu0 %v4262
        %4492 = vmatpush.bf16.msra.mxu0 %v4258
        %4493 = vmatpush.bf16.msra.mxu0 %v4254
        %4494 = vmatpush.bf16.msra.mxu0 %v4250
        %4495 = vmatmul.bf16.gmra.mxu0 %v3596
        %v4496 = vpop.f32.mrf.mxu0
        %v4497 = vadd.f32 %v4484, %v4496
        %v4498 = vpop.f32.mrf.mxu0
        %4499 = vdwg.mxu0
        %4500 = vmatpush.bf16.msra.mxu0 %v4310
        %4501 = vmatpush.bf16.msra.mxu0 %v4306
        %4502 = vmatpush.bf16.msra.mxu0 %v4302
        %4503 = vmatpush.bf16.msra.mxu0 %v4298
        %4504 = vmatpush.bf16.msra.mxu0 %v4294
        %4505 = vmatpush.bf16.msra.mxu0 %v4290
        %4506 = vmatpush.bf16.msra.mxu0 %v4286
        %4507 = vmatpush.bf16.msra.mxu0 %v4282
        %4508 = vmatmul.bf16.gmra.mxu0 %v3597
        %v4509 = vpop.f32.mrf.mxu0
        %v4510 = vadd.f32 %v4497, %v4509
        %v4511 = vpop.f32.mrf.mxu0
        %4512 = vdwg.mxu0
        %4513 = vmatpush.bf16.msra.mxu0 %v4342
        %4514 = vmatpush.bf16.msra.mxu0 %v4338
        %4515 = vmatpush.bf16.msra.mxu0 %v4334
        %4516 = vmatpush.bf16.msra.mxu0 %v4330
        %4517 = vmatpush.bf16.msra.mxu0 %v4326
        %4518 = vmatpush.bf16.msra.mxu0 %v4322
        %4519 = vmatpush.bf16.msra.mxu0 %v4318
        %4520 = vmatpush.bf16.msra.mxu0 %v4314
        %4521 = vmatmul.bf16.gmra.mxu0 %v3598
        %v4522 = vpop.f32.mrf.mxu0
        %v4523 = vadd.f32 %v4510, %v4522
        %v4524 = vpop.f32.mrf.mxu0
        %4525 = vdwg.mxu0
        %4526 = vmatpush.bf16.msra.mxu0 %v4247
        %4527 = vmatpush.bf16.msra.mxu0 %v4243
        %4528 = vmatpush.bf16.msra.mxu0 %v4239
        %4529 = vmatpush.bf16.msra.mxu0 %v4235
        %4530 = vmatpush.bf16.msra.mxu0 %v4231
        %4531 = vmatpush.bf16.msra.mxu0 %v4227
        %4532 = vmatpush.bf16.msra.mxu0 %v4223
        %4533 = vmatpush.bf16.msra.mxu0 %v4219
        %4534 = vmatmul.bf16.gmra.mxu0 %v3595
        %v4535 = vpop.f32.mrf.mxu0
        %v4536 = vadd.f32 %v3827, %v4535
        %v4537 = vpop.f32.mrf.mxu0
        %4538 = vdwg.mxu0
        %4539 = vmatpush.bf16.msra.mxu0 %v4279
        %4540 = vmatpush.bf16.msra.mxu0 %v4275
        %4541 = vmatpush.bf16.msra.mxu0 %v4271
        %4542 = vmatpush.bf16.msra.mxu0 %v4267
        %4543 = vmatpush.bf16.msra.mxu0 %v4263
        %4544 = vmatpush.bf16.msra.mxu0 %v4259
        %4545 = vmatpush.bf16.msra.mxu0 %v4255
        %4546 = vmatpush.bf16.msra.mxu0 %v4251
        %4547 = vmatmul.bf16.gmra.mxu0 %v3596
        %v4548 = vpop.f32.mrf.mxu0
        %v4549 = vadd.f32 %v4536, %v4548
        %v4550 = vpop.f32.mrf.mxu0
        %4551 = vdwg.mxu0
        %4552 = vmatpush.bf16.msra.mxu0 %v4311
        %4553 = vmatpush.bf16.msra.mxu0 %v4307
        %4554 = vmatpush.bf16.msra.mxu0 %v4303
        %4555 = vmatpush.bf16.msra.mxu0 %v4299
        %4556 = vmatpush.bf16.msra.mxu0 %v4295
        %4557 = vmatpush.bf16.msra.mxu0 %v4291
        %4558 = vmatpush.bf16.msra.mxu0 %v4287
        %4559 = vmatpush.bf16.msra.mxu0 %v4283
        %4560 = vmatmul.bf16.gmra.mxu0 %v3597
        %v4561 = vpop.f32.mrf.mxu0
        %v4562 = vadd.f32 %v4549, %v4561
        %v4563 = vpop.f32.mrf.mxu0
        %4564 = vdwg.mxu0
        %4565 = vmatpush.bf16.msra.mxu0 %v4343
        %4566 = vmatpush.bf16.msra.mxu0 %v4339
        %4567 = vmatpush.bf16.msra.mxu0 %v4335
        %4568 = vmatpush.bf16.msra.mxu0 %v4331
        %4569 = vmatpush.bf16.msra.mxu0 %v4327
        %4570 = vmatpush.bf16.msra.mxu0 %v4323
        %4571 = vmatpush.bf16.msra.mxu0 %v4319
        %4572 = vmatpush.bf16.msra.mxu0 %v4315
        %4573 = vmatmul.bf16.gmra.mxu0 %v3598
        %v4574 = vpop.f32.mrf.mxu0
        %v4575 = vadd.f32 %v4562, %v4574
        %v4576 = vpop.f32.mrf.mxu0
        %4577 = vdwg.mxu0
        %4578 = vmatpush.bf16.msra.mxu0 %v4248
        %4579 = vmatpush.bf16.msra.mxu0 %v4244
        %4580 = vmatpush.bf16.msra.mxu0 %v4240
        %4581 = vmatpush.bf16.msra.mxu0 %v4236
        %4582 = vmatpush.bf16.msra.mxu0 %v4232
        %4583 = vmatpush.bf16.msra.mxu0 %v4228
        %4584 = vmatpush.bf16.msra.mxu0 %v4224
        %4585 = vmatpush.bf16.msra.mxu0 %v4220
        %4586 = vmatmul.bf16.gmra.mxu0 %v3595
        %v4587 = vpop.f32.mrf.mxu0
        %v4588 = vadd.f32 %v3828, %v4587
        %v4589 = vpop.f32.mrf.mxu0
        %4590 = vdwg.mxu0
        %4591 = vmatpush.bf16.msra.mxu0 %v4280
        %4592 = vmatpush.bf16.msra.mxu0 %v4276
        %4593 = vmatpush.bf16.msra.mxu0 %v4272
        %4594 = vmatpush.bf16.msra.mxu0 %v4268
        %4595 = vmatpush.bf16.msra.mxu0 %v4264
        %4596 = vmatpush.bf16.msra.mxu0 %v4260
        %4597 = vmatpush.bf16.msra.mxu0 %v4256
        %4598 = vmatpush.bf16.msra.mxu0 %v4252
        %4599 = vmatmul.bf16.gmra.mxu0 %v3596
        %v4600 = vpop.f32.mrf.mxu0
        %v4601 = vadd.f32 %v4588, %v4600
        %v4602 = vpop.f32.mrf.mxu0
        %4603 = vdwg.mxu0
        %4604 = vmatpush.bf16.msra.mxu0 %v4312
        %4605 = vmatpush.bf16.msra.mxu0 %v4308
        %4606 = vmatpush.bf16.msra.mxu0 %v4304
        %4607 = vmatpush.bf16.msra.mxu0 %v4300
        %4608 = vmatpush.bf16.msra.mxu0 %v4296
        %4609 = vmatpush.bf16.msra.mxu0 %v4292
        %4610 = vmatpush.bf16.msra.mxu0 %v4288
        %4611 = vmatpush.bf16.msra.mxu0 %v4284
        %4612 = vmatmul.bf16.gmra.mxu0 %v3597
        %v4613 = vpop.f32.mrf.mxu0
        %v4614 = vadd.f32 %v4601, %v4613
        %v4615 = vpop.f32.mrf.mxu0
        %4616 = vdwg.mxu0
        %4617 = vmatpush.bf16.msra.mxu0 %v4344
        %4618 = vmatpush.bf16.msra.mxu0 %v4340
        %4619 = vmatpush.bf16.msra.mxu0 %v4336
        %4620 = vmatpush.bf16.msra.mxu0 %v4332
        %4621 = vmatpush.bf16.msra.mxu0 %v4328
        %4622 = vmatpush.bf16.msra.mxu0 %v4324
        %4623 = vmatpush.bf16.msra.mxu0 %v4320
        %4624 = vmatpush.bf16.msra.mxu0 %v4316
        %4625 = vmatmul.bf16.gmra.mxu0 %v3598
        %v4626 = vpop.f32.mrf.mxu0
        %v4627 = vadd.f32 %v4614, %v4626
        %v4628 = vpop.f32.mrf.mxu0
        %4629 = vdwg.mxu0
        %4630 = vmatpush.bf16.msra.mxu0 %v4249
        %4631 = vmatpush.bf16.msra.mxu0 %v4245
        %4632 = vmatpush.bf16.msra.mxu0 %v4241
        %4633 = vmatpush.bf16.msra.mxu0 %v4237
        %4634 = vmatpush.bf16.msra.mxu0 %v4233
        %4635 = vmatpush.bf16.msra.mxu0 %v4229
        %4636 = vmatpush.bf16.msra.mxu0 %v4225
        %4637 = vmatpush.bf16.msra.mxu0 %v4221
        %4638 = vmatmul.bf16.gmra.mxu0 %v3595
        %v4639 = vpop.f32.mrf.mxu0
        %v4640 = vadd.f32 %v3829, %v4639
        %v4641 = vpop.f32.mrf.mxu0
        %4642 = vdwg.mxu0
        %4643 = vmatpush.bf16.msra.mxu0 %v4281
        %4644 = vmatpush.bf16.msra.mxu0 %v4277
        %4645 = vmatpush.bf16.msra.mxu0 %v4273
        %4646 = vmatpush.bf16.msra.mxu0 %v4269
        %4647 = vmatpush.bf16.msra.mxu0 %v4265
        %4648 = vmatpush.bf16.msra.mxu0 %v4261
        %4649 = vmatpush.bf16.msra.mxu0 %v4257
        %4650 = vmatpush.bf16.msra.mxu0 %v4253
        %4651 = vmatmul.bf16.gmra.mxu0 %v3596
        %v4652 = vpop.f32.mrf.mxu0
        %v4653 = vadd.f32 %v4640, %v4652
        %v4654 = vpop.f32.mrf.mxu0
        %4655 = vdwg.mxu0
        %4656 = vmatpush.bf16.msra.mxu0 %v4313
        %4657 = vmatpush.bf16.msra.mxu0 %v4309
        %4658 = vmatpush.bf16.msra.mxu0 %v4305
        %4659 = vmatpush.bf16.msra.mxu0 %v4301
        %4660 = vmatpush.bf16.msra.mxu0 %v4297
        %4661 = vmatpush.bf16.msra.mxu0 %v4293
        %4662 = vmatpush.bf16.msra.mxu0 %v4289
        %4663 = vmatpush.bf16.msra.mxu0 %v4285
        %4664 = vmatmul.bf16.gmra.mxu0 %v3597
        %v4665 = vpop.f32.mrf.mxu0
        %v4666 = vadd.f32 %v4653, %v4665
        %v4667 = vpop.f32.mrf.mxu0
        %4668 = vdwg.mxu0
        %4669 = vmatpush.bf16.msra.mxu0 %v4345
        %4670 = vmatpush.bf16.msra.mxu0 %v4341
        %4671 = vmatpush.bf16.msra.mxu0 %v4337
        %4672 = vmatpush.bf16.msra.mxu0 %v4333
        %4673 = vmatpush.bf16.msra.mxu0 %v4329
        %4674 = vmatpush.bf16.msra.mxu0 %v4325
        %4675 = vmatpush.bf16.msra.mxu0 %v4321
        %4676 = vmatpush.bf16.msra.mxu0 %v4317
        %4677 = vmatmul.bf16.gmra.mxu0 %v3598
        %v4678 = vpop.f32.mrf.mxu0
        %v4679 = vadd.f32 %v4666, %v4678
        %v4680 = vpop.f32.mrf.mxu0
        %4681 = vdwg.mxu0
        %v4682 = vld [vmem:[%s315 + $0x400] sm:$0xff]
        %v4683 = vld [vmem:[%s315 + $0x408] sm:$0xff]
        %v4684 = vld [vmem:[%s315 + $0x410] sm:$0xff]
        %v4685 = vld [vmem:[%s315 + $0x418] sm:$0xff]
        %v4686 = vld [vmem:[%s315 + $0x420] sm:$0xff]
        %v4687 = vld [vmem:[%s315 + $0x428] sm:$0xff]
        %v4688 = vld [vmem:[%s315 + $0x430] sm:$0xff]
        %v4689 = vld [vmem:[%s315 + $0x438] sm:$0xff]
        %v4690 = vld [vmem:[%s315 + $0x440] sm:$0xff]
        %v4691 = vld [vmem:[%s315 + $0x448] sm:$0xff]
        %v4692 = vld [vmem:[%s315 + $0x450] sm:$0xff]
        %v4693 = vld [vmem:[%s315 + $0x458] sm:$0xff]
        %v4694 = vld [vmem:[%s315 + $0x460] sm:$0xff]
        %v4695 = vld [vmem:[%s315 + $0x468] sm:$0xff]
        %v4696 = vld [vmem:[%s315 + $0x470] sm:$0xff]
        %v4697 = vld [vmem:[%s315 + $0x478] sm:$0xff]
        %v4698 = vld [vmem:[%s315 + $0x480] sm:$0xff]
        %v4699 = vld [vmem:[%s315 + $0x488] sm:$0xff]
        %v4700 = vld [vmem:[%s315 + $0x490] sm:$0xff]
        %v4701 = vld [vmem:[%s315 + $0x498] sm:$0xff]
        %v4702 = vld [vmem:[%s315 + $0x4a0] sm:$0xff]
        %v4703 = vld [vmem:[%s315 + $0x4a8] sm:$0xff]
        %v4704 = vld [vmem:[%s315 + $0x4b0] sm:$0xff]
        %v4705 = vld [vmem:[%s315 + $0x4b8] sm:$0xff]
        %v4706 = vld [vmem:[%s315 + $0x4c0] sm:$0xff]
        %v4707 = vld [vmem:[%s315 + $0x4c8] sm:$0xff]
        %v4708 = vld [vmem:[%s315 + $0x4d0] sm:$0xff]
        %v4709 = vld [vmem:[%s315 + $0x4d8] sm:$0xff]
        %v4710 = vld [vmem:[%s315 + $0x4e0] sm:$0xff]
        %v4711 = vld [vmem:[%s315 + $0x4e8] sm:$0xff]
        %v4712 = vld [vmem:[%s315 + $0x4f0] sm:$0xff]
        %v4713 = vld [vmem:[%s315 + $0x4f8] sm:$0xff]
        %v4714 = vld [vmem:[%s315 + $0x500] sm:$0xff]
        %v4715 = vld [vmem:[%s315 + $0x508] sm:$0xff]
        %v4716 = vld [vmem:[%s315 + $0x510] sm:$0xff]
        %v4717 = vld [vmem:[%s315 + $0x518] sm:$0xff]
        %v4718 = vld [vmem:[%s315 + $0x520] sm:$0xff]
        %v4719 = vld [vmem:[%s315 + $0x528] sm:$0xff]
        %v4720 = vld [vmem:[%s315 + $0x530] sm:$0xff]
        %v4721 = vld [vmem:[%s315 + $0x538] sm:$0xff]
        %v4722 = vld [vmem:[%s315 + $0x540] sm:$0xff]
        %v4723 = vld [vmem:[%s315 + $0x548] sm:$0xff]
        %v4724 = vld [vmem:[%s315 + $0x550] sm:$0xff]
        %v4725 = vld [vmem:[%s315 + $0x558] sm:$0xff]
        %v4726 = vld [vmem:[%s315 + $0x560] sm:$0xff]
        %v4727 = vld [vmem:[%s315 + $0x568] sm:$0xff]
        %v4728 = vld [vmem:[%s315 + $0x570] sm:$0xff]
        %v4729 = vld [vmem:[%s315 + $0x578] sm:$0xff]
        %v4730 = vld [vmem:[%s315 + $0x580] sm:$0xff]
        %v4731 = vld [vmem:[%s315 + $0x588] sm:$0xff]
        %v4732 = vld [vmem:[%s315 + $0x590] sm:$0xff]
        %v4733 = vld [vmem:[%s315 + $0x598] sm:$0xff]
        %v4734 = vld [vmem:[%s315 + $0x5a0] sm:$0xff]
        %v4735 = vld [vmem:[%s315 + $0x5a8] sm:$0xff]
        %v4736 = vld [vmem:[%s315 + $0x5b0] sm:$0xff]
        %v4737 = vld [vmem:[%s315 + $0x5b8] sm:$0xff]
        %v4738 = vld [vmem:[%s315 + $0x5c0] sm:$0xff]
        %v4739 = vld [vmem:[%s315 + $0x5c8] sm:$0xff]
        %v4740 = vld [vmem:[%s315 + $0x5d0] sm:$0xff]
        %v4741 = vld [vmem:[%s315 + $0x5d8] sm:$0xff]
        %v4742 = vld [vmem:[%s315 + $0x5e0] sm:$0xff]
        %v4743 = vld [vmem:[%s315 + $0x5e8] sm:$0xff]
        %v4744 = vld [vmem:[%s315 + $0x5f0] sm:$0xff]
        %v4745 = vld [vmem:[%s315 + $0x5f8] sm:$0xff]
        %v4746 = vld [vmem:[%s315 + $0x600] sm:$0xff]
        %v4747 = vld [vmem:[%s315 + $0x608] sm:$0xff]
        %v4748 = vld [vmem:[%s315 + $0x610] sm:$0xff]
        %v4749 = vld [vmem:[%s315 + $0x618] sm:$0xff]
        %v4750 = vld [vmem:[%s315 + $0x620] sm:$0xff]
        %v4751 = vld [vmem:[%s315 + $0x628] sm:$0xff]
        %v4752 = vld [vmem:[%s315 + $0x630] sm:$0xff]
        %v4753 = vld [vmem:[%s315 + $0x638] sm:$0xff]
        %v4754 = vld [vmem:[%s315 + $0x640] sm:$0xff]
        %v4755 = vld [vmem:[%s315 + $0x648] sm:$0xff]
        %v4756 = vld [vmem:[%s315 + $0x650] sm:$0xff]
        %v4757 = vld [vmem:[%s315 + $0x658] sm:$0xff]
        %v4758 = vld [vmem:[%s315 + $0x660] sm:$0xff]
        %v4759 = vld [vmem:[%s315 + $0x668] sm:$0xff]
        %v4760 = vld [vmem:[%s315 + $0x670] sm:$0xff]
        %v4761 = vld [vmem:[%s315 + $0x678] sm:$0xff]
        %v4762 = vld [vmem:[%s315 + $0x680] sm:$0xff]
        %v4763 = vld [vmem:[%s315 + $0x688] sm:$0xff]
        %v4764 = vld [vmem:[%s315 + $0x690] sm:$0xff]
        %v4765 = vld [vmem:[%s315 + $0x698] sm:$0xff]
        %v4766 = vld [vmem:[%s315 + $0x6a0] sm:$0xff]
        %v4767 = vld [vmem:[%s315 + $0x6a8] sm:$0xff]
        %v4768 = vld [vmem:[%s315 + $0x6b0] sm:$0xff]
        %v4769 = vld [vmem:[%s315 + $0x6b8] sm:$0xff]
        %v4770 = vld [vmem:[%s315 + $0x6c0] sm:$0xff]
        %v4771 = vld [vmem:[%s315 + $0x6c8] sm:$0xff]
        %v4772 = vld [vmem:[%s315 + $0x6d0] sm:$0xff]
        %v4773 = vld [vmem:[%s315 + $0x6d8] sm:$0xff]
        %v4774 = vld [vmem:[%s315 + $0x6e0] sm:$0xff]
        %v4775 = vld [vmem:[%s315 + $0x6e8] sm:$0xff]
        %v4776 = vld [vmem:[%s315 + $0x6f0] sm:$0xff]
        %v4777 = vld [vmem:[%s315 + $0x6f8] sm:$0xff]
        %v4778 = vld [vmem:[%s315 + $0x700] sm:$0xff]
        %v4779 = vld [vmem:[%s315 + $0x708] sm:$0xff]
        %v4780 = vld [vmem:[%s315 + $0x710] sm:$0xff]
        %v4781 = vld [vmem:[%s315 + $0x718] sm:$0xff]
        %v4782 = vld [vmem:[%s315 + $0x720] sm:$0xff]
        %v4783 = vld [vmem:[%s315 + $0x728] sm:$0xff]
        %v4784 = vld [vmem:[%s315 + $0x730] sm:$0xff]
        %v4785 = vld [vmem:[%s315 + $0x738] sm:$0xff]
        %v4786 = vld [vmem:[%s315 + $0x740] sm:$0xff]
        %v4787 = vld [vmem:[%s315 + $0x748] sm:$0xff]
        %v4788 = vld [vmem:[%s315 + $0x750] sm:$0xff]
        %v4789 = vld [vmem:[%s315 + $0x758] sm:$0xff]
        %v4790 = vld [vmem:[%s315 + $0x760] sm:$0xff]
        %v4791 = vld [vmem:[%s315 + $0x768] sm:$0xff]
        %v4792 = vld [vmem:[%s315 + $0x770] sm:$0xff]
        %v4793 = vld [vmem:[%s315 + $0x778] sm:$0xff]
        %v4794 = vld [vmem:[%s315 + $0x780] sm:$0xff]
        %v4795 = vld [vmem:[%s315 + $0x788] sm:$0xff]
        %v4796 = vld [vmem:[%s315 + $0x790] sm:$0xff]
        %v4797 = vld [vmem:[%s315 + $0x798] sm:$0xff]
        %v4798 = vld [vmem:[%s315 + $0x7a0] sm:$0xff]
        %v4799 = vld [vmem:[%s315 + $0x7a8] sm:$0xff]
        %v4800 = vld [vmem:[%s315 + $0x7b0] sm:$0xff]
        %v4801 = vld [vmem:[%s315 + $0x7b8] sm:$0xff]
        %v4802 = vld [vmem:[%s315 + $0x7c0] sm:$0xff]
        %v4803 = vld [vmem:[%s315 + $0x7c8] sm:$0xff]
        %v4804 = vld [vmem:[%s315 + $0x7d0] sm:$0xff]
        %v4805 = vld [vmem:[%s315 + $0x7d8] sm:$0xff]
        %v4806 = vld [vmem:[%s315 + $0x7e0] sm:$0xff]
        %v4807 = vld [vmem:[%s315 + $0x7e8] sm:$0xff]
        %v4808 = vld [vmem:[%s315 + $0x7f0] sm:$0xff]
        %v4809 = vld [vmem:[%s315 + $0x7f8] sm:$0xff]
        %s4810 = scalar_lea.vmem %s359, 32
        %v4811 = vld [vmem:[%s4810] ss:$8 sm:$0xf]
        %v4813 = vperm.slane %v4811, 0
        %v4814 = vperm.slane %v4811, 1
        %v4815 = vperm.slane %v4811, 2
        %v4816 = vperm.slane %v4811, 3
        %v4949 = vunpack.c.l.b16 %v4682
        %v4950 = vunpack.c.h.b16 %v4682
        %v4951 = vunpack.c.l.b16 %v4683
        %v4952 = vunpack.c.h.b16 %v4683
        %v4953 = vunpack.c.l.b16 %v4684
        %v4954 = vunpack.c.h.b16 %v4684
        %v4955 = vunpack.c.l.b16 %v4685
        %v4956 = vunpack.c.h.b16 %v4685
        %v4957 = vunpack.c.l.b16 %v4686
        %v4958 = vunpack.c.h.b16 %v4686
        %v4959 = vunpack.c.l.b16 %v4687
        %v4960 = vunpack.c.h.b16 %v4687
        %v4961 = vunpack.c.l.b16 %v4688
        %v4962 = vunpack.c.h.b16 %v4688
        %v4963 = vunpack.c.l.b16 %v4689
        %v4964 = vunpack.c.h.b16 %v4689
        %v4965 = vunpack.c.l.b16 %v4690
        %v4966 = vunpack.c.h.b16 %v4690
        %v4967 = vunpack.c.l.b16 %v4691
        %v4968 = vunpack.c.h.b16 %v4691
        %v4969 = vunpack.c.l.b16 %v4692
        %v4970 = vunpack.c.h.b16 %v4692
        %v4971 = vunpack.c.l.b16 %v4693
        %v4972 = vunpack.c.h.b16 %v4693
        %v4973 = vunpack.c.l.b16 %v4694
        %v4974 = vunpack.c.h.b16 %v4694
        %v4975 = vunpack.c.l.b16 %v4695
        %v4976 = vunpack.c.h.b16 %v4695
        %v4977 = vunpack.c.l.b16 %v4696
        %v4978 = vunpack.c.h.b16 %v4696
        %v4979 = vunpack.c.l.b16 %v4697
        %v4980 = vunpack.c.h.b16 %v4697
        %v4981 = vunpack.c.l.b16 %v4698
        %v4982 = vunpack.c.h.b16 %v4698
        %v4983 = vunpack.c.l.b16 %v4699
        %v4984 = vunpack.c.h.b16 %v4699
        %v4985 = vunpack.c.l.b16 %v4700
        %v4986 = vunpack.c.h.b16 %v4700
        %v4987 = vunpack.c.l.b16 %v4701
        %v4988 = vunpack.c.h.b16 %v4701
        %v4989 = vunpack.c.l.b16 %v4702
        %v4990 = vunpack.c.h.b16 %v4702
        %v4991 = vunpack.c.l.b16 %v4703
        %v4992 = vunpack.c.h.b16 %v4703
        %v4993 = vunpack.c.l.b16 %v4704
        %v4994 = vunpack.c.h.b16 %v4704
        %v4995 = vunpack.c.l.b16 %v4705
        %v4996 = vunpack.c.h.b16 %v4705
        %v4997 = vunpack.c.l.b16 %v4706
        %v4998 = vunpack.c.h.b16 %v4706
        %v4999 = vunpack.c.l.b16 %v4707
        %v5000 = vunpack.c.h.b16 %v4707
        %v5001 = vunpack.c.l.b16 %v4708
        %v5002 = vunpack.c.h.b16 %v4708
        %v5003 = vunpack.c.l.b16 %v4709
        %v5004 = vunpack.c.h.b16 %v4709
        %v5005 = vunpack.c.l.b16 %v4710
        %v5006 = vunpack.c.h.b16 %v4710
        %v5007 = vunpack.c.l.b16 %v4711
        %v5008 = vunpack.c.h.b16 %v4711
        %v5009 = vunpack.c.l.b16 %v4712
        %v5010 = vunpack.c.h.b16 %v4712
        %v5011 = vunpack.c.l.b16 %v4713
        %v5012 = vunpack.c.h.b16 %v4713
        %v5013 = vunpack.c.l.b16 %v4714
        %v5014 = vunpack.c.h.b16 %v4714
        %v5015 = vunpack.c.l.b16 %v4715
        %v5016 = vunpack.c.h.b16 %v4715
        %v5017 = vunpack.c.l.b16 %v4716
        %v5018 = vunpack.c.h.b16 %v4716
        %v5019 = vunpack.c.l.b16 %v4717
        %v5020 = vunpack.c.h.b16 %v4717
        %v5021 = vunpack.c.l.b16 %v4718
        %v5022 = vunpack.c.h.b16 %v4718
        %v5023 = vunpack.c.l.b16 %v4719
        %v5024 = vunpack.c.h.b16 %v4719
        %v5025 = vunpack.c.l.b16 %v4720
        %v5026 = vunpack.c.h.b16 %v4720
        %v5027 = vunpack.c.l.b16 %v4721
        %v5028 = vunpack.c.h.b16 %v4721
        %v5029 = vunpack.c.l.b16 %v4722
        %v5030 = vunpack.c.h.b16 %v4722
        %v5031 = vunpack.c.l.b16 %v4723
        %v5032 = vunpack.c.h.b16 %v4723
        %v5033 = vunpack.c.l.b16 %v4724
        %v5034 = vunpack.c.h.b16 %v4724
        %v5035 = vunpack.c.l.b16 %v4725
        %v5036 = vunpack.c.h.b16 %v4725
        %v5037 = vunpack.c.l.b16 %v4726
        %v5038 = vunpack.c.h.b16 %v4726
        %v5039 = vunpack.c.l.b16 %v4727
        %v5040 = vunpack.c.h.b16 %v4727
        %v5041 = vunpack.c.l.b16 %v4728
        %v5042 = vunpack.c.h.b16 %v4728
        %v5043 = vunpack.c.l.b16 %v4729
        %v5044 = vunpack.c.h.b16 %v4729
        %v5045 = vunpack.c.l.b16 %v4730
        %v5046 = vunpack.c.h.b16 %v4730
        %v5047 = vunpack.c.l.b16 %v4731
        %v5048 = vunpack.c.h.b16 %v4731
        %v5049 = vunpack.c.l.b16 %v4732
        %v5050 = vunpack.c.h.b16 %v4732
        %v5051 = vunpack.c.l.b16 %v4733
        %v5052 = vunpack.c.h.b16 %v4733
        %v5053 = vunpack.c.l.b16 %v4734
        %v5054 = vunpack.c.h.b16 %v4734
        %v5055 = vunpack.c.l.b16 %v4735
        %v5056 = vunpack.c.h.b16 %v4735
        %v5057 = vunpack.c.l.b16 %v4736
        %v5058 = vunpack.c.h.b16 %v4736
        %v5059 = vunpack.c.l.b16 %v4737
        %v5060 = vunpack.c.h.b16 %v4737
        %v5061 = vunpack.c.l.b16 %v4738
        %v5062 = vunpack.c.h.b16 %v4738
        %v5063 = vunpack.c.l.b16 %v4739
        %v5064 = vunpack.c.h.b16 %v4739
        %v5065 = vunpack.c.l.b16 %v4740
        %v5066 = vunpack.c.h.b16 %v4740
        %v5067 = vunpack.c.l.b16 %v4741
        %v5068 = vunpack.c.h.b16 %v4741
        %v5069 = vunpack.c.l.b16 %v4742
        %v5070 = vunpack.c.h.b16 %v4742
        %v5071 = vunpack.c.l.b16 %v4743
        %v5072 = vunpack.c.h.b16 %v4743
        %v5073 = vunpack.c.l.b16 %v4744
        %v5074 = vunpack.c.h.b16 %v4744
        %v5075 = vunpack.c.l.b16 %v4745
        %v5076 = vunpack.c.h.b16 %v4745
        %v5077 = vunpack.c.l.b16 %v4746
        %v5078 = vunpack.c.h.b16 %v4746
        %v5079 = vunpack.c.l.b16 %v4747
        %v5080 = vunpack.c.h.b16 %v4747
        %v5081 = vunpack.c.l.b16 %v4748
        %v5082 = vunpack.c.h.b16 %v4748
        %v5083 = vunpack.c.l.b16 %v4749
        %v5084 = vunpack.c.h.b16 %v4749
        %v5085 = vunpack.c.l.b16 %v4750
        %v5086 = vunpack.c.h.b16 %v4750
        %v5087 = vunpack.c.l.b16 %v4751
        %v5088 = vunpack.c.h.b16 %v4751
        %v5089 = vunpack.c.l.b16 %v4752
        %v5090 = vunpack.c.h.b16 %v4752
        %v5091 = vunpack.c.l.b16 %v4753
        %v5092 = vunpack.c.h.b16 %v4753
        %v5093 = vunpack.c.l.b16 %v4754
        %v5094 = vunpack.c.h.b16 %v4754
        %v5095 = vunpack.c.l.b16 %v4755
        %v5096 = vunpack.c.h.b16 %v4755
        %v5097 = vunpack.c.l.b16 %v4756
        %v5098 = vunpack.c.h.b16 %v4756
        %v5099 = vunpack.c.l.b16 %v4757
        %v5100 = vunpack.c.h.b16 %v4757
        %v5101 = vunpack.c.l.b16 %v4758
        %v5102 = vunpack.c.h.b16 %v4758
        %v5103 = vunpack.c.l.b16 %v4759
        %v5104 = vunpack.c.h.b16 %v4759
        %v5105 = vunpack.c.l.b16 %v4760
        %v5106 = vunpack.c.h.b16 %v4760
        %v5107 = vunpack.c.l.b16 %v4761
        %v5108 = vunpack.c.h.b16 %v4761
        %v5109 = vunpack.c.l.b16 %v4762
        %v5110 = vunpack.c.h.b16 %v4762
        %v5111 = vunpack.c.l.b16 %v4763
        %v5112 = vunpack.c.h.b16 %v4763
        %v5113 = vunpack.c.l.b16 %v4764
        %v5114 = vunpack.c.h.b16 %v4764
        %v5115 = vunpack.c.l.b16 %v4765
        %v5116 = vunpack.c.h.b16 %v4765
        %v5117 = vunpack.c.l.b16 %v4766
        %v5118 = vunpack.c.h.b16 %v4766
        %v5119 = vunpack.c.l.b16 %v4767
        %v5120 = vunpack.c.h.b16 %v4767
        %v5121 = vunpack.c.l.b16 %v4768
        %v5122 = vunpack.c.h.b16 %v4768
        %v5123 = vunpack.c.l.b16 %v4769
        %v5124 = vunpack.c.h.b16 %v4769
        %v5125 = vunpack.c.l.b16 %v4770
        %v5126 = vunpack.c.h.b16 %v4770
        %v5127 = vunpack.c.l.b16 %v4771
        %v5128 = vunpack.c.h.b16 %v4771
        %v5129 = vunpack.c.l.b16 %v4772
        %v5130 = vunpack.c.h.b16 %v4772
        %v5131 = vunpack.c.l.b16 %v4773
        %v5132 = vunpack.c.h.b16 %v4773
        %v5133 = vunpack.c.l.b16 %v4774
        %v5134 = vunpack.c.h.b16 %v4774
        %v5135 = vunpack.c.l.b16 %v4775
        %v5136 = vunpack.c.h.b16 %v4775
        %v5137 = vunpack.c.l.b16 %v4776
        %v5138 = vunpack.c.h.b16 %v4776
        %v5139 = vunpack.c.l.b16 %v4777
        %v5140 = vunpack.c.h.b16 %v4777
        %v5141 = vunpack.c.l.b16 %v4778
        %v5142 = vunpack.c.h.b16 %v4778
        %v5143 = vunpack.c.l.b16 %v4779
        %v5144 = vunpack.c.h.b16 %v4779
        %v5145 = vunpack.c.l.b16 %v4780
        %v5146 = vunpack.c.h.b16 %v4780
        %v5147 = vunpack.c.l.b16 %v4781
        %v5148 = vunpack.c.h.b16 %v4781
        %v5149 = vunpack.c.l.b16 %v4782
        %v5150 = vunpack.c.h.b16 %v4782
        %v5151 = vunpack.c.l.b16 %v4783
        %v5152 = vunpack.c.h.b16 %v4783
        %v5153 = vunpack.c.l.b16 %v4784
        %v5154 = vunpack.c.h.b16 %v4784
        %v5155 = vunpack.c.l.b16 %v4785
        %v5156 = vunpack.c.h.b16 %v4785
        %v5157 = vunpack.c.l.b16 %v4786
        %v5158 = vunpack.c.h.b16 %v4786
        %v5159 = vunpack.c.l.b16 %v4787
        %v5160 = vunpack.c.h.b16 %v4787
        %v5161 = vunpack.c.l.b16 %v4788
        %v5162 = vunpack.c.h.b16 %v4788
        %v5163 = vunpack.c.l.b16 %v4789
        %v5164 = vunpack.c.h.b16 %v4789
        %v5165 = vunpack.c.l.b16 %v4790
        %v5166 = vunpack.c.h.b16 %v4790
        %v5167 = vunpack.c.l.b16 %v4791
        %v5168 = vunpack.c.h.b16 %v4791
        %v5169 = vunpack.c.l.b16 %v4792
        %v5170 = vunpack.c.h.b16 %v4792
        %v5171 = vunpack.c.l.b16 %v4793
        %v5172 = vunpack.c.h.b16 %v4793
        %v5173 = vunpack.c.l.b16 %v4794
        %v5174 = vunpack.c.h.b16 %v4794
        %v5175 = vunpack.c.l.b16 %v4795
        %v5176 = vunpack.c.h.b16 %v4795
        %v5177 = vunpack.c.l.b16 %v4796
        %v5178 = vunpack.c.h.b16 %v4796
        %v5179 = vunpack.c.l.b16 %v4797
        %v5180 = vunpack.c.h.b16 %v4797
        %v5181 = vunpack.c.l.b16 %v4798
        %v5182 = vunpack.c.h.b16 %v4798
        %v5183 = vunpack.c.l.b16 %v4799
        %v5184 = vunpack.c.h.b16 %v4799
        %v5185 = vunpack.c.l.b16 %v4800
        %v5186 = vunpack.c.h.b16 %v4800
        %v5187 = vunpack.c.l.b16 %v4801
        %v5188 = vunpack.c.h.b16 %v4801
        %v5189 = vunpack.c.l.b16 %v4802
        %v5190 = vunpack.c.h.b16 %v4802
        %v5191 = vunpack.c.l.b16 %v4803
        %v5192 = vunpack.c.h.b16 %v4803
        %v5193 = vunpack.c.l.b16 %v4804
        %v5194 = vunpack.c.h.b16 %v4804
        %v5195 = vunpack.c.l.b16 %v4805
        %v5196 = vunpack.c.h.b16 %v4805
        %v5197 = vunpack.c.l.b16 %v4806
        %v5198 = vunpack.c.h.b16 %v4806
        %v5199 = vunpack.c.l.b16 %v4807
        %v5200 = vunpack.c.h.b16 %v4807
        %v5201 = vunpack.c.l.b16 %v4808
        %v5202 = vunpack.c.h.b16 %v4808
        %v5203 = vunpack.c.l.b16 %v4809
        %v5204 = vunpack.c.h.b16 %v4809
        %v5205 = vpack.c.b16 %v4953, %v4949
        %v5206 = vpack.c.b16 %v4954, %v4950
        %v5207 = vpack.c.b16 %v4955, %v4951
        %v5208 = vpack.c.b16 %v4956, %v4952
        %v5209 = vpack.c.b16 %v4961, %v4957
        %v5210 = vpack.c.b16 %v4962, %v4958
        %v5211 = vpack.c.b16 %v4963, %v4959
        %v5212 = vpack.c.b16 %v4964, %v4960
        %v5213 = vpack.c.b16 %v4969, %v4965
        %v5214 = vpack.c.b16 %v4970, %v4966
        %v5215 = vpack.c.b16 %v4971, %v4967
        %v5216 = vpack.c.b16 %v4972, %v4968
        %v5217 = vpack.c.b16 %v4977, %v4973
        %v5218 = vpack.c.b16 %v4978, %v4974
        %v5219 = vpack.c.b16 %v4979, %v4975
        %v5220 = vpack.c.b16 %v4980, %v4976
        %v5221 = vpack.c.b16 %v4985, %v4981
        %v5222 = vpack.c.b16 %v4986, %v4982
        %v5223 = vpack.c.b16 %v4987, %v4983
        %v5224 = vpack.c.b16 %v4988, %v4984
        %v5225 = vpack.c.b16 %v4993, %v4989
        %v5226 = vpack.c.b16 %v4994, %v4990
        %v5227 = vpack.c.b16 %v4995, %v4991
        %v5228 = vpack.c.b16 %v4996, %v4992
        %v5229 = vpack.c.b16 %v5001, %v4997
        %v5230 = vpack.c.b16 %v5002, %v4998
        %v5231 = vpack.c.b16 %v5003, %v4999
        %v5232 = vpack.c.b16 %v5004, %v5000
        %v5233 = vpack.c.b16 %v5009, %v5005
        %v5234 = vpack.c.b16 %v5010, %v5006
        %v5235 = vpack.c.b16 %v5011, %v5007
        %v5236 = vpack.c.b16 %v5012, %v5008
        %v5237 = vpack.c.b16 %v5017, %v5013
        %v5238 = vpack.c.b16 %v5018, %v5014
        %v5239 = vpack.c.b16 %v5019, %v5015
        %v5240 = vpack.c.b16 %v5020, %v5016
        %v5241 = vpack.c.b16 %v5025, %v5021
        %v5242 = vpack.c.b16 %v5026, %v5022
        %v5243 = vpack.c.b16 %v5027, %v5023
        %v5244 = vpack.c.b16 %v5028, %v5024
        %v5245 = vpack.c.b16 %v5033, %v5029
        %v5246 = vpack.c.b16 %v5034, %v5030
        %v5247 = vpack.c.b16 %v5035, %v5031
        %v5248 = vpack.c.b16 %v5036, %v5032
        %v5249 = vpack.c.b16 %v5041, %v5037
        %v5250 = vpack.c.b16 %v5042, %v5038
        %v5251 = vpack.c.b16 %v5043, %v5039
        %v5252 = vpack.c.b16 %v5044, %v5040
        %v5253 = vpack.c.b16 %v5049, %v5045
        %v5254 = vpack.c.b16 %v5050, %v5046
        %v5255 = vpack.c.b16 %v5051, %v5047
        %v5256 = vpack.c.b16 %v5052, %v5048
        %v5257 = vpack.c.b16 %v5057, %v5053
        %v5258 = vpack.c.b16 %v5058, %v5054
        %v5259 = vpack.c.b16 %v5059, %v5055
        %v5260 = vpack.c.b16 %v5060, %v5056
        %v5261 = vpack.c.b16 %v5065, %v5061
        %v5262 = vpack.c.b16 %v5066, %v5062
        %v5263 = vpack.c.b16 %v5067, %v5063
        %v5264 = vpack.c.b16 %v5068, %v5064
        %v5265 = vpack.c.b16 %v5073, %v5069
        %v5266 = vpack.c.b16 %v5074, %v5070
        %v5267 = vpack.c.b16 %v5075, %v5071
        %v5268 = vpack.c.b16 %v5076, %v5072
        %v5269 = vpack.c.b16 %v5081, %v5077
        %v5270 = vpack.c.b16 %v5082, %v5078
        %v5271 = vpack.c.b16 %v5083, %v5079
        %v5272 = vpack.c.b16 %v5084, %v5080
        %v5273 = vpack.c.b16 %v5089, %v5085
        %v5274 = vpack.c.b16 %v5090, %v5086
        %v5275 = vpack.c.b16 %v5091, %v5087
        %v5276 = vpack.c.b16 %v5092, %v5088
        %v5277 = vpack.c.b16 %v5097, %v5093
        %v5278 = vpack.c.b16 %v5098, %v5094
        %v5279 = vpack.c.b16 %v5099, %v5095
        %v5280 = vpack.c.b16 %v5100, %v5096
        %v5281 = vpack.c.b16 %v5105, %v5101
        %v5282 = vpack.c.b16 %v5106, %v5102
        %v5283 = vpack.c.b16 %v5107, %v5103
        %v5284 = vpack.c.b16 %v5108, %v5104
        %v5285 = vpack.c.b16 %v5113, %v5109
        %v5286 = vpack.c.b16 %v5114, %v5110
        %v5287 = vpack.c.b16 %v5115, %v5111
        %v5288 = vpack.c.b16 %v5116, %v5112
        %v5289 = vpack.c.b16 %v5121, %v5117
        %v5290 = vpack.c.b16 %v5122, %v5118
        %v5291 = vpack.c.b16 %v5123, %v5119
        %v5292 = vpack.c.b16 %v5124, %v5120
        %v5293 = vpack.c.b16 %v5129, %v5125
        %v5294 = vpack.c.b16 %v5130, %v5126
        %v5295 = vpack.c.b16 %v5131, %v5127
        %v5296 = vpack.c.b16 %v5132, %v5128
        %v5297 = vpack.c.b16 %v5137, %v5133
        %v5298 = vpack.c.b16 %v5138, %v5134
        %v5299 = vpack.c.b16 %v5139, %v5135
        %v5300 = vpack.c.b16 %v5140, %v5136
        %v5301 = vpack.c.b16 %v5145, %v5141
        %v5302 = vpack.c.b16 %v5146, %v5142
        %v5303 = vpack.c.b16 %v5147, %v5143
        %v5304 = vpack.c.b16 %v5148, %v5144
        %v5305 = vpack.c.b16 %v5153, %v5149
        %v5306 = vpack.c.b16 %v5154, %v5150
        %v5307 = vpack.c.b16 %v5155, %v5151
        %v5308 = vpack.c.b16 %v5156, %v5152
        %v5309 = vpack.c.b16 %v5161, %v5157
        %v5310 = vpack.c.b16 %v5162, %v5158
        %v5311 = vpack.c.b16 %v5163, %v5159
        %v5312 = vpack.c.b16 %v5164, %v5160
        %v5313 = vpack.c.b16 %v5169, %v5165
        %v5314 = vpack.c.b16 %v5170, %v5166
        %v5315 = vpack.c.b16 %v5171, %v5167
        %v5316 = vpack.c.b16 %v5172, %v5168
        %v5317 = vpack.c.b16 %v5177, %v5173
        %v5318 = vpack.c.b16 %v5178, %v5174
        %v5319 = vpack.c.b16 %v5179, %v5175
        %v5320 = vpack.c.b16 %v5180, %v5176
        %v5321 = vpack.c.b16 %v5185, %v5181
        %v5322 = vpack.c.b16 %v5186, %v5182
        %v5323 = vpack.c.b16 %v5187, %v5183
        %v5324 = vpack.c.b16 %v5188, %v5184
        %v5325 = vpack.c.b16 %v5193, %v5189
        %v5326 = vpack.c.b16 %v5194, %v5190
        %v5327 = vpack.c.b16 %v5195, %v5191
        %v5328 = vpack.c.b16 %v5196, %v5192
        %v5329 = vpack.c.b16 %v5201, %v5197
        %v5330 = vpack.c.b16 %v5202, %v5198
        %v5331 = vpack.c.b16 %v5203, %v5199
        %v5332 = vpack.c.b16 %v5204, %v5200
        %5461 = vmatpush.bf16.msra.mxu0 %v5233
        %5462 = vmatpush.bf16.msra.mxu0 %v5229
        %5463 = vmatpush.bf16.msra.mxu0 %v5225
        %5464 = vmatpush.bf16.msra.mxu0 %v5221
        %5465 = vmatpush.bf16.msra.mxu0 %v5217
        %5466 = vmatpush.bf16.msra.mxu0 %v5213
        %5467 = vmatpush.bf16.msra.mxu0 %v5209
        %5468 = vmatpush.bf16.msra.mxu0 %v5205
        %5469 = vmatmul.bf16.gmra.mxu0 %v3691
        %v5470 = vpop.f32.mrf.mxu0
        %v5471 = vadd.f32 %v4813, %v5470
        %v5472 = vpop.f32.mrf.mxu0
        %5473 = vdwg.mxu0
        %5474 = vmatpush.bf16.msra.mxu0 %v5265
        %5475 = vmatpush.bf16.msra.mxu0 %v5261
        %5476 = vmatpush.bf16.msra.mxu0 %v5257
        %5477 = vmatpush.bf16.msra.mxu0 %v5253
        %5478 = vmatpush.bf16.msra.mxu0 %v5249
        %5479 = vmatpush.bf16.msra.mxu0 %v5245
        %5480 = vmatpush.bf16.msra.mxu0 %v5241
        %5481 = vmatpush.bf16.msra.mxu0 %v5237
        %5482 = vmatmul.bf16.gmra.mxu0 %v3692
        %v5483 = vpop.f32.mrf.mxu0
        %v5484 = vadd.f32 %v5471, %v5483
        %v5485 = vpop.f32.mrf.mxu0
        %5486 = vdwg.mxu0
        %5487 = vmatpush.bf16.msra.mxu0 %v5297
        %5488 = vmatpush.bf16.msra.mxu0 %v5293
        %5489 = vmatpush.bf16.msra.mxu0 %v5289
        %5490 = vmatpush.bf16.msra.mxu0 %v5285
        %5491 = vmatpush.bf16.msra.mxu0 %v5281
        %5492 = vmatpush.bf16.msra.mxu0 %v5277
        %5493 = vmatpush.bf16.msra.mxu0 %v5273
        %5494 = vmatpush.bf16.msra.mxu0 %v5269
        %5495 = vmatmul.bf16.gmra.mxu0 %v3693
        %v5496 = vpop.f32.mrf.mxu0
        %v5497 = vadd.f32 %v5484, %v5496
        %v5498 = vpop.f32.mrf.mxu0
        %5499 = vdwg.mxu0
        %5500 = vmatpush.bf16.msra.mxu0 %v5329
        %5501 = vmatpush.bf16.msra.mxu0 %v5325
        %5502 = vmatpush.bf16.msra.mxu0 %v5321
        %5503 = vmatpush.bf16.msra.mxu0 %v5317
        %5504 = vmatpush.bf16.msra.mxu0 %v5313
        %5505 = vmatpush.bf16.msra.mxu0 %v5309
        %5506 = vmatpush.bf16.msra.mxu0 %v5305
        %5507 = vmatpush.bf16.msra.mxu0 %v5301
        %5508 = vmatmul.bf16.gmra.mxu0 %v3694
        %v5509 = vpop.f32.mrf.mxu0
        %v5510 = vadd.f32 %v5497, %v5509
        %v5511 = vpop.f32.mrf.mxu0
        %5512 = vdwg.mxu0
        %5513 = vmatpush.bf16.msra.mxu0 %v5234
        %5514 = vmatpush.bf16.msra.mxu0 %v5230
        %5515 = vmatpush.bf16.msra.mxu0 %v5226
        %5516 = vmatpush.bf16.msra.mxu0 %v5222
        %5517 = vmatpush.bf16.msra.mxu0 %v5218
        %5518 = vmatpush.bf16.msra.mxu0 %v5214
        %5519 = vmatpush.bf16.msra.mxu0 %v5210
        %5520 = vmatpush.bf16.msra.mxu0 %v5206
        %5521 = vmatmul.bf16.gmra.mxu0 %v3691
        %v5522 = vpop.f32.mrf.mxu0
        %v5523 = vadd.f32 %v4814, %v5522
        %v5524 = vpop.f32.mrf.mxu0
        %5525 = vdwg.mxu0
        %5526 = vmatpush.bf16.msra.mxu0 %v5266
        %5527 = vmatpush.bf16.msra.mxu0 %v5262
        %5528 = vmatpush.bf16.msra.mxu0 %v5258
        %5529 = vmatpush.bf16.msra.mxu0 %v5254
        %5530 = vmatpush.bf16.msra.mxu0 %v5250
        %5531 = vmatpush.bf16.msra.mxu0 %v5246
        %5532 = vmatpush.bf16.msra.mxu0 %v5242
        %5533 = vmatpush.bf16.msra.mxu0 %v5238
        %5534 = vmatmul.bf16.gmra.mxu0 %v3692
        %v5535 = vpop.f32.mrf.mxu0
        %v5536 = vadd.f32 %v5523, %v5535
        %v5537 = vpop.f32.mrf.mxu0
        %5538 = vdwg.mxu0
        %5539 = vmatpush.bf16.msra.mxu0 %v5298
        %5540 = vmatpush.bf16.msra.mxu0 %v5294
        %5541 = vmatpush.bf16.msra.mxu0 %v5290
        %5542 = vmatpush.bf16.msra.mxu0 %v5286
        %5543 = vmatpush.bf16.msra.mxu0 %v5282
        %5544 = vmatpush.bf16.msra.mxu0 %v5278
        %5545 = vmatpush.bf16.msra.mxu0 %v5274
        %5546 = vmatpush.bf16.msra.mxu0 %v5270
        %5547 = vmatmul.bf16.gmra.mxu0 %v3693
        %v5548 = vpop.f32.mrf.mxu0
        %v5549 = vadd.f32 %v5536, %v5548
        %v5550 = vpop.f32.mrf.mxu0
        %5551 = vdwg.mxu0
        %5552 = vmatpush.bf16.msra.mxu0 %v5330
        %5553 = vmatpush.bf16.msra.mxu0 %v5326
        %5554 = vmatpush.bf16.msra.mxu0 %v5322
        %5555 = vmatpush.bf16.msra.mxu0 %v5318
        %5556 = vmatpush.bf16.msra.mxu0 %v5314
        %5557 = vmatpush.bf16.msra.mxu0 %v5310
        %5558 = vmatpush.bf16.msra.mxu0 %v5306
        %5559 = vmatpush.bf16.msra.mxu0 %v5302
        %5560 = vmatmul.bf16.gmra.mxu0 %v3694
        %v5561 = vpop.f32.mrf.mxu0
        %v5562 = vadd.f32 %v5549, %v5561
        %v5563 = vpop.f32.mrf.mxu0
        %5564 = vdwg.mxu0
        %5565 = vmatpush.bf16.msra.mxu0 %v5235
        %5566 = vmatpush.bf16.msra.mxu0 %v5231
        %5567 = vmatpush.bf16.msra.mxu0 %v5227
        %5568 = vmatpush.bf16.msra.mxu0 %v5223
        %5569 = vmatpush.bf16.msra.mxu0 %v5219
        %5570 = vmatpush.bf16.msra.mxu0 %v5215
        %5571 = vmatpush.bf16.msra.mxu0 %v5211
        %5572 = vmatpush.bf16.msra.mxu0 %v5207
        %5573 = vmatmul.bf16.gmra.mxu0 %v3691
        %v5574 = vpop.f32.mrf.mxu0
        %v5575 = vadd.f32 %v4815, %v5574
        %v5576 = vpop.f32.mrf.mxu0
        %5577 = vdwg.mxu0
        %5578 = vmatpush.bf16.msra.mxu0 %v5267
        %5579 = vmatpush.bf16.msra.mxu0 %v5263
        %5580 = vmatpush.bf16.msra.mxu0 %v5259
        %5581 = vmatpush.bf16.msra.mxu0 %v5255
        %5582 = vmatpush.bf16.msra.mxu0 %v5251
        %5583 = vmatpush.bf16.msra.mxu0 %v5247
        %5584 = vmatpush.bf16.msra.mxu0 %v5243
        %5585 = vmatpush.bf16.msra.mxu0 %v5239
        %5586 = vmatmul.bf16.gmra.mxu0 %v3692
        %v5587 = vpop.f32.mrf.mxu0
        %v5588 = vadd.f32 %v5575, %v5587
        %v5589 = vpop.f32.mrf.mxu0
        %5590 = vdwg.mxu0
        %5591 = vmatpush.bf16.msra.mxu0 %v5299
        %5592 = vmatpush.bf16.msra.mxu0 %v5295
        %5593 = vmatpush.bf16.msra.mxu0 %v5291
        %5594 = vmatpush.bf16.msra.mxu0 %v5287
        %5595 = vmatpush.bf16.msra.mxu0 %v5283
        %5596 = vmatpush.bf16.msra.mxu0 %v5279
        %5597 = vmatpush.bf16.msra.mxu0 %v5275
        %5598 = vmatpush.bf16.msra.mxu0 %v5271
        %5599 = vmatmul.bf16.gmra.mxu0 %v3693
        %v5600 = vpop.f32.mrf.mxu0
        %v5601 = vadd.f32 %v5588, %v5600
        %v5602 = vpop.f32.mrf.mxu0
        %5603 = vdwg.mxu0
        %5604 = vmatpush.bf16.msra.mxu0 %v5331
        %5605 = vmatpush.bf16.msra.mxu0 %v5327
        %5606 = vmatpush.bf16.msra.mxu0 %v5323
        %5607 = vmatpush.bf16.msra.mxu0 %v5319
        %5608 = vmatpush.bf16.msra.mxu0 %v5315
        %5609 = vmatpush.bf16.msra.mxu0 %v5311
        %5610 = vmatpush.bf16.msra.mxu0 %v5307
        %5611 = vmatpush.bf16.msra.mxu0 %v5303
        %5612 = vmatmul.bf16.gmra.mxu0 %v3694
        %v5613 = vpop.f32.mrf.mxu0
        %v5614 = vadd.f32 %v5601, %v5613
        %v5615 = vpop.f32.mrf.mxu0
        %5616 = vdwg.mxu0
        %5617 = vmatpush.bf16.msra.mxu0 %v5236
        %5618 = vmatpush.bf16.msra.mxu0 %v5232
        %5619 = vmatpush.bf16.msra.mxu0 %v5228
        %5620 = vmatpush.bf16.msra.mxu0 %v5224
        %5621 = vmatpush.bf16.msra.mxu0 %v5220
        %5622 = vmatpush.bf16.msra.mxu0 %v5216
        %5623 = vmatpush.bf16.msra.mxu0 %v5212
        %5624 = vmatpush.bf16.msra.mxu0 %v5208
        %5625 = vmatmul.bf16.gmra.mxu0 %v3691
        %v5626 = vpop.f32.mrf.mxu0
        %v5627 = vadd.f32 %v4816, %v5626
        %v5628 = vpop.f32.mrf.mxu0
        %5629 = vdwg.mxu0
        %5630 = vmatpush.bf16.msra.mxu0 %v5268
        %5631 = vmatpush.bf16.msra.mxu0 %v5264
        %5632 = vmatpush.bf16.msra.mxu0 %v5260
        %5633 = vmatpush.bf16.msra.mxu0 %v5256
        %5634 = vmatpush.bf16.msra.mxu0 %v5252
        %5635 = vmatpush.bf16.msra.mxu0 %v5248
        %5636 = vmatpush.bf16.msra.mxu0 %v5244
        %5637 = vmatpush.bf16.msra.mxu0 %v5240
        %5638 = vmatmul.bf16.gmra.mxu0 %v3692
        %v5639 = vpop.f32.mrf.mxu0
        %v5640 = vadd.f32 %v5627, %v5639
        %v5641 = vpop.f32.mrf.mxu0
        %5642 = vdwg.mxu0
        %5643 = vmatpush.bf16.msra.mxu0 %v5300
        %5644 = vmatpush.bf16.msra.mxu0 %v5296
        %5645 = vmatpush.bf16.msra.mxu0 %v5292
        %5646 = vmatpush.bf16.msra.mxu0 %v5288
        %5647 = vmatpush.bf16.msra.mxu0 %v5284
        %5648 = vmatpush.bf16.msra.mxu0 %v5280
        %5649 = vmatpush.bf16.msra.mxu0 %v5276
        %5650 = vmatpush.bf16.msra.mxu0 %v5272
        %5651 = vmatmul.bf16.gmra.mxu0 %v3693
        %v5652 = vpop.f32.mrf.mxu0
        %v5653 = vadd.f32 %v5640, %v5652
        %v5654 = vpop.f32.mrf.mxu0
        %5655 = vdwg.mxu0
        %5656 = vmatpush.bf16.msra.mxu0 %v5332
        %5657 = vmatpush.bf16.msra.mxu0 %v5328
        %5658 = vmatpush.bf16.msra.mxu0 %v5324
        %5659 = vmatpush.bf16.msra.mxu0 %v5320
        %5660 = vmatpush.bf16.msra.mxu0 %v5316
        %5661 = vmatpush.bf16.msra.mxu0 %v5312
        %5662 = vmatpush.bf16.msra.mxu0 %v5308
        %5663 = vmatpush.bf16.msra.mxu0 %v5304
        %5664 = vmatmul.bf16.gmra.mxu0 %v3694
        %v5665 = vpop.f32.mrf.mxu0
        %v5666 = vadd.f32 %v5653, %v5665
        %v5667 = vpop.f32.mrf.mxu0
        %5668 = vdwg.mxu0
        %v5669 = vadd.f32 %v4523, 1.0
        %v5670 = vadd.f32 %v4575, 1.0
        %v5671 = vadd.f32 %v4627, 1.0
        %v5672 = vadd.f32 %v4679, 1.0
        %v5673 = vmul.f32 %v1524, %v5669
        %v5674 = vmul.f32 %v1525, %v5670
        %v5675 = vmul.f32 %v1526, %v5671
        %v5676 = vmul.f32 %v1527, %v5672
        %v5677 = vadd.f32 %v5673, %v5510
        %v5678 = vadd.f32 %v5674, %v5562
        %v5679 = vadd.f32 %v5675, %v5614
        %v5680 = vadd.f32 %v5676, %v5666
        %vm5681 = vcmp.ge.f32.partialorder %v5677, 0.0
        %vm5682 = vcmp.ge.f32.partialorder %v5678, 0.0
        %vm5683 = vcmp.ge.f32.partialorder %v5679, 0.0
        %vm5684 = vcmp.ge.f32.partialorder %v5680, 0.0
        %v5685 = vmul.f32 %v5677, 0.01
        %v5686 = vmul.f32 %v5678, 0.01
        %v5687 = vmul.f32 %v5679, 0.01
        %v5688 = vmul.f32 %v5680, 0.01
        %v5689 = vsel %vm5681, %v5677, %v5685
        %v5690 = vsel %vm5682, %v5678, %v5686
        %v5691 = vsel %vm5683, %v5679, %v5687
        %v5692 = vsel %vm5684, %v5680, %v5688
        %5693 = vst [vmem:[%s6] sm:$0xff] %v5689
        %5694 = vst [vmem:[%s6 + $0x8] sm:$0xff] %v5690
        %5695 = vst [vmem:[%s6 + $0x10] sm:$0xff] %v5691
        %5696 = vst [vmem:[%s6 + $0x18] sm:$0xff] %v5692
        // Predicated region
        $region61: #{sub_hair_mapper.1} parent=43 // pred_check
          %p5697 = pneg %p182
        $region62: #{sub_hair_mapper.1} parent=43 // pred_check_branch
          %5699 = sbr.rel (%p5697) target = $region64
        $region63: #{sub_hair_mapper.1} parent=43 // pred_region
          _
        $region64: #{sub_hair_mapper.1} parent=43 // pred_fallthru
          _
        // Predicated region
        $region65: #{sub_hair_mapper.1} parent=43 // pred_check
          %p5700 = pneg %p182
        $region66: #{sub_hair_mapper.1} parent=43 // pred_check_branch
          %5702 = sbr.rel (%p5700) target = $region68
        $region67: #{sub_hair_mapper.1} parent=43 // pred_region
          _
        $region68: #{sub_hair_mapper.1} parent=43 // pred_fallthru
          _
      $region44: #{sub_hair_mapper.1} parent=5 // pred_fallthru
        _
      %p5703 = scmp.le.s32.totalorder 2, %s18
      // Predicated region
      $region69: #{sub_hair_mapper.1} parent=5 // pred_check
        %p5704 = pneg %p5703
      $region70: #{sub_hair_mapper.1} parent=5 // pred_check_branch
        %5706 = sbr.rel (%p5704) target = $region72
      $region71: #{sub_hair_mapper.1} parent=5 // pred_region
        %s5707 = ssub.s32 %s18, 2
      $region72: #{sub_hair_mapper.1} parent=5 // pred_fallthru
        _
    $region6: #{sub_hair_mapper.1} parent=1 // loop_footer
      %s22 = sadd.s32 1, %s18
    $region7: #{sub_hair_mapper.1} parent=1 // loop_footer_branch
      %17 = sbr.rel target = $region3
    $region8: #{sub_hair_mapper.1} parent=1 // loop_exit
      _
    %5708 = vsyncpa [#allocation3], 1
    %s5709 = scalar_lea.sflag [#allocation3], 1
    %5710 = vsyncpa %s5709, 1
    %5711 = vsyncpa [#allocation5], 1
    %s5712 = scalar_lea.sflag [#allocation5], 1
    %5713 = vsyncpa %s5712, 1

</llo_original>
